<compile_context>
chip_gen: v7x
topology: tpu7x:2x2x1
jax: 0.10.0
libtpu: 0.0.40
codegen_flags: <defaults>
</compile_context>

<pallas_src>
import jax
import jax.numpy as jnp
import numpy as np
from jax.experimental import pallas as pl
from jax.experimental.pallas import tpu as pltpu


def _round_up(x, m):
    return ((x + m - 1) // m) * m


# ----------------------------------------------------------------------------
# Kernel: all T decoder steps in ONE invocation, weights VMEM/vreg-resident.
# ----------------------------------------------------------------------------
def attn_decoder_kernel(
    emb_ref,       # (T, H)  bf16  pre-gathered embedding rows (one per step)
    hid_ref,       # (1, H)  f32   initial hidden state
    enc_ref,       # (L, H)  bf16  encoder outputs
    w_attn_e_ref,  # (H, L)  bf16  attn weight, embedded half
    w_attn_h_ref,  # (H, L)  bf16  attn weight, hidden half
    b_attn_ref,    # (1, L)  f32
    w_comb_e_ref,  # (H, H)  bf16  attn_combine, embedded half
    w_comb_a_ref,  # (H, H)  bf16  attn_combine, attn_applied half
    b_comb_ref,    # (1, H)  f32
    w_gx_ref,      # (H, 4H) bf16  [w_ih_rz | w_ih_n | 0]
    w_gh_ref,      # (H, 4H) bf16  [w_hh_rz | 0 | w_hh_n]
    b_g_ref,       # (1, 4H) f32   [b_ih_rz+b_hh_rz | b_ih_n | b_hh_n]
    w_out_ref,     # (H, V)  bf16
    b_out_ref,     # (1, V)  f32
    out_ref,       # (T, P)  f32   packed rows [logp | h_new | attn_w | pad]
):
    T = emb_ref.shape[0]
    H = hid_ref.shape[1]
    L = enc_ref.shape[0]
    V = w_out_ref.shape[1]
    P = out_ref.shape[1]
    f32 = jnp.float32
    bf16 = jnp.bfloat16

    # Hoist all weight loads once; resident for every unrolled step.
    enc = enc_ref[...]
    w_attn_e = w_attn_e_ref[...]
    w_attn_h = w_attn_h_ref[...]
    b_attn = b_attn_ref[...]
    w_comb_e = w_comb_e_ref[...]
    w_comb_a = w_comb_a_ref[...]
    b_comb = b_comb_ref[...]
    w_gx = w_gx_ref[...]
    w_gh = w_gh_ref[...]
    b_g = b_g_ref[...]
    w_out = w_out_ref[...]
    b_out = b_out_ref[...]

    hidden = hid_ref[...]                       # (1, H) f32 recurrence carry
    pad = P - (V + H + L)
    zero_pad = jnp.zeros((1, pad), f32) if pad > 0 else None

    # T is small -> static Python loop == fully unrolled; every slice index
    # and store offset is static.
    # TODO(synk): dropout(p=0.1) on the embedding is skipped (eval-mode identity).
    for t in range(T):
        emb = emb_ref[pl.ds(t, 1), :]           # (1, H) bf16, static row
        hid_bf = hidden.astype(bf16)

        # ---- attention logits: split dot, no lane concat --------------------
        attn_logits = (
            jnp.dot(emb, w_attn_e, preferred_element_type=f32)
            + jnp.dot(hid_bf, w_attn_h, preferred_element_type=f32)
            + b_attn)                           # (1, L) f32
        m = jnp.max(attn_logits, axis=1, keepdims=True)
        e = jnp.exp(attn_logits - m)
        inv = pl.reciprocal(jnp.sum(e, axis=1, keepdims=True), approx=True)
        attn_w = e * inv                        # (1, L) -- output only
        # normalize AFTER the dot so the dot does not wait on the reciprocal
        attn_applied = jnp.dot(e.astype(bf16), enc,
                               preferred_element_type=f32) * inv      # (1, H)

        # ---- attn_combine + relu: split dot ---------------------------------
        x = jnp.maximum(
            jnp.dot(emb, w_comb_e, preferred_element_type=f32)
            + jnp.dot(attn_applied.astype(bf16), w_comb_a,
                      preferred_element_type=f32)
            + b_comb, 0.0)                      # (1, H) f32

        # ---- GRU step: g = [(gi+gh)_{r,z} | gi_n | gh_n] in 128 lanes -------
        g = (jnp.dot(x.astype(bf16), w_gx, preferred_element_type=f32)
             + jnp.dot(hid_bf, w_gh, preferred_element_type=f32)
             + b_g)                             # (1, 4H) f32
        rz = jax.nn.sigmoid(g[:, :2 * H])
        r = rz[:, :H]
        z = rz[:, H:2 * H]
        n = jnp.tanh(g[:, 2 * H:3 * H] + r * g[:, 3 * H:])
        hidden = (1.0 - z) * n + z * hidden     # (1, H) f32

        # ---- output projection + log_softmax --------------------------------
        logits = (jnp.dot(hidden.astype(bf16), w_out,
                          preferred_element_type=f32) + b_out)         # (1, V)
        m2 = jnp.max(logits, axis=1, keepdims=True)
        lse = jnp.log(jnp.sum(jnp.exp(logits - m2), axis=1, keepdims=True)) + m2
        logp = logits - lse

        # ---- one lane-dense packed row store (off the recurrence path) ------
        parts = [logp, hidden, attn_w]
        if zero_pad is not None:
            parts.append(zero_pad)
        out_ref[pl.ds(t, 1), :] = jnp.concatenate(parts, axis=1)


# ----------------------------------------------------------------------------
# Param packing (done once, outside any decode loop)
# ----------------------------------------------------------------------------
def pack_params(params, hidden_size):
    """Build kernel-ready weights: split halves, 128-lane GRU layout, bf16."""
    H = hidden_size
    L = params["w_attn"].shape[1]
    V = params["w_out"].shape[1]
    f32, bf16 = jnp.float32, jnp.bfloat16

    w_ih, w_hh = params["w_ih"], params["w_hh"]        # (H, 3H), gate order r,z,n
    b_ih, b_hh = params["b_ih"], params["b_hh"]        # (3H,)
    zero = jnp.zeros((H, H), f32)
    w_gx = jnp.concatenate([w_ih[:, :2 * H], w_ih[:, 2 * H:], zero], axis=1)   # (H,4H)
    w_gh = jnp.concatenate([w_hh[:, :2 * H], zero, w_hh[:, 2 * H:]], axis=1)   # (H,4H)
    b_g = jnp.concatenate(
        [b_ih[:2 * H] + b_hh[:2 * H], b_ih[2 * H:], b_hh[2 * H:]]).reshape(1, 4 * H)

    return {
        "emb": params["emb"].astype(f32),               # gathered in wrapper
        "w_attn_e": params["w_attn"][:H].astype(bf16),
        "w_attn_h": params["w_attn"][H:].astype(bf16),
        "b_attn": params["b_attn"].reshape(1, L).astype(f32),
        "w_comb_e": params["w_comb"][:H].astype(bf16),
        "w_comb_a": params["w_comb"][H:].astype(bf16),
        "b_comb": params["b_comb"].reshape(1, H).astype(f32),
        "w_gx": w_gx.astype(bf16),
        "w_gh": w_gh.astype(bf16),
        "b_g": b_g.astype(f32),
        "w_out": params["w_out"].astype(bf16),
        "b_out": params["b_out"].reshape(1, V).astype(f32),
    }


# ----------------------------------------------------------------------------
# Wrapper: T decode steps in a single gridless pallas_call
# ----------------------------------------------------------------------------
def attn_decoder_forward(tokens, hidden, encoder_outputs, packed):
    """tokens: int32 (T,); hidden: (1,1,H); encoder_outputs: (L,H).

    Returns (logp (T,V), final hidden (1,1,H), attn_weights (T,L)).
    With T == 1 this is exactly one AttnDecoderRNN.forward call.
    """
    H = hidden.shape[-1]
    L = encoder_outputs.shape[0]
    V = packed["w_out"].shape[1]
    T = int(tokens.shape[0])
    P = _round_up(V + H + L, 128)     # lane-dense packed output width

    tok = tokens.reshape(-1).astype(jnp.int32)
    emb_rows = packed["emb"][tok].astype(jnp.bfloat16)      # (T, H) pre-gathered
    hid2d = hidden.reshape(1, H).astype(jnp.float32)
    enc_bf = encoder_outputs.astype(jnp.bfloat16)

    in_arrays = [
        emb_rows, hid2d, enc_bf,
        packed["w_attn_e"], packed["w_attn_h"], packed["b_attn"],
        packed["w_comb_e"], packed["w_comb_a"], packed["b_comb"],
        packed["w_gx"], packed["w_gh"], packed["b_g"],
        packed["w_out"], packed["b_out"],
    ]

    # No grid: one invocation, every array lives whole in VMEM (single DMA
    # in, single lane-dense DMA out).  Weights are single-buffered by
    # construction (no pipelining to double-buffer for).
    vmem = pltpu.MemorySpace.VMEM
    out = pl.pallas_call(
        attn_decoder_kernel,
        out_shape=jax.ShapeDtypeStruct((T, P), jnp.float32),
        in_specs=[pl.BlockSpec(memory_space=vmem) for _ in in_arrays],
        out_specs=pl.BlockSpec(memory_space=vmem),
    )(*in_arrays)

    logp = out[:, :V]
    h_all = out[:, V:V + H]
    attn_w = out[:, V + H:V + H + L]
    return logp, h_all[-1].reshape(1, 1, H), attn_w


# ----------------------------------------------------------------------------
# Pure-JAX reference (mirrors the PyTorch forward, eval mode, f32)
# ----------------------------------------------------------------------------
def reference_forward(token, hidden, encoder_outputs, params):
    H = hidden.shape[-1]
    embedded = params["emb"][token.reshape(())].reshape(1, H)
    hid = hidden.reshape(1, H)
    cat1 = jnp.concatenate([embedded, hid], axis=1)
    attn_logits = cat1 @ params["w_attn"] + params["b_attn"]
    attn_w = jax.nn.softmax(attn_logits, axis=1)
    attn_applied = attn_w @ encoder_outputs
    cat2 = jnp.concatenate([embedded, attn_applied], axis=1)
    x = jax.nn.relu(cat2 @ params["w_comb"] + params["b_comb"])
    gi = x @ params["w_ih"] + params["b_ih"]
    gh = hid @ params["w_hh"] + params["b_hh"]
    r = jax.nn.sigmoid(gi[:, :H] + gh[:, :H])
    z = jax.nn.sigmoid(gi[:, H:2 * H] + gh[:, H:2 * H])
    n = jnp.tanh(gi[:, 2 * H:] + r * gh[:, 2 * H:])
    h_new = (1.0 - z) * n + z * hid
    logits = h_new @ params["w_out"] + params["b_out"]
    logp = jax.nn.log_softmax(logits, axis=1)
    return logp, h_new.reshape(1, 1, H), attn_w


def reference_sequence(tokens, hidden, encoder_outputs, params):
    logps, attns = [], []
    h = hidden
    for i in range(tokens.shape[0]):
        lp, h, aw = reference_forward(tokens[i:i + 1], h, encoder_outputs, params)
        logps.append(lp)
        attns.append(aw)
    return jnp.concatenate(logps, axis=0), h, jnp.concatenate(attns, axis=0)


# ----------------------------------------------------------------------------
# Main
# ----------------------------------------------------------------------------
if __name__ == "__main__":
    hidden_size = 32       # H
    output_size = 16       # V (vocab)
    max_length = 10        # L
    T = 8                  # decode steps fused into one kernel launch

    key = jax.random.PRNGKey(0)
    ks = jax.random.split(key, 12)
    f32 = jnp.float32
    s = 0.1

    params = {
        "emb":    s * jax.random.normal(ks[0], (output_size, hidden_size), f32),
        "w_attn": s * jax.random.normal(ks[1], (2 * hidden_size, max_length), f32),
        "b_attn": s * jax.random.normal(ks[2], (max_length,), f32),
        "w_comb": s * jax.random.normal(ks[3], (2 * hidden_size, hidden_size), f32),
        "b_comb": s * jax.random.normal(ks[4], (hidden_size,), f32),
        "w_ih":   s * jax.random.normal(ks[5], (hidden_size, 3 * hidden_size), f32),
        "b_ih":   s * jax.random.normal(ks[6], (3 * hidden_size,), f32),
        "w_hh":   s * jax.random.normal(ks[7], (hidden_size, 3 * hidden_size), f32),
        "b_hh":   s * jax.random.normal(ks[8], (3 * hidden_size,), f32),
        "w_out":  s * jax.random.normal(ks[9], (hidden_size, output_size), f32),
        "b_out":  s * jax.random.normal(ks[10], (output_size,), f32),
    }
    packed = pack_params(params, hidden_size)          # once, outside any loop

    tokens = jnp.array([3, 1, 7, 0, 12, 5, 9, 2], dtype=jnp.int32)     # (T,)
    hidden0 = s * jax.random.normal(ks[11], (1, 1, hidden_size), f32)  # (1,1,H)
    enc_out = s * jax.random.normal(
        jax.random.PRNGKey(42), (max_length, hidden_size), f32)        # (L, H)

    # --- multi-step fused decode --------------------------------------------
    logp_seq, final_h, attn_seq = attn_decoder_forward(tokens, hidden0, enc_out, packed)
    jax.block_until_ready((logp_seq, final_h, attn_seq))

    r_logp_seq, r_final_h, r_attn_seq = reference_sequence(tokens, hidden0, enc_out, params)
    # bf16 matmul operands + approx reciprocal -> looser tolerance than pure f32.
    np.testing.assert_allclose(np.asarray(logp_seq), np.asarray(r_logp_seq),
                               atol=1e-2, rtol=1e-2)
    np.testing.assert_allclose(np.asarray(final_h), np.asarray(r_final_h),
                               atol=1e-2, rtol=1e-2)
    np.testing.assert_allclose(np.asarray(attn_seq), np.asarray(r_attn_seq),
                               atol=1e-2, rtol=1e-2)

    # --- single-step check (exact semantics of AttnDecoderRNN.forward) ------
    logp1, h1, attn1 = attn_decoder_forward(tokens[:1], hidden0, enc_out, packed)
    jax.block_until_ready((logp1, h1, attn1))
    r_logp1, r_h1, r_attn1 = reference_forward(tokens[:1], hidden0, enc_out, params)
    np.testing.assert_allclose(np.asarray(logp1), np.asarray(r_logp1), atol=1e-2, rtol=1e-2)
    np.testing.assert_allclose(np.asarray(h1), np.asarray(r_h1), atol=1e-2, rtol=1e-2)
    np.testing.assert_allclose(np.asarray(attn1), np.asarray(r_attn1), atol=1e-2, rtol=1e-2)

    print("KERNEL_OK")
</pallas_src>

<mosaic_0001>
module attributes {stable_mosaic.version = 11 : i64} {
  func.func @attn_decoder_kernel(%arg0: memref<8x32xbf16, #tpu.memory_space<vmem>>, %arg1: memref<1x32xf32, #tpu.memory_space<vmem>>, %arg2: memref<10x32xbf16, #tpu.memory_space<vmem>>, %arg3: memref<32x10xbf16, #tpu.memory_space<vmem>>, %arg4: memref<32x10xbf16, #tpu.memory_space<vmem>>, %arg5: memref<1x10xf32, #tpu.memory_space<vmem>>, %arg6: memref<32x32xbf16, #tpu.memory_space<vmem>>, %arg7: memref<32x32xbf16, #tpu.memory_space<vmem>>, %arg8: memref<1x32xf32, #tpu.memory_space<vmem>>, %arg9: memref<32x128xbf16, #tpu.memory_space<vmem>>, %arg10: memref<32x128xbf16, #tpu.memory_space<vmem>>, %arg11: memref<1x128xf32, #tpu.memory_space<vmem>>, %arg12: memref<32x16xbf16, #tpu.memory_space<vmem>>, %arg13: memref<1x16xf32, #tpu.memory_space<vmem>>, %arg14: memref<8x128xf32, #tpu.memory_space<vmem>>) attributes {dimension_semantics = [], scalar_prefetch = 0 : i64, scratch_operands = 0 : i64, tpu.core_type = #tpu.core_type<tc>} {
    %c0 = arith.constant 0 : index
    %c0_0 = arith.constant 0 : index
    %0 = vector.load %arg2[%c0, %c0_0] : memref<10x32xbf16, #tpu.memory_space<vmem>>, vector<10x32xbf16>
    %c0_1 = arith.constant 0 : index
    %c0_2 = arith.constant 0 : index
    %1 = vector.load %arg3[%c0_1, %c0_2] : memref<32x10xbf16, #tpu.memory_space<vmem>>, vector<32x10xbf16>
    %c0_3 = arith.constant 0 : index
    %c0_4 = arith.constant 0 : index
    %2 = vector.load %arg4[%c0_3, %c0_4] : memref<32x10xbf16, #tpu.memory_space<vmem>>, vector<32x10xbf16>
    %c0_5 = arith.constant 0 : index
    %c0_6 = arith.constant 0 : index
    %3 = vector.load %arg5[%c0_5, %c0_6] : memref<1x10xf32, #tpu.memory_space<vmem>>, vector<1x10xf32>
    %c0_7 = arith.constant 0 : index
    %c0_8 = arith.constant 0 : index
    %4 = vector.load %arg6[%c0_7, %c0_8] : memref<32x32xbf16, #tpu.memory_space<vmem>>, vector<32x32xbf16>
    %c0_9 = arith.constant 0 : index
    %c0_10 = arith.constant 0 : index
    %5 = vector.load %arg7[%c0_9, %c0_10] : memref<32x32xbf16, #tpu.memory_space<vmem>>, vector<32x32xbf16>
    %c0_11 = arith.constant 0 : index
    %c0_12 = arith.constant 0 : index
    %6 = vector.load %arg8[%c0_11, %c0_12] : memref<1x32xf32, #tpu.memory_space<vmem>>, vector<1x32xf32>
    %c0_13 = arith.constant 0 : index
    %c0_14 = arith.constant 0 : index
    %7 = vector.load %arg9[%c0_13, %c0_14] : memref<32x128xbf16, #tpu.memory_space<vmem>>, vector<32x128xbf16>
    %c0_15 = arith.constant 0 : index
    %c0_16 = arith.constant 0 : index
    %8 = vector.load %arg10[%c0_15, %c0_16] : memref<32x128xbf16, #tpu.memory_space<vmem>>, vector<32x128xbf16>
    %c0_17 = arith.constant 0 : index
    %c0_18 = arith.constant 0 : index
    %9 = vector.load %arg11[%c0_17, %c0_18] : memref<1x128xf32, #tpu.memory_space<vmem>>, vector<1x128xf32>
    %c0_19 = arith.constant 0 : index
    %c0_20 = arith.constant 0 : index
    %10 = vector.load %arg12[%c0_19, %c0_20] : memref<32x16xbf16, #tpu.memory_space<vmem>>, vector<32x16xbf16>
    %c0_21 = arith.constant 0 : index
    %c0_22 = arith.constant 0 : index
    %11 = vector.load %arg13[%c0_21, %c0_22] : memref<1x16xf32, #tpu.memory_space<vmem>>, vector<1x16xf32>
    %c0_23 = arith.constant 0 : index
    %c0_24 = arith.constant 0 : index
    %12 = vector.load %arg1[%c0_23, %c0_24] : memref<1x32xf32, #tpu.memory_space<vmem>>, vector<1x32xf32>
    %cst = arith.constant 0.000000e+00 : f32
    %13 = vector.broadcast %cst : f32 to vector<1x70xf32>
    %c0_25 = arith.constant 0 : index
    %c0_26 = arith.constant 0 : index
    %14 = vector.load %arg0[%c0_25, %c0_26] : memref<8x32xbf16, #tpu.memory_space<vmem>>, vector<1x32xbf16>
    %15 = arith.truncf %12 : vector<1x32xf32> to vector<1x32xbf16>
    %cst_27 = arith.constant dense<0.000000e+00> : vector<1x10xf32>
    %16 = tpu.matmul %14, %1, %cst_27 {dimension_numbers = #tpu.dot_dimension_numbers<[1], [0], [0], [1], [0, 0, 1, 1], [], []>} : vector<1x32xbf16>, vector<32x10xbf16>, vector<1x10xf32> -> vector<1x10xf32>
    %cst_28 = arith.constant dense<0.000000e+00> : vector<1x10xf32>
    %17 = tpu.matmul %15, %2, %cst_28 {dimension_numbers = #tpu.dot_dimension_numbers<[1], [0], [0], [1], [0, 0, 1, 1], [], []>} : vector<1x32xbf16>, vector<32x10xbf16>, vector<1x10xf32> -> vector<1x10xf32>
    %18 = arith.addf %16, %17 : vector<1x10xf32>
    %19 = arith.addf %18, %3 : vector<1x10xf32>
    %cst_29 = arith.constant dense<0xFF800000> : vector<1xf32>
    %20 = vector.multi_reduction <maximumf>, %19, %cst_29 [1] : vector<1x10xf32> to vector<1xf32>
    %21 = vector.shape_cast %20 : vector<1xf32> to vector<1x1xf32>
    %22 = vector.broadcast %21 : vector<1x1xf32> to vector<1x10xf32>
    %23 = arith.subf %19, %22 : vector<1x10xf32>
    %24 = math.exp %23 : vector<1x10xf32>
    %cst_30 = arith.constant dense<0.000000e+00> : vector<1xf32>
    %25 = vector.multi_reduction <add>, %24, %cst_30 [1] : vector<1x10xf32> to vector<1xf32>
    %26 = vector.shape_cast %25 : vector<1xf32> to vector<1x1xf32>
    %27 = tpu.reciprocal %26 {approx = true} : vector<1x1xf32> -> vector<1x1xf32>
    %28 = vector.broadcast %27 : vector<1x1xf32> to vector<1x10xf32>
    %29 = arith.mulf %24, %28 : vector<1x10xf32>
    %30 = arith.truncf %24 : vector<1x10xf32> to vector<1x10xbf16>
    %cst_31 = arith.constant dense<0.000000e+00> : vector<1x32xf32>
    %31 = tpu.matmul %30, %0, %cst_31 {dimension_numbers = #tpu.dot_dimension_numbers<[1], [0], [0], [1], [0, 0, 1, 1], [], []>} : vector<1x10xbf16>, vector<10x32xbf16>, vector<1x32xf32> -> vector<1x32xf32>
    %32 = vector.broadcast %27 : vector<1x1xf32> to vector<1x32xf32>
    %33 = arith.mulf %31, %32 : vector<1x32xf32>
    %cst_32 = arith.constant dense<0.000000e+00> : vector<1x32xf32>
    %34 = tpu.matmul %14, %4, %cst_32 {dimension_numbers = #tpu.dot_dimension_numbers<[1], [0], [0], [1], [0, 0, 1, 1], [], []>} : vector<1x32xbf16>, vector<32x32xbf16>, vector<1x32xf32> -> vector<1x32xf32>
    %35 = arith.truncf %33 : vector<1x32xf32> to vector<1x32xbf16>
    %cst_33 = arith.constant dense<0.000000e+00> : vector<1x32xf32>
    %36 = tpu.matmul %35, %5, %cst_33 {dimension_numbers = #tpu.dot_dimension_numbers<[1], [0], [0], [1], [0, 0, 1, 1], [], []>} : vector<1x32xbf16>, vector<32x32xbf16>, vector<1x32xf32> -> vector<1x32xf32>
    %37 = arith.addf %34, %36 : vector<1x32xf32>
    %38 = arith.addf %37, %6 : vector<1x32xf32>
    %cst_34 = arith.constant 0.000000e+00 : f32
    %39 = vector.broadcast %cst_34 : f32 to vector<1x32xf32>
    %40 = arith.maximumf %38, %39 : vector<1x32xf32>
    %41 = arith.truncf %40 : vector<1x32xf32> to vector<1x32xbf16>
    %cst_35 = arith.constant dense<0.000000e+00> : vector<1x128xf32>
    %42 = tpu.matmul %41, %7, %cst_35 {dimension_numbers = #tpu.dot_dimension_numbers<[1], [0], [0], [1], [0, 0, 1, 1], [], []>} : vector<1x32xbf16>, vector<32x128xbf16>, vector<1x128xf32> -> vector<1x128xf32>
    %cst_36 = arith.constant dense<0.000000e+00> : vector<1x128xf32>
    %43 = tpu.matmul %15, %8, %cst_36 {dimension_numbers = #tpu.dot_dimension_numbers<[1], [0], [0], [1], [0, 0, 1, 1], [], []>} : vector<1x32xbf16>, vector<32x128xbf16>, vector<1x128xf32> -> vector<1x128xf32>
    %44 = arith.addf %42, %43 : vector<1x128xf32>
    %45 = arith.addf %44, %9 : vector<1x128xf32>
    %46 = vector.extract_strided_slice %45 {offsets = [0, 0], sizes = [1, 64], strides = [1, 1]} : vector<1x128xf32> to vector<1x64xf32>
    %47 = arith.negf %46 : vector<1x64xf32>
    %48 = math.exp %47 : vector<1x64xf32>
    %cst_37 = arith.constant 1.000000e+00 : f32
    %49 = vector.broadcast %cst_37 : f32 to vector<1x64xf32>
    %50 = arith.addf %49, %48 : vector<1x64xf32>
    %51 = arith.divf %49, %50 : vector<1x64xf32>
    %52 = vector.extract_strided_slice %51 {offsets = [0, 0], sizes = [1, 32], strides = [1, 1]} : vector<1x64xf32> to vector<1x32xf32>
    %53 = vector.extract_strided_slice %51 {offsets = [0, 32], sizes = [1, 32], strides = [1, 1]} : vector<1x64xf32> to vector<1x32xf32>
    %54 = vector.extract_strided_slice %45 {offsets = [0, 64], sizes = [1, 32], strides = [1, 1]} : vector<1x128xf32> to vector<1x32xf32>
    %55 = vector.extract_strided_slice %45 {offsets = [0, 96], sizes = [1, 32], strides = [1, 1]} : vector<1x128xf32> to vector<1x32xf32>
    %56 = arith.mulf %52, %55 : vector<1x32xf32>
    %57 = arith.addf %54, %56 : vector<1x32xf32>
    %58 = math.tanh %57 : vector<1x32xf32>
    %cst_38 = arith.constant 1.000000e+00 : f32
    %59 = vector.broadcast %cst_38 : f32 to vector<1x32xf32>
    %60 = arith.subf %59, %53 : vector<1x32xf32>
    %61 = arith.mulf %60, %58 : vector<1x32xf32>
    %62 = arith.mulf %53, %12 : vector<1x32xf32>
    %63 = arith.addf %61, %62 : vector<1x32xf32>
    %64 = arith.truncf %63 : vector<1x32xf32> to vector<1x32xbf16>
    %cst_39 = arith.constant dense<0.000000e+00> : vector<1x16xf32>
    %65 = tpu.matmul %64, %10, %cst_39 {dimension_numbers = #tpu.dot_dimension_numbers<[1], [0], [0], [1], [0, 0, 1, 1], [], []>} : vector<1x32xbf16>, vector<32x16xbf16>, vector<1x16xf32> -> vector<1x16xf32>
    %66 = arith.addf %65, %11 : vector<1x16xf32>
    %cst_40 = arith.constant dense<0xFF800000> : vector<1xf32>
    %67 = vector.multi_reduction <maximumf>, %66, %cst_40 [1] : vector<1x16xf32> to vector<1xf32>
    %68 = vector.shape_cast %67 : vector<1xf32> to vector<1x1xf32>
    %69 = vector.broadcast %68 : vector<1x1xf32> to vector<1x16xf32>
    %70 = arith.subf %66, %69 : vector<1x16xf32>
    %71 = math.exp %70 : vector<1x16xf32>
    %cst_41 = arith.constant dense<0.000000e+00> : vector<1xf32>
    %72 = vector.multi_reduction <add>, %71, %cst_41 [1] : vector<1x16xf32> to vector<1xf32>
    %73 = vector.shape_cast %72 : vector<1xf32> to vector<1x1xf32>
    %74 = math.log %73 : vector<1x1xf32>
    %75 = arith.addf %74, %68 : vector<1x1xf32>
    %76 = vector.broadcast %75 : vector<1x1xf32> to vector<1x16xf32>
    %77 = arith.subf %66, %76 : vector<1x16xf32>
    %78 = tpu.concatenate %77, %63, %29, %13 in 1 : vector<1x16xf32>, vector<1x32xf32>, vector<1x10xf32>, vector<1x70xf32> -> vector<1x128xf32>
    %c0_42 = arith.constant 0 : index
    %c0_43 = arith.constant 0 : index
    %79 = vector.load %arg14[%c0_42, %c0_43] : memref<8x128xf32, #tpu.memory_space<vmem>>, vector<1x128xf32>
    tpu.vector_store %arg14[%c0_42, %c0_43], %78 {strides = array<i32>} : memref<8x128xf32, #tpu.memory_space<vmem>>, vector<1x128xf32>,
    %c1 = arith.constant 1 : index
    %c0_44 = arith.constant 0 : index
    %80 = vector.load %arg0[%c1, %c0_44] : memref<8x32xbf16, #tpu.memory_space<vmem>>, vector<1x32xbf16>
    %81 = arith.truncf %63 : vector<1x32xf32> to vector<1x32xbf16>
    %cst_45 = arith.constant dense<0.000000e+00> : vector<1x10xf32>
    %82 = tpu.matmul %80, %1, %cst_45 {dimension_numbers = #tpu.dot_dimension_numbers<[1], [0], [0], [1], [0, 0, 1, 1], [], []>} : vector<1x32xbf16>, vector<32x10xbf16>, vector<1x10xf32> -> vector<1x10xf32>
    %cst_46 = arith.constant dense<0.000000e+00> : vector<1x10xf32>
    %83 = tpu.matmul %81, %2, %cst_46 {dimension_numbers = #tpu.dot_dimension_numbers<[1], [0], [0], [1], [0, 0, 1, 1], [], []>} : vector<1x32xbf16>, vector<32x10xbf16>, vector<1x10xf32> -> vector<1x10xf32>
    %84 = arith.addf %82, %83 : vector<1x10xf32>
    %85 = arith.addf %84, %3 : vector<1x10xf32>
    %cst_47 = arith.constant dense<0xFF800000> : vector<1xf32>
    %86 = vector.multi_reduction <maximumf>, %85, %cst_47 [1] : vector<1x10xf32> to vector<1xf32>
    %87 = vector.shape_cast %86 : vector<1xf32> to vector<1x1xf32>
    %88 = vector.broadcast %87 : vector<1x1xf32> to vector<1x10xf32>
    %89 = arith.subf %85, %88 : vector<1x10xf32>
    %90 = math.exp %89 : vector<1x10xf32>
    %cst_48 = arith.constant dense<0.000000e+00> : vector<1xf32>
    %91 = vector.multi_reduction <add>, %90, %cst_48 [1] : vector<1x10xf32> to vector<1xf32>
    %92 = vector.shape_cast %91 : vector<1xf32> to vector<1x1xf32>
    %93 = tpu.reciprocal %92 {approx = true} : vector<1x1xf32> -> vector<1x1xf32>
    %94 = vector.broadcast %93 : vector<1x1xf32> to vector<1x10xf32>
    %95 = arith.mulf %90, %94 : vector<1x10xf32>
    %96 = arith.truncf %90 : vector<1x10xf32> to vector<1x10xbf16>
    %cst_49 = arith.constant dense<0.000000e+00> : vector<1x32xf32>
    %97 = tpu.matmul %96, %0, %cst_49 {dimension_numbers = #tpu.dot_dimension_numbers<[1], [0], [0], [1], [0, 0, 1, 1], [], []>} : vector<1x10xbf16>, vector<10x32xbf16>, vector<1x32xf32> -> vector<1x32xf32>
    %98 = vector.broadcast %93 : vector<1x1xf32> to vector<1x32xf32>
    %99 = arith.mulf %97, %98 : vector<1x32xf32>
    %cst_50 = arith.constant dense<0.000000e+00> : vector<1x32xf32>
    %100 = tpu.matmul %80, %4, %cst_50 {dimension_numbers = #tpu.dot_dimension_numbers<[1], [0], [0], [1], [0, 0, 1, 1], [], []>} : vector<1x32xbf16>, vector<32x32xbf16>, vector<1x32xf32> -> vector<1x32xf32>
    %101 = arith.truncf %99 : vector<1x32xf32> to vector<1x32xbf16>
    %cst_51 = arith.constant dense<0.000000e+00> : vector<1x32xf32>
    %102 = tpu.matmul %101, %5, %cst_51 {dimension_numbers = #tpu.dot_dimension_numbers<[1], [0], [0], [1], [0, 0, 1, 1], [], []>} : vector<1x32xbf16>, vector<32x32xbf16>, vector<1x32xf32> -> vector<1x32xf32>
    %103 = arith.addf %100, %102 : vector<1x32xf32>
    %104 = arith.addf %103, %6 : vector<1x32xf32>
    %cst_52 = arith.constant 0.000000e+00 : f32
    %105 = vector.broadcast %cst_52 : f32 to vector<1x32xf32>
    %106 = arith.maximumf %104, %105 : vector<1x32xf32>
    %107 = arith.truncf %106 : vector<1x32xf32> to vector<1x32xbf16>
    %cst_53 = arith.constant dense<0.000000e+00> : vector<1x128xf32>
    %108 = tpu.matmul %107, %7, %cst_53 {dimension_numbers = #tpu.dot_dimension_numbers<[1], [0], [0], [1], [0, 0, 1, 1], [], []>} : vector<1x32xbf16>, vector<32x128xbf16>, vector<1x128xf32> -> vector<1x128xf32>
    %cst_54 = arith.constant dense<0.000000e+00> : vector<1x128xf32>
    %109 = tpu.matmul %81, %8, %cst_54 {dimension_numbers = #tpu.dot_dimension_numbers<[1], [0], [0], [1], [0, 0, 1, 1], [], []>} : vector<1x32xbf16>, vector<32x128xbf16>, vector<1x128xf32> -> vector<1x128xf32>
    %110 = arith.addf %108, %109 : vector<1x128xf32>
    %111 = arith.addf %110, %9 : vector<1x128xf32>
    %112 = vector.extract_strided_slice %111 {offsets = [0, 0], sizes = [1, 64], strides = [1, 1]} : vector<1x128xf32> to vector<1x64xf32>
    %113 = arith.negf %112 : vector<1x64xf32>
    %114 = math.exp %113 : vector<1x64xf32>
    %cst_55 = arith.constant 1.000000e+00 : f32
    %115 = vector.broadcast %cst_55 : f32 to vector<1x64xf32>
    %116 = arith.addf %115, %114 : vector<1x64xf32>
    %117 = arith.divf %115, %116 : vector<1x64xf32>
    %118 = vector.extract_strided_slice %117 {offsets = [0, 0], sizes = [1, 32], strides = [1, 1]} : vector<1x64xf32> to vector<1x32xf32>
    %119 = vector.extract_strided_slice %117 {offsets = [0, 32], sizes = [1, 32], strides = [1, 1]} : vector<1x64xf32> to vector<1x32xf32>
    %120 = vector.extract_strided_slice %111 {offsets = [0, 64], sizes = [1, 32], strides = [1, 1]} : vector<1x128xf32> to vector<1x32xf32>
    %121 = vector.extract_strided_slice %111 {offsets = [0, 96], sizes = [1, 32], strides = [1, 1]} : vector<1x128xf32> to vector<1x32xf32>
    %122 = arith.mulf %118, %121 : vector<1x32xf32>
    %123 = arith.addf %120, %122 : vector<1x32xf32>
    %124 = math.tanh %123 : vector<1x32xf32>
    %cst_56 = arith.constant 1.000000e+00 : f32
    %125 = vector.broadcast %cst_56 : f32 to vector<1x32xf32>
    %126 = arith.subf %125, %119 : vector<1x32xf32>
    %127 = arith.mulf %126, %124 : vector<1x32xf32>
    %128 = arith.mulf %119, %63 : vector<1x32xf32>
    %129 = arith.addf %127, %128 : vector<1x32xf32>
    %130 = arith.truncf %129 : vector<1x32xf32> to vector<1x32xbf16>
    %cst_57 = arith.constant dense<0.000000e+00> : vector<1x16xf32>
    %131 = tpu.matmul %130, %10, %cst_57 {dimension_numbers = #tpu.dot_dimension_numbers<[1], [0], [0], [1], [0, 0, 1, 1], [], []>} : vector<1x32xbf16>, vector<32x16xbf16>, vector<1x16xf32> -> vector<1x16xf32>
    %132 = arith.addf %131, %11 : vector<1x16xf32>
    %cst_58 = arith.constant dense<0xFF800000> : vector<1xf32>
    %133 = vector.multi_reduction <maximumf>, %132, %cst_58 [1] : vector<1x16xf32> to vector<1xf32>
    %134 = vector.shape_cast %133 : vector<1xf32> to vector<1x1xf32>
    %135 = vector.broadcast %134 : vector<1x1xf32> to vector<1x16xf32>
    %136 = arith.subf %132, %135 : vector<1x16xf32>
    %137 = math.exp %136 : vector<1x16xf32>
    %cst_59 = arith.constant dense<0.000000e+00> : vector<1xf32>
    %138 = vector.multi_reduction <add>, %137, %cst_59 [1] : vector<1x16xf32> to vector<1xf32>
    %139 = vector.shape_cast %138 : vector<1xf32> to vector<1x1xf32>
    %140 = math.log %139 : vector<1x1xf32>
    %141 = arith.addf %140, %134 : vector<1x1xf32>
    %142 = vector.broadcast %141 : vector<1x1xf32> to vector<1x16xf32>
    %143 = arith.subf %132, %142 : vector<1x16xf32>
    %144 = tpu.concatenate %143, %129, %95, %13 in 1 : vector<1x16xf32>, vector<1x32xf32>, vector<1x10xf32>, vector<1x70xf32> -> vector<1x128xf32>
    %c1_60 = arith.constant 1 : index
    %c0_61 = arith.constant 0 : index
    %145 = vector.load %arg14[%c1_60, %c0_61] : memref<8x128xf32, #tpu.memory_space<vmem>>, vector<1x128xf32>
    tpu.vector_store %arg14[%c1_60, %c0_61], %144 {strides = array<i32>} : memref<8x128xf32, #tpu.memory_space<vmem>>, vector<1x128xf32>,
    %c2 = arith.constant 2 : index
    %c0_62 = arith.constant 0 : index
    %146 = vector.load %arg0[%c2, %c0_62] : memref<8x32xbf16, #tpu.memory_space<vmem>>, vector<1x32xbf16>
    %147 = arith.truncf %129 : vector<1x32xf32> to vector<1x32xbf16>
    %cst_63 = arith.constant dense<0.000000e+00> : vector<1x10xf32>
    %148 = tpu.matmul %146, %1, %cst_63 {dimension_numbers = #tpu.dot_dimension_numbers<[1], [0], [0], [1], [0, 0, 1, 1], [], []>} : vector<1x32xbf16>, vector<32x10xbf16>, vector<1x10xf32> -> vector<1x10xf32>
    %cst_64 = arith.constant dense<0.000000e+00> : vector<1x10xf32>
    %149 = tpu.matmul %147, %2, %cst_64 {dimension_numbers = #tpu.dot_dimension_numbers<[1], [0], [0], [1], [0, 0, 1, 1], [], []>} : vector<1x32xbf16>, vector<32x10xbf16>, vector<1x10xf32> -> vector<1x10xf32>
    %150 = arith.addf %148, %149 : vector<1x10xf32>
    %151 = arith.addf %150, %3 : vector<1x10xf32>
    %cst_65 = arith.constant dense<0xFF800000> : vector<1xf32>
    %152 = vector.multi_reduction <maximumf>, %151, %cst_65 [1] : vector<1x10xf32> to vector<1xf32>
    %153 = vector.shape_cast %152 : vector<1xf32> to vector<1x1xf32>
    %154 = vector.broadcast %153 : vector<1x1xf32> to vector<1x10xf32>
    %155 = arith.subf %151, %154 : vector<1x10xf32>
    %156 = math.exp %155 : vector<1x10xf32>
    %cst_66 = arith.constant dense<0.000000e+00> : vector<1xf32>
    %157 = vector.multi_reduction <add>, %156, %cst_66 [1] : vector<1x10xf32> to vector<1xf32>
    %158 = vector.shape_cast %157 : vector<1xf32> to vector<1x1xf32>
    %159 = tpu.reciprocal %158 {approx = true} : vector<1x1xf32> -> vector<1x1xf32>
    %160 = vector.broadcast %159 : vector<1x1xf32> to vector<1x10xf32>
    %161 = arith.mulf %156, %160 : vector<1x10xf32>
    %162 = arith.truncf %156 : vector<1x10xf32> to vector<1x10xbf16>
    %cst_67 = arith.constant dense<0.000000e+00> : vector<1x32xf32>
    %163 = tpu.matmul %162, %0, %cst_67 {dimension_numbers = #tpu.dot_dimension_numbers<[1], [0], [0], [1], [0, 0, 1, 1], [], []>} : vector<1x10xbf16>, vector<10x32xbf16>, vector<1x32xf32> -> vector<1x32xf32>
    %164 = vector.broadcast %159 : vector<1x1xf32> to vector<1x32xf32>
    %165 = arith.mulf %163, %164 : vector<1x32xf32>
    %cst_68 = arith.constant dense<0.000000e+00> : vector<1x32xf32>
    %166 = tpu.matmul %146, %4, %cst_68 {dimension_numbers = #tpu.dot_dimension_numbers<[1], [0], [0], [1], [0, 0, 1, 1], [], []>} : vector<1x32xbf16>, vector<32x32xbf16>, vector<1x32xf32> -> vector<1x32xf32>
    %167 = arith.truncf %165 : vector<1x32xf32> to vector<1x32xbf16>
    %cst_69 = arith.constant dense<0.000000e+00> : vector<1x32xf32>
    %168 = tpu.matmul %167, %5, %cst_69 {dimension_numbers = #tpu.dot_dimension_numbers<[1], [0], [0], [1], [0, 0, 1, 1], [], []>} : vector<1x32xbf16>, vector<32x32xbf16>, vector<1x32xf32> -> vector<1x32xf32>
    %169 = arith.addf %166, %168 : vector<1x32xf32>
    %170 = arith.addf %169, %6 : vector<1x32xf32>
    %cst_70 = arith.constant 0.000000e+00 : f32
    %171 = vector.broadcast %cst_70 : f32 to vector<1x32xf32>
    %172 = arith.maximumf %170, %171 : vector<1x32xf32>
    %173 = arith.truncf %172 : vector<1x32xf32> to vector<1x32xbf16>
    %cst_71 = arith.constant dense<0.000000e+00> : vector<1x128xf32>
    %174 = tpu.matmul %173, %7, %cst_71 {dimension_numbers = #tpu.dot_dimension_numbers<[1], [0], [0], [1], [0, 0, 1, 1], [], []>} : vector<1x32xbf16>, vector<32x128xbf16>, vector<1x128xf32> -> vector<1x128xf32>
    %cst_72 = arith.constant dense<0.000000e+00> : vector<1x128xf32>
    %175 = tpu.matmul %147, %8, %cst_72 {dimension_numbers = #tpu.dot_dimension_numbers<[1], [0], [0], [1], [0, 0, 1, 1], [], []>} : vector<1x32xbf16>, vector<32x128xbf16>, vector<1x128xf32> -> vector<1x128xf32>
    %176 = arith.addf %174, %175 : vector<1x128xf32>
    %177 = arith.addf %176, %9 : vector<1x128xf32>
    %178 = vector.extract_strided_slice %177 {offsets = [0, 0], sizes = [1, 64], strides = [1, 1]} : vector<1x128xf32> to vector<1x64xf32>
    %179 = arith.negf %178 : vector<1x64xf32>
    %180 = math.exp %179 : vector<1x64xf32>
    %cst_73 = arith.constant 1.000000e+00 : f32
    %181 = vector.broadcast %cst_73 : f32 to vector<1x64xf32>
    %182 = arith.addf %181, %180 : vector<1x64xf32>
    %183 = arith.divf %181, %182 : vector<1x64xf32>
    %184 = vector.extract_strided_slice %183 {offsets = [0, 0], sizes = [1, 32], strides = [1, 1]} : vector<1x64xf32> to vector<1x32xf32>
    %185 = vector.extract_strided_slice %183 {offsets = [0, 32], sizes = [1, 32], strides = [1, 1]} : vector<1x64xf32> to vector<1x32xf32>
    %186 = vector.extract_strided_slice %177 {offsets = [0, 64], sizes = [1, 32], strides = [1, 1]} : vector<1x128xf32> to vector<1x32xf32>
    %187 = vector.extract_strided_slice %177 {offsets = [0, 96], sizes = [1, 32], strides = [1, 1]} : vector<1x128xf32> to vector<1x32xf32>
    %188 = arith.mulf %184, %187 : vector<1x32xf32>
    %189 = arith.addf %186, %188 : vector<1x32xf32>
    %190 = math.tanh %189 : vector<1x32xf32>
    %cst_74 = arith.constant 1.000000e+00 : f32
    %191 = vector.broadcast %cst_74 : f32 to vector<1x32xf32>
    %192 = arith.subf %191, %185 : vector<1x32xf32>
    %193 = arith.mulf %192, %190 : vector<1x32xf32>
    %194 = arith.mulf %185, %129 : vector<1x32xf32>
    %195 = arith.addf %193, %194 : vector<1x32xf32>
    %196 = arith.truncf %195 : vector<1x32xf32> to vector<1x32xbf16>
    %cst_75 = arith.constant dense<0.000000e+00> : vector<1x16xf32>
    %197 = tpu.matmul %196, %10, %cst_75 {dimension_numbers = #tpu.dot_dimension_numbers<[1], [0], [0], [1], [0, 0, 1, 1], [], []>} : vector<1x32xbf16>, vector<32x16xbf16>, vector<1x16xf32> -> vector<1x16xf32>
    %198 = arith.addf %197, %11 : vector<1x16xf32>
    %cst_76 = arith.constant dense<0xFF800000> : vector<1xf32>
    %199 = vector.multi_reduction <maximumf>, %198, %cst_76 [1] : vector<1x16xf32> to vector<1xf32>
    %200 = vector.shape_cast %199 : vector<1xf32> to vector<1x1xf32>
    %201 = vector.broadcast %200 : vector<1x1xf32> to vector<1x16xf32>
    %202 = arith.subf %198, %201 : vector<1x16xf32>
    %203 = math.exp %202 : vector<1x16xf32>
    %cst_77 = arith.constant dense<0.000000e+00> : vector<1xf32>
    %204 = vector.multi_reduction <add>, %203, %cst_77 [1] : vector<1x16xf32> to vector<1xf32>
    %205 = vector.shape_cast %204 : vector<1xf32> to vector<1x1xf32>
    %206 = math.log %205 : vector<1x1xf32>
    %207 = arith.addf %206, %200 : vector<1x1xf32>
    %208 = vector.broadcast %207 : vector<1x1xf32> to vector<1x16xf32>
    %209 = arith.subf %198, %208 : vector<1x16xf32>
    %210 = tpu.concatenate %209, %195, %161, %13 in 1 : vector<1x16xf32>, vector<1x32xf32>, vector<1x10xf32>, vector<1x70xf32> -> vector<1x128xf32>
    %c2_78 = arith.constant 2 : index
    %c0_79 = arith.constant 0 : index
    %211 = vector.load %arg14[%c2_78, %c0_79] : memref<8x128xf32, #tpu.memory_space<vmem>>, vector<1x128xf32>
    tpu.vector_store %arg14[%c2_78, %c0_79], %210 {strides = array<i32>} : memref<8x128xf32, #tpu.memory_space<vmem>>, vector<1x128xf32>,
    %c3 = arith.constant 3 : index
    %c0_80 = arith.constant 0 : index
    %212 = vector.load %arg0[%c3, %c0_80] : memref<8x32xbf16, #tpu.memory_space<vmem>>, vector<1x32xbf16>
    %213 = arith.truncf %195 : vector<1x32xf32> to vector<1x32xbf16>
    %cst_81 = arith.constant dense<0.000000e+00> : vector<1x10xf32>
    %214 = tpu.matmul %212, %1, %cst_81 {dimension_numbers = #tpu.dot_dimension_numbers<[1], [0], [0], [1], [0, 0, 1, 1], [], []>} : vector<1x32xbf16>, vector<32x10xbf16>, vector<1x10xf32> -> vector<1x10xf32>
    %cst_82 = arith.constant dense<0.000000e+00> : vector<1x10xf32>
    %215 = tpu.matmul %213, %2, %cst_82 {dimension_numbers = #tpu.dot_dimension_numbers<[1], [0], [0], [1], [0, 0, 1, 1], [], []>} : vector<1x32xbf16>, vector<32x10xbf16>, vector<1x10xf32> -> vector<1x10xf32>
    %216 = arith.addf %214, %215 : vector<1x10xf32>
    %217 = arith.addf %216, %3 : vector<1x10xf32>
    %cst_83 = arith.constant dense<0xFF800000> : vector<1xf32>
    %218 = vector.multi_reduction <maximumf>, %217, %cst_83 [1] : vector<1x10xf32> to vector<1xf32>
    %219 = vector.shape_cast %218 : vector<1xf32> to vector<1x1xf32>
    %220 = vector.broadcast %219 : vector<1x1xf32> to vector<1x10xf32>
    %221 = arith.subf %217, %220 : vector<1x10xf32>
    %222 = math.exp %221 : vector<1x10xf32>
    %cst_84 = arith.constant dense<0.000000e+00> : vector<1xf32>
    %223 = vector.multi_reduction <add>, %222, %cst_84 [1] : vector<1x10xf32> to vector<1xf32>
    %224 = vector.shape_cast %223 : vector<1xf32> to vector<1x1xf32>
    %225 = tpu.reciprocal %224 {approx = true} : vector<1x1xf32> -> vector<1x1xf32>
    %226 = vector.broadcast %225 : vector<1x1xf32> to vector<1x10xf32>
    %227 = arith.mulf %222, %226 : vector<1x10xf32>
    %228 = arith.truncf %222 : vector<1x10xf32> to vector<1x10xbf16>
    %cst_85 = arith.constant dense<0.000000e+00> : vector<1x32xf32>
    %229 = tpu.matmul %228, %0, %cst_85 {dimension_numbers = #tpu.dot_dimension_numbers<[1], [0], [0], [1], [0, 0, 1, 1], [], []>} : vector<1x10xbf16>, vector<10x32xbf16>, vector<1x32xf32> -> vector<1x32xf32>
    %230 = vector.broadcast %225 : vector<1x1xf32> to vector<1x32xf32>
    %231 = arith.mulf %229, %230 : vector<1x32xf32>
    %cst_86 = arith.constant dense<0.000000e+00> : vector<1x32xf32>
    %232 = tpu.matmul %212, %4, %cst_86 {dimension_numbers = #tpu.dot_dimension_numbers<[1], [0], [0], [1], [0, 0, 1, 1], [], []>} : vector<1x32xbf16>, vector<32x32xbf16>, vector<1x32xf32> -> vector<1x32xf32>
    %233 = arith.truncf %231 : vector<1x32xf32> to vector<1x32xbf16>
    %cst_87 = arith.constant dense<0.000000e+00> : vector<1x32xf32>
    %234 = tpu.matmul %233, %5, %cst_87 {dimension_numbers = #tpu.dot_dimension_numbers<[1], [0], [0], [1], [0, 0, 1, 1], [], []>} : vector<1x32xbf16>, vector<32x32xbf16>, vector<1x32xf32> -> vector<1x32xf32>
    %235 = arith.addf %232, %234 : vector<1x32xf32>
    %236 = arith.addf %235, %6 : vector<1x32xf32>
    %cst_88 = arith.constant 0.000000e+00 : f32
    %237 = vector.broadcast %cst_88 : f32 to vector<1x32xf32>
    %238 = arith.maximumf %236, %237 : vector<1x32xf32>
    %239 = arith.truncf %238 : vector<1x32xf32> to vector<1x32xbf16>
    %cst_89 = arith.constant dense<0.000000e+00> : vector<1x128xf32>
    %240 = tpu.matmul %239, %7, %cst_89 {dimension_numbers = #tpu.dot_dimension_numbers<[1], [0], [0], [1], [0, 0, 1, 1], [], []>} : vector<1x32xbf16>, vector<32x128xbf16>, vector<1x128xf32> -> vector<1x128xf32>
    %cst_90 = arith.constant dense<0.000000e+00> : vector<1x128xf32>
    %241 = tpu.matmul %213, %8, %cst_90 {dimension_numbers = #tpu.dot_dimension_numbers<[1], [0], [0], [1], [0, 0, 1, 1], [], []>} : vector<1x32xbf16>, vector<32x128xbf16>, vector<1x128xf32> -> vector<1x128xf32>
    %242 = arith.addf %240, %241 : vector<1x128xf32>
    %243 = arith.addf %242, %9 : vector<1x128xf32>
    %244 = vector.extract_strided_slice %243 {offsets = [0, 0], sizes = [1, 64], strides = [1, 1]} : vector<1x128xf32> to vector<1x64xf32>
    %245 = arith.negf %244 : vector<1x64xf32>
    %246 = math.exp %245 : vector<1x64xf32>
    %cst_91 = arith.constant 1.000000e+00 : f32
    %247 = vector.broadcast %cst_91 : f32 to vector<1x64xf32>
    %248 = arith.addf %247, %246 : vector<1x64xf32>
    %249 = arith.divf %247, %248 : vector<1x64xf32>
    %250 = vector.extract_strided_slice %249 {offsets = [0, 0], sizes = [1, 32], strides = [1, 1]} : vector<1x64xf32> to vector<1x32xf32>
    %251 = vector.extract_strided_slice %249 {offsets = [0, 32], sizes = [1, 32], strides = [1, 1]} : vector<1x64xf32> to vector<1x32xf32>
    %252 = vector.extract_strided_slice %243 {offsets = [0, 64], sizes = [1, 32], strides = [1, 1]} : vector<1x128xf32> to vector<1x32xf32>
    %253 = vector.extract_strided_slice %243 {offsets = [0, 96], sizes = [1, 32], strides = [1, 1]} : vector<1x128xf32> to vector<1x32xf32>
    %254 = arith.mulf %250, %253 : vector<1x32xf32>
    %255 = arith.addf %252, %254 : vector<1x32xf32>
    %256 = math.tanh %255 : vector<1x32xf32>
    %cst_92 = arith.constant 1.000000e+00 : f32
    %257 = vector.broadcast %cst_92 : f32 to vector<1x32xf32>
    %258 = arith.subf %257, %251 : vector<1x32xf32>
    %259 = arith.mulf %258, %256 : vector<1x32xf32>
    %260 = arith.mulf %251, %195 : vector<1x32xf32>
    %261 = arith.addf %259, %260 : vector<1x32xf32>
    %262 = arith.truncf %261 : vector<1x32xf32> to vector<1x32xbf16>
    %cst_93 = arith.constant dense<0.000000e+00> : vector<1x16xf32>
    %263 = tpu.matmul %262, %10, %cst_93 {dimension_numbers = #tpu.dot_dimension_numbers<[1], [0], [0], [1], [0, 0, 1, 1], [], []>} : vector<1x32xbf16>, vector<32x16xbf16>, vector<1x16xf32> -> vector<1x16xf32>
    %264 = arith.addf %263, %11 : vector<1x16xf32>
    %cst_94 = arith.constant dense<0xFF800000> : vector<1xf32>
    %265 = vector.multi_reduction <maximumf>, %264, %cst_94 [1] : vector<1x16xf32> to vector<1xf32>
    %266 = vector.shape_cast %265 : vector<1xf32> to vector<1x1xf32>
    %267 = vector.broadcast %266 : vector<1x1xf32> to vector<1x16xf32>
    %268 = arith.subf %264, %267 : vector<1x16xf32>
    %269 = math.exp %268 : vector<1x16xf32>
    %cst_95 = arith.constant dense<0.000000e+00> : vector<1xf32>
    %270 = vector.multi_reduction <add>, %269, %cst_95 [1] : vector<1x16xf32> to vector<1xf32>
    %271 = vector.shape_cast %270 : vector<1xf32> to vector<1x1xf32>
    %272 = math.log %271 : vector<1x1xf32>
    %273 = arith.addf %272, %266 : vector<1x1xf32>
    %274 = vector.broadcast %273 : vector<1x1xf32> to vector<1x16xf32>
    %275 = arith.subf %264, %274 : vector<1x16xf32>
    %276 = tpu.concatenate %275, %261, %227, %13 in 1 : vector<1x16xf32>, vector<1x32xf32>, vector<1x10xf32>, vector<1x70xf32> -> vector<1x128xf32>
    %c3_96 = arith.constant 3 : index
    %c0_97 = arith.constant 0 : index
    %277 = vector.load %arg14[%c3_96, %c0_97] : memref<8x128xf32, #tpu.memory_space<vmem>>, vector<1x128xf32>
    tpu.vector_store %arg14[%c3_96, %c0_97], %276 {strides = array<i32>} : memref<8x128xf32, #tpu.memory_space<vmem>>, vector<1x128xf32>,
    %c4 = arith.constant 4 : index
    %c0_98 = arith.constant 0 : index
    %278 = vector.load %arg0[%c4, %c0_98] : memref<8x32xbf16, #tpu.memory_space<vmem>>, vector<1x32xbf16>
    %279 = arith.truncf %261 : vector<1x32xf32> to vector<1x32xbf16>
    %cst_99 = arith.constant dense<0.000000e+00> : vector<1x10xf32>
    %280 = tpu.matmul %278, %1, %cst_99 {dimension_numbers = #tpu.dot_dimension_numbers<[1], [0], [0], [1], [0, 0, 1, 1], [], []>} : vector<1x32xbf16>, vector<32x10xbf16>, vector<1x10xf32> -> vector<1x10xf32>
    %cst_100 = arith.constant dense<0.000000e+00> : vector<1x10xf32>
    %281 = tpu.matmul %279, %2, %cst_100 {dimension_numbers = #tpu.dot_dimension_numbers<[1], [0], [0], [1], [0, 0, 1, 1], [], []>} : vector<1x32xbf16>, vector<32x10xbf16>, vector<1x10xf32> -> vector<1x10xf32>
    %282 = arith.addf %280, %281 : vector<1x10xf32>
    %283 = arith.addf %282, %3 : vector<1x10xf32>
    %cst_101 = arith.constant dense<0xFF800000> : vector<1xf32>
    %284 = vector.multi_reduction <maximumf>, %283, %cst_101 [1] : vector<1x10xf32> to vector<1xf32>
    %285 = vector.shape_cast %284 : vector<1xf32> to vector<1x1xf32>
    %286 = vector.broadcast %285 : vector<1x1xf32> to vector<1x10xf32>
    %287 = arith.subf %283, %286 : vector<1x10xf32>
    %288 = math.exp %287 : vector<1x10xf32>
    %cst_102 = arith.constant dense<0.000000e+00> : vector<1xf32>
    %289 = vector.multi_reduction <add>, %288, %cst_102 [1] : vector<1x10xf32> to vector<1xf32>
    %290 = vector.shape_cast %289 : vector<1xf32> to vector<1x1xf32>
    %291 = tpu.reciprocal %290 {approx = true} : vector<1x1xf32> -> vector<1x1xf32>
    %292 = vector.broadcast %291 : vector<1x1xf32> to vector<1x10xf32>
    %293 = arith.mulf %288, %292 : vector<1x10xf32>
    %294 = arith.truncf %288 : vector<1x10xf32> to vector<1x10xbf16>
    %cst_103 = arith.constant dense<0.000000e+00> : vector<1x32xf32>
    %295 = tpu.matmul %294, %0, %cst_103 {dimension_numbers = #tpu.dot_dimension_numbers<[1], [0], [0], [1], [0, 0, 1, 1], [], []>} : vector<1x10xbf16>, vector<10x32xbf16>, vector<1x32xf32> -> vector<1x32xf32>
    %296 = vector.broadcast %291 : vector<1x1xf32> to vector<1x32xf32>
    %297 = arith.mulf %295, %296 : vector<1x32xf32>
    %cst_104 = arith.constant dense<0.000000e+00> : vector<1x32xf32>
    %298 = tpu.matmul %278, %4, %cst_104 {dimension_numbers = #tpu.dot_dimension_numbers<[1], [0], [0], [1], [0, 0, 1, 1], [], []>} : vector<1x32xbf16>, vector<32x32xbf16>, vector<1x32xf32> -> vector<1x32xf32>
    %299 = arith.truncf %297 : vector<1x32xf32> to vector<1x32xbf16>
    %cst_105 = arith.constant dense<0.000000e+00> : vector<1x32xf32>
    %300 = tpu.matmul %299, %5, %cst_105 {dimension_numbers = #tpu.dot_dimension_numbers<[1], [0], [0], [1], [0, 0, 1, 1], [], []>} : vector<1x32xbf16>, vector<32x32xbf16>, vector<1x32xf32> -> vector<1x32xf32>
    %301 = arith.addf %298, %300 : vector<1x32xf32>
    %302 = arith.addf %301, %6 : vector<1x32xf32>
    %cst_106 = arith.constant 0.000000e+00 : f32
    %303 = vector.broadcast %cst_106 : f32 to vector<1x32xf32>
    %304 = arith.maximumf %302, %303 : vector<1x32xf32>
    %305 = arith.truncf %304 : vector<1x32xf32> to vector<1x32xbf16>
    %cst_107 = arith.constant dense<0.000000e+00> : vector<1x128xf32>
    %306 = tpu.matmul %305, %7, %cst_107 {dimension_numbers = #tpu.dot_dimension_numbers<[1], [0], [0], [1], [0, 0, 1, 1], [], []>} : vector<1x32xbf16>, vector<32x128xbf16>, vector<1x128xf32> -> vector<1x128xf32>
    %cst_108 = arith.constant dense<0.000000e+00> : vector<1x128xf32>
    %307 = tpu.matmul %279, %8, %cst_108 {dimension_numbers = #tpu.dot_dimension_numbers<[1], [0], [0], [1], [0, 0, 1, 1], [], []>} : vector<1x32xbf16>, vector<32x128xbf16>, vector<1x128xf32> -> vector<1x128xf32>
    %308 = arith.addf %306, %307 : vector<1x128xf32>
    %309 = arith.addf %308, %9 : vector<1x128xf32>
    %310 = vector.extract_strided_slice %309 {offsets = [0, 0], sizes = [1, 64], strides = [1, 1]} : vector<1x128xf32> to vector<1x64xf32>
    %311 = arith.negf %310 : vector<1x64xf32>
    %312 = math.exp %311 : vector<1x64xf32>
    %cst_109 = arith.constant 1.000000e+00 : f32
    %313 = vector.broadcast %cst_109 : f32 to vector<1x64xf32>
    %314 = arith.addf %313, %312 : vector<1x64xf32>
    %315 = arith.divf %313, %314 : vector<1x64xf32>
    %316 = vector.extract_strided_slice %315 {offsets = [0, 0], sizes = [1, 32], strides = [1, 1]} : vector<1x64xf32> to vector<1x32xf32>
    %317 = vector.extract_strided_slice %315 {offsets = [0, 32], sizes = [1, 32], strides = [1, 1]} : vector<1x64xf32> to vector<1x32xf32>
    %318 = vector.extract_strided_slice %309 {offsets = [0, 64], sizes = [1, 32], strides = [1, 1]} : vector<1x128xf32> to vector<1x32xf32>
    %319 = vector.extract_strided_slice %309 {offsets = [0, 96], sizes = [1, 32], strides = [1, 1]} : vector<1x128xf32> to vector<1x32xf32>
    %320 = arith.mulf %316, %319 : vector<1x32xf32>
    %321 = arith.addf %318, %320 : vector<1x32xf32>
    %322 = math.tanh %321 : vector<1x32xf32>
    %cst_110 = arith.constant 1.000000e+00 : f32
    %323 = vector.broadcast %cst_110 : f32 to vector<1x32xf32>
    %324 = arith.subf %323, %317 : vector<1x32xf32>
    %325 = arith.mulf %324, %322 : vector<1x32xf32>
    %326 = arith.mulf %317, %261 : vector<1x32xf32>
    %327 = arith.addf %325, %326 : vector<1x32xf32>
    %328 = arith.truncf %327 : vector<1x32xf32> to vector<1x32xbf16>
    %cst_111 = arith.constant dense<0.000000e+00> : vector<1x16xf32>
    %329 = tpu.matmul %328, %10, %cst_111 {dimension_numbers = #tpu.dot_dimension_numbers<[1], [0], [0], [1], [0, 0, 1, 1], [], []>} : vector<1x32xbf16>, vector<32x16xbf16>, vector<1x16xf32> -> vector<1x16xf32>
    %330 = arith.addf %329, %11 : vector<1x16xf32>
    %cst_112 = arith.constant dense<0xFF800000> : vector<1xf32>
    %331 = vector.multi_reduction <maximumf>, %330, %cst_112 [1] : vector<1x16xf32> to vector<1xf32>
    %332 = vector.shape_cast %331 : vector<1xf32> to vector<1x1xf32>
    %333 = vector.broadcast %332 : vector<1x1xf32> to vector<1x16xf32>
    %334 = arith.subf %330, %333 : vector<1x16xf32>
    %335 = math.exp %334 : vector<1x16xf32>
    %cst_113 = arith.constant dense<0.000000e+00> : vector<1xf32>
    %336 = vector.multi_reduction <add>, %335, %cst_113 [1] : vector<1x16xf32> to vector<1xf32>
    %337 = vector.shape_cast %336 : vector<1xf32> to vector<1x1xf32>
    %338 = math.log %337 : vector<1x1xf32>
    %339 = arith.addf %338, %332 : vector<1x1xf32>
    %340 = vector.broadcast %339 : vector<1x1xf32> to vector<1x16xf32>
    %341 = arith.subf %330, %340 : vector<1x16xf32>
    %342 = tpu.concatenate %341, %327, %293, %13 in 1 : vector<1x16xf32>, vector<1x32xf32>, vector<1x10xf32>, vector<1x70xf32> -> vector<1x128xf32>
    %c4_114 = arith.constant 4 : index
    %c0_115 = arith.constant 0 : index
    %343 = vector.load %arg14[%c4_114, %c0_115] : memref<8x128xf32, #tpu.memory_space<vmem>>, vector<1x128xf32>
    tpu.vector_store %arg14[%c4_114, %c0_115], %342 {strides = array<i32>} : memref<8x128xf32, #tpu.memory_space<vmem>>, vector<1x128xf32>,
    %c5 = arith.constant 5 : index
    %c0_116 = arith.constant 0 : index
    %344 = vector.load %arg0[%c5, %c0_116] : memref<8x32xbf16, #tpu.memory_space<vmem>>, vector<1x32xbf16>
    %345 = arith.truncf %327 : vector<1x32xf32> to vector<1x32xbf16>
    %cst_117 = arith.constant dense<0.000000e+00> : vector<1x10xf32>
    %346 = tpu.matmul %344, %1, %cst_117 {dimension_numbers = #tpu.dot_dimension_numbers<[1], [0], [0], [1], [0, 0, 1, 1], [], []>} : vector<1x32xbf16>, vector<32x10xbf16>, vector<1x10xf32> -> vector<1x10xf32>
    %cst_118 = arith.constant dense<0.000000e+00> : vector<1x10xf32>
    %347 = tpu.matmul %345, %2, %cst_118 {dimension_numbers = #tpu.dot_dimension_numbers<[1], [0], [0], [1], [0, 0, 1, 1], [], []>} : vector<1x32xbf16>, vector<32x10xbf16>, vector<1x10xf32> -> vector<1x10xf32>
    %348 = arith.addf %346, %347 : vector<1x10xf32>
    %349 = arith.addf %348, %3 : vector<1x10xf32>
    %cst_119 = arith.constant dense<0xFF800000> : vector<1xf32>
    %350 = vector.multi_reduction <maximumf>, %349, %cst_119 [1] : vector<1x10xf32> to vector<1xf32>
    %351 = vector.shape_cast %350 : vector<1xf32> to vector<1x1xf32>
    %352 = vector.broadcast %351 : vector<1x1xf32> to vector<1x10xf32>
    %353 = arith.subf %349, %352 : vector<1x10xf32>
    %354 = math.exp %353 : vector<1x10xf32>
    %cst_120 = arith.constant dense<0.000000e+00> : vector<1xf32>
    %355 = vector.multi_reduction <add>, %354, %cst_120 [1] : vector<1x10xf32> to vector<1xf32>
    %356 = vector.shape_cast %355 : vector<1xf32> to vector<1x1xf32>
    %357 = tpu.reciprocal %356 {approx = true} : vector<1x1xf32> -> vector<1x1xf32>
    %358 = vector.broadcast %357 : vector<1x1xf32> to vector<1x10xf32>
    %359 = arith.mulf %354, %358 : vector<1x10xf32>
    %360 = arith.truncf %354 : vector<1x10xf32> to vector<1x10xbf16>
    %cst_121 = arith.constant dense<0.000000e+00> : vector<1x32xf32>
    %361 = tpu.matmul %360, %0, %cst_121 {dimension_numbers = #tpu.dot_dimension_numbers<[1], [0], [0], [1], [0, 0, 1, 1], [], []>} : vector<1x10xbf16>, vector<10x32xbf16>, vector<1x32xf32> -> vector<1x32xf32>
    %362 = vector.broadcast %357 : vector<1x1xf32> to vector<1x32xf32>
    %363 = arith.mulf %361, %362 : vector<1x32xf32>
    %cst_122 = arith.constant dense<0.000000e+00> : vector<1x32xf32>
    %364 = tpu.matmul %344, %4, %cst_122 {dimension_numbers = #tpu.dot_dimension_numbers<[1], [0], [0], [1], [0, 0, 1, 1], [], []>} : vector<1x32xbf16>, vector<32x32xbf16>, vector<1x32xf32> -> vector<1x32xf32>
    %365 = arith.truncf %363 : vector<1x32xf32> to vector<1x32xbf16>
    %cst_123 = arith.constant dense<0.000000e+00> : vector<1x32xf32>
    %366 = tpu.matmul %365, %5, %cst_123 {dimension_numbers = #tpu.dot_dimension_numbers<[1], [0], [0], [1], [0, 0, 1, 1], [], []>} : vector<1x32xbf16>, vector<32x32xbf16>, vector<1x32xf32> -> vector<1x32xf32>
    %367 = arith.addf %364, %366 : vector<1x32xf32>
    %368 = arith.addf %367, %6 : vector<1x32xf32>
    %cst_124 = arith.constant 0.000000e+00 : f32
    %369 = vector.broadcast %cst_124 : f32 to vector<1x32xf32>
    %370 = arith.maximumf %368, %369 : vector<1x32xf32>
    %371 = arith.truncf %370 : vector<1x32xf32> to vector<1x32xbf16>
    %cst_125 = arith.constant dense<0.000000e+00> : vector<1x128xf32>
    %372 = tpu.matmul %371, %7, %cst_125 {dimension_numbers = #tpu.dot_dimension_numbers<[1], [0], [0], [1], [0, 0, 1, 1], [], []>} : vector<1x32xbf16>, vector<32x128xbf16>, vector<1x128xf32> -> vector<1x128xf32>
    %cst_126 = arith.constant dense<0.000000e+00> : vector<1x128xf32>
    %373 = tpu.matmul %345, %8, %cst_126 {dimension_numbers = #tpu.dot_dimension_numbers<[1], [0], [0], [1], [0, 0, 1, 1], [], []>} : vector<1x32xbf16>, vector<32x128xbf16>, vector<1x128xf32> -> vector<1x128xf32>
    %374 = arith.addf %372, %373 : vector<1x128xf32>
    %375 = arith.addf %374, %9 : vector<1x128xf32>
    %376 = vector.extract_strided_slice %375 {offsets = [0, 0], sizes = [1, 64], strides = [1, 1]} : vector<1x128xf32> to vector<1x64xf32>
    %377 = arith.negf %376 : vector<1x64xf32>
    %378 = math.exp %377 : vector<1x64xf32>
    %cst_127 = arith.constant 1.000000e+00 : f32
    %379 = vector.broadcast %cst_127 : f32 to vector<1x64xf32>
    %380 = arith.addf %379, %378 : vector<1x64xf32>
    %381 = arith.divf %379, %380 : vector<1x64xf32>
    %382 = vector.extract_strided_slice %381 {offsets = [0, 0], sizes = [1, 32], strides = [1, 1]} : vector<1x64xf32> to vector<1x32xf32>
    %383 = vector.extract_strided_slice %381 {offsets = [0, 32], sizes = [1, 32], strides = [1, 1]} : vector<1x64xf32> to vector<1x32xf32>
    %384 = vector.extract_strided_slice %375 {offsets = [0, 64], sizes = [1, 32], strides = [1, 1]} : vector<1x128xf32> to vector<1x32xf32>
    %385 = vector.extract_strided_slice %375 {offsets = [0, 96], sizes = [1, 32], strides = [1, 1]} : vector<1x128xf32> to vector<1x32xf32>
    %386 = arith.mulf %382, %385 : vector<1x32xf32>
    %387 = arith.addf %384, %386 : vector<1x32xf32>
    %388 = math.tanh %387 : vector<1x32xf32>
    %cst_128 = arith.constant 1.000000e+00 : f32
    %389 = vector.broadcast %cst_128 : f32 to vector<1x32xf32>
    %390 = arith.subf %389, %383 : vector<1x32xf32>
    %391 = arith.mulf %390, %388 : vector<1x32xf32>
    %392 = arith.mulf %383, %327 : vector<1x32xf32>
    %393 = arith.addf %391, %392 : vector<1x32xf32>
    %394 = arith.truncf %393 : vector<1x32xf32> to vector<1x32xbf16>
    %cst_129 = arith.constant dense<0.000000e+00> : vector<1x16xf32>
    %395 = tpu.matmul %394, %10, %cst_129 {dimension_numbers = #tpu.dot_dimension_numbers<[1], [0], [0], [1], [0, 0, 1, 1], [], []>} : vector<1x32xbf16>, vector<32x16xbf16>, vector<1x16xf32> -> vector<1x16xf32>
    %396 = arith.addf %395, %11 : vector<1x16xf32>
    %cst_130 = arith.constant dense<0xFF800000> : vector<1xf32>
    %397 = vector.multi_reduction <maximumf>, %396, %cst_130 [1] : vector<1x16xf32> to vector<1xf32>
    %398 = vector.shape_cast %397 : vector<1xf32> to vector<1x1xf32>
    %399 = vector.broadcast %398 : vector<1x1xf32> to vector<1x16xf32>
    %400 = arith.subf %396, %399 : vector<1x16xf32>
    %401 = math.exp %400 : vector<1x16xf32>
    %cst_131 = arith.constant dense<0.000000e+00> : vector<1xf32>
    %402 = vector.multi_reduction <add>, %401, %cst_131 [1] : vector<1x16xf32> to vector<1xf32>
    %403 = vector.shape_cast %402 : vector<1xf32> to vector<1x1xf32>
    %404 = math.log %403 : vector<1x1xf32>
    %405 = arith.addf %404, %398 : vector<1x1xf32>
    %406 = vector.broadcast %405 : vector<1x1xf32> to vector<1x16xf32>
    %407 = arith.subf %396, %406 : vector<1x16xf32>
    %408 = tpu.concatenate %407, %393, %359, %13 in 1 : vector<1x16xf32>, vector<1x32xf32>, vector<1x10xf32>, vector<1x70xf32> -> vector<1x128xf32>
    %c5_132 = arith.constant 5 : index
    %c0_133 = arith.constant 0 : index
    %409 = vector.load %arg14[%c5_132, %c0_133] : memref<8x128xf32, #tpu.memory_space<vmem>>, vector<1x128xf32>
    tpu.vector_store %arg14[%c5_132, %c0_133], %408 {strides = array<i32>} : memref<8x128xf32, #tpu.memory_space<vmem>>, vector<1x128xf32>,
    %c6 = arith.constant 6 : index
    %c0_134 = arith.constant 0 : index
    %410 = vector.load %arg0[%c6, %c0_134] : memref<8x32xbf16, #tpu.memory_space<vmem>>, vector<1x32xbf16>
    %411 = arith.truncf %393 : vector<1x32xf32> to vector<1x32xbf16>
    %cst_135 = arith.constant dense<0.000000e+00> : vector<1x10xf32>
    %412 = tpu.matmul %410, %1, %cst_135 {dimension_numbers = #tpu.dot_dimension_numbers<[1], [0], [0], [1], [0, 0, 1, 1], [], []>} : vector<1x32xbf16>, vector<32x10xbf16>, vector<1x10xf32> -> vector<1x10xf32>
    %cst_136 = arith.constant dense<0.000000e+00> : vector<1x10xf32>
    %413 = tpu.matmul %411, %2, %cst_136 {dimension_numbers = #tpu.dot_dimension_numbers<[1], [0], [0], [1], [0, 0, 1, 1], [], []>} : vector<1x32xbf16>, vector<32x10xbf16>, vector<1x10xf32> -> vector<1x10xf32>
    %414 = arith.addf %412, %413 : vector<1x10xf32>
    %415 = arith.addf %414, %3 : vector<1x10xf32>
    %cst_137 = arith.constant dense<0xFF800000> : vector<1xf32>
    %416 = vector.multi_reduction <maximumf>, %415, %cst_137 [1] : vector<1x10xf32> to vector<1xf32>
    %417 = vector.shape_cast %416 : vector<1xf32> to vector<1x1xf32>
    %418 = vector.broadcast %417 : vector<1x1xf32> to vector<1x10xf32>
    %419 = arith.subf %415, %418 : vector<1x10xf32>
    %420 = math.exp %419 : vector<1x10xf32>
    %cst_138 = arith.constant dense<0.000000e+00> : vector<1xf32>
    %421 = vector.multi_reduction <add>, %420, %cst_138 [1] : vector<1x10xf32> to vector<1xf32>
    %422 = vector.shape_cast %421 : vector<1xf32> to vector<1x1xf32>
    %423 = tpu.reciprocal %422 {approx = true} : vector<1x1xf32> -> vector<1x1xf32>
    %424 = vector.broadcast %423 : vector<1x1xf32> to vector<1x10xf32>
    %425 = arith.mulf %420, %424 : vector<1x10xf32>
    %426 = arith.truncf %420 : vector<1x10xf32> to vector<1x10xbf16>
    %cst_139 = arith.constant dense<0.000000e+00> : vector<1x32xf32>
    %427 = tpu.matmul %426, %0, %cst_139 {dimension_numbers = #tpu.dot_dimension_numbers<[1], [0], [0], [1], [0, 0, 1, 1], [], []>} : vector<1x10xbf16>, vector<10x32xbf16>, vector<1x32xf32> -> vector<1x32xf32>
    %428 = vector.broadcast %423 : vector<1x1xf32> to vector<1x32xf32>
    %429 = arith.mulf %427, %428 : vector<1x32xf32>
    %cst_140 = arith.constant dense<0.000000e+00> : vector<1x32xf32>
    %430 = tpu.matmul %410, %4, %cst_140 {dimension_numbers = #tpu.dot_dimension_numbers<[1], [0], [0], [1], [0, 0, 1, 1], [], []>} : vector<1x32xbf16>, vector<32x32xbf16>, vector<1x32xf32> -> vector<1x32xf32>
    %431 = arith.truncf %429 : vector<1x32xf32> to vector<1x32xbf16>
    %cst_141 = arith.constant dense<0.000000e+00> : vector<1x32xf32>
    %432 = tpu.matmul %431, %5, %cst_141 {dimension_numbers = #tpu.dot_dimension_numbers<[1], [0], [0], [1], [0, 0, 1, 1], [], []>} : vector<1x32xbf16>, vector<32x32xbf16>, vector<1x32xf32> -> vector<1x32xf32>
    %433 = arith.addf %430, %432 : vector<1x32xf32>
    %434 = arith.addf %433, %6 : vector<1x32xf32>
    %cst_142 = arith.constant 0.000000e+00 : f32
    %435 = vector.broadcast %cst_142 : f32 to vector<1x32xf32>
    %436 = arith.maximumf %434, %435 : vector<1x32xf32>
    %437 = arith.truncf %436 : vector<1x32xf32> to vector<1x32xbf16>
    %cst_143 = arith.constant dense<0.000000e+00> : vector<1x128xf32>
    %438 = tpu.matmul %437, %7, %cst_143 {dimension_numbers = #tpu.dot_dimension_numbers<[1], [0], [0], [1], [0, 0, 1, 1], [], []>} : vector<1x32xbf16>, vector<32x128xbf16>, vector<1x128xf32> -> vector<1x128xf32>
    %cst_144 = arith.constant dense<0.000000e+00> : vector<1x128xf32>
    %439 = tpu.matmul %411, %8, %cst_144 {dimension_numbers = #tpu.dot_dimension_numbers<[1], [0], [0], [1], [0, 0, 1, 1], [], []>} : vector<1x32xbf16>, vector<32x128xbf16>, vector<1x128xf32> -> vector<1x128xf32>
    %440 = arith.addf %438, %439 : vector<1x128xf32>
    %441 = arith.addf %440, %9 : vector<1x128xf32>
    %442 = vector.extract_strided_slice %441 {offsets = [0, 0], sizes = [1, 64], strides = [1, 1]} : vector<1x128xf32> to vector<1x64xf32>
    %443 = arith.negf %442 : vector<1x64xf32>
    %444 = math.exp %443 : vector<1x64xf32>
    %cst_145 = arith.constant 1.000000e+00 : f32
    %445 = vector.broadcast %cst_145 : f32 to vector<1x64xf32>
    %446 = arith.addf %445, %444 : vector<1x64xf32>
    %447 = arith.divf %445, %446 : vector<1x64xf32>
    %448 = vector.extract_strided_slice %447 {offsets = [0, 0], sizes = [1, 32], strides = [1, 1]} : vector<1x64xf32> to vector<1x32xf32>
    %449 = vector.extract_strided_slice %447 {offsets = [0, 32], sizes = [1, 32], strides = [1, 1]} : vector<1x64xf32> to vector<1x32xf32>
    %450 = vector.extract_strided_slice %441 {offsets = [0, 64], sizes = [1, 32], strides = [1, 1]} : vector<1x128xf32> to vector<1x32xf32>
    %451 = vector.extract_strided_slice %441 {offsets = [0, 96], sizes = [1, 32], strides = [1, 1]} : vector<1x128xf32> to vector<1x32xf32>
    %452 = arith.mulf %448, %451 : vector<1x32xf32>
    %453 = arith.addf %450, %452 : vector<1x32xf32>
    %454 = math.tanh %453 : vector<1x32xf32>
    %cst_146 = arith.constant 1.000000e+00 : f32
    %455 = vector.broadcast %cst_146 : f32 to vector<1x32xf32>
    %456 = arith.subf %455, %449 : vector<1x32xf32>
    %457 = arith.mulf %456, %454 : vector<1x32xf32>
    %458 = arith.mulf %449, %393 : vector<1x32xf32>
    %459 = arith.addf %457, %458 : vector<1x32xf32>
    %460 = arith.truncf %459 : vector<1x32xf32> to vector<1x32xbf16>
    %cst_147 = arith.constant dense<0.000000e+00> : vector<1x16xf32>
    %461 = tpu.matmul %460, %10, %cst_147 {dimension_numbers = #tpu.dot_dimension_numbers<[1], [0], [0], [1], [0, 0, 1, 1], [], []>} : vector<1x32xbf16>, vector<32x16xbf16>, vector<1x16xf32> -> vector<1x16xf32>
    %462 = arith.addf %461, %11 : vector<1x16xf32>
    %cst_148 = arith.constant dense<0xFF800000> : vector<1xf32>
    %463 = vector.multi_reduction <maximumf>, %462, %cst_148 [1] : vector<1x16xf32> to vector<1xf32>
    %464 = vector.shape_cast %463 : vector<1xf32> to vector<1x1xf32>
    %465 = vector.broadcast %464 : vector<1x1xf32> to vector<1x16xf32>
    %466 = arith.subf %462, %465 : vector<1x16xf32>
    %467 = math.exp %466 : vector<1x16xf32>
    %cst_149 = arith.constant dense<0.000000e+00> : vector<1xf32>
    %468 = vector.multi_reduction <add>, %467, %cst_149 [1] : vector<1x16xf32> to vector<1xf32>
    %469 = vector.shape_cast %468 : vector<1xf32> to vector<1x1xf32>
    %470 = math.log %469 : vector<1x1xf32>
    %471 = arith.addf %470, %464 : vector<1x1xf32>
    %472 = vector.broadcast %471 : vector<1x1xf32> to vector<1x16xf32>
    %473 = arith.subf %462, %472 : vector<1x16xf32>
    %474 = tpu.concatenate %473, %459, %425, %13 in 1 : vector<1x16xf32>, vector<1x32xf32>, vector<1x10xf32>, vector<1x70xf32> -> vector<1x128xf32>
    %c6_150 = arith.constant 6 : index
    %c0_151 = arith.constant 0 : index
    %475 = vector.load %arg14[%c6_150, %c0_151] : memref<8x128xf32, #tpu.memory_space<vmem>>, vector<1x128xf32>
    tpu.vector_store %arg14[%c6_150, %c0_151], %474 {strides = array<i32>} : memref<8x128xf32, #tpu.memory_space<vmem>>, vector<1x128xf32>,
    %c7 = arith.constant 7 : index
    %c0_152 = arith.constant 0 : index
    %476 = vector.load %arg0[%c7, %c0_152] : memref<8x32xbf16, #tpu.memory_space<vmem>>, vector<1x32xbf16>
    %477 = arith.truncf %459 : vector<1x32xf32> to vector<1x32xbf16>
    %cst_153 = arith.constant dense<0.000000e+00> : vector<1x10xf32>
    %478 = tpu.matmul %476, %1, %cst_153 {dimension_numbers = #tpu.dot_dimension_numbers<[1], [0], [0], [1], [0, 0, 1, 1], [], []>} : vector<1x32xbf16>, vector<32x10xbf16>, vector<1x10xf32> -> vector<1x10xf32>
    %cst_154 = arith.constant dense<0.000000e+00> : vector<1x10xf32>
    %479 = tpu.matmul %477, %2, %cst_154 {dimension_numbers = #tpu.dot_dimension_numbers<[1], [0], [0], [1], [0, 0, 1, 1], [], []>} : vector<1x32xbf16>, vector<32x10xbf16>, vector<1x10xf32> -> vector<1x10xf32>
    %480 = arith.addf %478, %479 : vector<1x10xf32>
    %481 = arith.addf %480, %3 : vector<1x10xf32>
    %cst_155 = arith.constant dense<0xFF800000> : vector<1xf32>
    %482 = vector.multi_reduction <maximumf>, %481, %cst_155 [1] : vector<1x10xf32> to vector<1xf32>
    %483 = vector.shape_cast %482 : vector<1xf32> to vector<1x1xf32>
    %484 = vector.broadcast %483 : vector<1x1xf32> to vector<1x10xf32>
    %485 = arith.subf %481, %484 : vector<1x10xf32>
    %486 = math.exp %485 : vector<1x10xf32>
    %cst_156 = arith.constant dense<0.000000e+00> : vector<1xf32>
    %487 = vector.multi_reduction <add>, %486, %cst_156 [1] : vector<1x10xf32> to vector<1xf32>
    %488 = vector.shape_cast %487 : vector<1xf32> to vector<1x1xf32>
    %489 = tpu.reciprocal %488 {approx = true} : vector<1x1xf32> -> vector<1x1xf32>
    %490 = vector.broadcast %489 : vector<1x1xf32> to vector<1x10xf32>
    %491 = arith.mulf %486, %490 : vector<1x10xf32>
    %492 = arith.truncf %486 : vector<1x10xf32> to vector<1x10xbf16>
    %cst_157 = arith.constant dense<0.000000e+00> : vector<1x32xf32>
    %493 = tpu.matmul %492, %0, %cst_157 {dimension_numbers = #tpu.dot_dimension_numbers<[1], [0], [0], [1], [0, 0, 1, 1], [], []>} : vector<1x10xbf16>, vector<10x32xbf16>, vector<1x32xf32> -> vector<1x32xf32>
    %494 = vector.broadcast %489 : vector<1x1xf32> to vector<1x32xf32>
    %495 = arith.mulf %493, %494 : vector<1x32xf32>
    %cst_158 = arith.constant dense<0.000000e+00> : vector<1x32xf32>
    %496 = tpu.matmul %476, %4, %cst_158 {dimension_numbers = #tpu.dot_dimension_numbers<[1], [0], [0], [1], [0, 0, 1, 1], [], []>} : vector<1x32xbf16>, vector<32x32xbf16>, vector<1x32xf32> -> vector<1x32xf32>
    %497 = arith.truncf %495 : vector<1x32xf32> to vector<1x32xbf16>
    %cst_159 = arith.constant dense<0.000000e+00> : vector<1x32xf32>
    %498 = tpu.matmul %497, %5, %cst_159 {dimension_numbers = #tpu.dot_dimension_numbers<[1], [0], [0], [1], [0, 0, 1, 1], [], []>} : vector<1x32xbf16>, vector<32x32xbf16>, vector<1x32xf32> -> vector<1x32xf32>
    %499 = arith.addf %496, %498 : vector<1x32xf32>
    %500 = arith.addf %499, %6 : vector<1x32xf32>
    %cst_160 = arith.constant 0.000000e+00 : f32
    %501 = vector.broadcast %cst_160 : f32 to vector<1x32xf32>
    %502 = arith.maximumf %500, %501 : vector<1x32xf32>
    %503 = arith.truncf %502 : vector<1x32xf32> to vector<1x32xbf16>
    %cst_161 = arith.constant dense<0.000000e+00> : vector<1x128xf32>
    %504 = tpu.matmul %503, %7, %cst_161 {dimension_numbers = #tpu.dot_dimension_numbers<[1], [0], [0], [1], [0, 0, 1, 1], [], []>} : vector<1x32xbf16>, vector<32x128xbf16>, vector<1x128xf32> -> vector<1x128xf32>
    %cst_162 = arith.constant dense<0.000000e+00> : vector<1x128xf32>
    %505 = tpu.matmul %477, %8, %cst_162 {dimension_numbers = #tpu.dot_dimension_numbers<[1], [0], [0], [1], [0, 0, 1, 1], [], []>} : vector<1x32xbf16>, vector<32x128xbf16>, vector<1x128xf32> -> vector<1x128xf32>
    %506 = arith.addf %504, %505 : vector<1x128xf32>
    %507 = arith.addf %506, %9 : vector<1x128xf32>
    %508 = vector.extract_strided_slice %507 {offsets = [0, 0], sizes = [1, 64], strides = [1, 1]} : vector<1x128xf32> to vector<1x64xf32>
    %509 = arith.negf %508 : vector<1x64xf32>
    %510 = math.exp %509 : vector<1x64xf32>
    %cst_163 = arith.constant 1.000000e+00 : f32
    %511 = vector.broadcast %cst_163 : f32 to vector<1x64xf32>
    %512 = arith.addf %511, %510 : vector<1x64xf32>
    %513 = arith.divf %511, %512 : vector<1x64xf32>
    %514 = vector.extract_strided_slice %513 {offsets = [0, 0], sizes = [1, 32], strides = [1, 1]} : vector<1x64xf32> to vector<1x32xf32>
    %515 = vector.extract_strided_slice %513 {offsets = [0, 32], sizes = [1, 32], strides = [1, 1]} : vector<1x64xf32> to vector<1x32xf32>
    %516 = vector.extract_strided_slice %507 {offsets = [0, 64], sizes = [1, 32], strides = [1, 1]} : vector<1x128xf32> to vector<1x32xf32>
    %517 = vector.extract_strided_slice %507 {offsets = [0, 96], sizes = [1, 32], strides = [1, 1]} : vector<1x128xf32> to vector<1x32xf32>
    %518 = arith.mulf %514, %517 : vector<1x32xf32>
    %519 = arith.addf %516, %518 : vector<1x32xf32>
    %520 = math.tanh %519 : vector<1x32xf32>
    %cst_164 = arith.constant 1.000000e+00 : f32
    %521 = vector.broadcast %cst_164 : f32 to vector<1x32xf32>
    %522 = arith.subf %521, %515 : vector<1x32xf32>
    %523 = arith.mulf %522, %520 : vector<1x32xf32>
    %524 = arith.mulf %515, %459 : vector<1x32xf32>
    %525 = arith.addf %523, %524 : vector<1x32xf32>
    %526 = arith.truncf %525 : vector<1x32xf32> to vector<1x32xbf16>
    %cst_165 = arith.constant dense<0.000000e+00> : vector<1x16xf32>
    %527 = tpu.matmul %526, %10, %cst_165 {dimension_numbers = #tpu.dot_dimension_numbers<[1], [0], [0], [1], [0, 0, 1, 1], [], []>} : vector<1x32xbf16>, vector<32x16xbf16>, vector<1x16xf32> -> vector<1x16xf32>
    %528 = arith.addf %527, %11 : vector<1x16xf32>
    %cst_166 = arith.constant dense<0xFF800000> : vector<1xf32>
    %529 = vector.multi_reduction <maximumf>, %528, %cst_166 [1] : vector<1x16xf32> to vector<1xf32>
    %530 = vector.shape_cast %529 : vector<1xf32> to vector<1x1xf32>
    %531 = vector.broadcast %530 : vector<1x1xf32> to vector<1x16xf32>
    %532 = arith.subf %528, %531 : vector<1x16xf32>
    %533 = math.exp %532 : vector<1x16xf32>
    %cst_167 = arith.constant dense<0.000000e+00> : vector<1xf32>
    %534 = vector.multi_reduction <add>, %533, %cst_167 [1] : vector<1x16xf32> to vector<1xf32>
    %535 = vector.shape_cast %534 : vector<1xf32> to vector<1x1xf32>
    %536 = math.log %535 : vector<1x1xf32>
    %537 = arith.addf %536, %530 : vector<1x1xf32>
    %538 = vector.broadcast %537 : vector<1x1xf32> to vector<1x16xf32>
    %539 = arith.subf %528, %538 : vector<1x16xf32>
    %540 = tpu.concatenate %539, %525, %491, %13 in 1 : vector<1x16xf32>, vector<1x32xf32>, vector<1x10xf32>, vector<1x70xf32> -> vector<1x128xf32>
    %c7_168 = arith.constant 7 : index
    %c0_169 = arith.constant 0 : index
    %541 = vector.load %arg14[%c7_168, %c0_169] : memref<8x128xf32, #tpu.memory_space<vmem>>, vector<1x128xf32>
    tpu.vector_store %arg14[%c7_168, %c0_169], %540 {strides = array<i32>} : memref<8x128xf32, #tpu.memory_space<vmem>>, vector<1x128xf32>,
    return
  }
}

</mosaic_0001>

<llo_original>
// kernel: tpu_custom_call.1
$region0: #{tpu_custom_call.1}
  #allocation0 [shape = 'u32[]', space=smem, size = 0x4, offset = 0x4, fixed_abs, tag = 'smem constant byte address 0x4 - core index']
  #allocation1 [shape = 'u32[144,128]{1,0:T(1,128)}', space=vmem, size = 0x12000, scoped, tag = 'internal scratch']
  %s0 = inlined_call_operand.hbm [shape: bf16[8,32], index: 0, kind: input, shape index: {}]
  %s1 = inlined_call_operand.vmem [shape: f32[1,32], index: 1, kind: input, shape index: {}]
  %s2 = inlined_call_operand.hbm [shape: bf16[10,32], index: 2, kind: input, shape index: {}]
  %s3 = inlined_call_operand.vmem [shape: bf16[32,10], index: 3, kind: input, shape index: {}]
  %s4 = inlined_call_operand.vmem [shape: bf16[32,10], index: 4, kind: input, shape index: {}]
  %s5 = inlined_call_operand.vmem [shape: f32[1,10], index: 5, kind: input, shape index: {}]
  %s6 = inlined_call_operand.vmem [shape: bf16[32,32], index: 6, kind: input, shape index: {}]
  %s7 = inlined_call_operand.vmem [shape: bf16[32,32], index: 7, kind: input, shape index: {}]
  %s8 = inlined_call_operand.vmem [shape: f32[1,32], index: 8, kind: input, shape index: {}]
  %s9 = inlined_call_operand.vmem [shape: bf16[32,128], index: 9, kind: input, shape index: {}]
  %s10 = inlined_call_operand.vmem [shape: bf16[32,128], index: 10, kind: input, shape index: {}]
  %s11 = inlined_call_operand.vmem [shape: f32[1,128], index: 11, kind: input, shape index: {}]
  %s12 = inlined_call_operand.vmem [shape: bf16[32,16], index: 12, kind: input, shape index: {}]
  %s13 = inlined_call_operand.vmem [shape: f32[1,16], index: 13, kind: input, shape index: {}]
  %s14 = inlined_call_operand.hbm [shape: f32[8,128], index: 14, kind: output, shape index: {}]
  %s15 = sld [smem:[#allocation0]]
  $region74: #{tpu_custom_call.1} parent=0
    _
  %s17 = ssub.s32 1, %s15
  %s18 = scalar_select 0, %s17, %s15
  $region1: #{tpu_custom_call.1} parent=0
    #allocation2 [shape = 'u8[2048]{0}', space=vmem, size = 0x800, scoped, tag = 'input window, operand 0, single buffered']
    #allocation3 [shape = 's32[1]{0}', space=sflag, size = 0x4, scoped, tag = 'scoped memory for tpu_custom_call.1']
    #allocation4 [shape = 's32[1]{0}', space=sflag, size = 0x4, scoped, tag = 'scoped memory for tpu_custom_call.1']
    #allocation5 [shape = 'u8[4096]{0}', space=vmem, size = 0x1000, scoped, tag = 'input window, operand 2, single buffered']
    #allocation6 [shape = 's32[1]{0}', space=sflag, size = 0x4, scoped, tag = 'scoped memory for tpu_custom_call.1']
    #allocation7 [shape = 'u8[4096]{0}', space=vmem, size = 0x1000, scoped, tag = 'output window, operand 0, single buffered']
    %19 = vsyncpa [#allocation3], 0
    %20 = vsyncpa [#allocation6], 0
    %21 = vsyncpa [#allocation4], 0
    // Predicated region
    $region2: #{tpu_custom_call.1} parent=1 // pred_check
      _
    $region3: #{tpu_custom_call.1} parent=1 // pred_check_branch
      %23 = sbr.rel (0) target = $region5
    $region4: #{tpu_custom_call.1} parent=1 // pred_region
      %s25 = ssub.s32 64, 64
      %26 = vsyncadd [#allocation3], %s25
      %s28 = sshll.u32 [#allocation2], 4
      %s29 = int_to_ptr.vmem [resolvable:$true] %s28
      %31 = dma.hbm_to_vmem [thread:$0]  %s0, 64, %s29, [#allocation3]
    $region5: #{tpu_custom_call.1} parent=1 // pred_fallthru
      _
    // Predicated region
    $region6: #{tpu_custom_call.1} parent=1 // pred_check
      _
    $region7: #{tpu_custom_call.1} parent=1 // pred_check_branch
      %33 = sbr.rel (0) target = $region9
    $region8: #{tpu_custom_call.1} parent=1 // pred_region
      _
    $region9: #{tpu_custom_call.1} parent=1 // pred_fallthru
      _
    // Predicated region
    $region10: #{tpu_custom_call.1} parent=1 // pred_check
      _
    $region11: #{tpu_custom_call.1} parent=1 // pred_check_branch
      %35 = sbr.rel (0) target = $region13
    $region12: #{tpu_custom_call.1} parent=1 // pred_region
      %s37 = ssub.s32 128, 128
      %38 = vsyncadd [#allocation6], %s37
      %s39 = sshll.u32 [#allocation5], 4
      %s40 = int_to_ptr.vmem [resolvable:$true] %s39
      %45 = dma.hbm_to_vmem [thread:$0]  %s2, 128, %s40, [#allocation6], 64, 64, 4
    $region13: #{tpu_custom_call.1} parent=1 // pred_fallthru
      _
    // Predicated region
    $region14: #{tpu_custom_call.1} parent=1 // pred_check
      _
    $region15: #{tpu_custom_call.1} parent=1 // pred_check_branch
      %47 = sbr.rel (0) target = $region17
    $region16: #{tpu_custom_call.1} parent=1 // pred_region
      _
    $region17: #{tpu_custom_call.1} parent=1 // pred_fallthru
      _
    // Predicated region
    $region18: #{tpu_custom_call.1} parent=1 // pred_check
      _
    $region19: #{tpu_custom_call.1} parent=1 // pred_check_branch
      %49 = sbr.rel (0) target = $region21
    $region20: #{tpu_custom_call.1} parent=1 // pred_region
      _
    $region21: #{tpu_custom_call.1} parent=1 // pred_fallthru
      _
    // Predicated region
    $region22: #{tpu_custom_call.1} parent=1 // pred_check
      _
    $region23: #{tpu_custom_call.1} parent=1 // pred_check_branch
      %51 = sbr.rel (0) target = $region25
    $region24: #{tpu_custom_call.1} parent=1 // pred_region
      _
    $region25: #{tpu_custom_call.1} parent=1 // pred_fallthru
      _
    // Predicated region
    $region26: #{tpu_custom_call.1} parent=1 // pred_check
      _
    $region27: #{tpu_custom_call.1} parent=1 // pred_check_branch
      %53 = sbr.rel (0) target = $region29
    $region28: #{tpu_custom_call.1} parent=1 // pred_region
      _
    $region29: #{tpu_custom_call.1} parent=1 // pred_fallthru
      _
    // Predicated region
    $region30: #{tpu_custom_call.1} parent=1 // pred_check
      _
    $region31: #{tpu_custom_call.1} parent=1 // pred_check_branch
      %55 = sbr.rel (0) target = $region33
    $region32: #{tpu_custom_call.1} parent=1 // pred_region
      _
    $region33: #{tpu_custom_call.1} parent=1 // pred_fallthru
      _
    // Predicated region
    $region34: #{tpu_custom_call.1} parent=1 // pred_check
      _
    $region35: #{tpu_custom_call.1} parent=1 // pred_check_branch
      %57 = sbr.rel (0) target = $region37
    $region36: #{tpu_custom_call.1} parent=1 // pred_region
      _
    $region37: #{tpu_custom_call.1} parent=1 // pred_fallthru
      _
    // Predicated region
    $region38: #{tpu_custom_call.1} parent=1 // pred_check
      _
    $region39: #{tpu_custom_call.1} parent=1 // pred_check_branch
      %59 = sbr.rel (0) target = $region41
    $region40: #{tpu_custom_call.1} parent=1 // pred_region
      _
    $region41: #{tpu_custom_call.1} parent=1 // pred_fallthru
      _
    // Predicated region
    $region42: #{tpu_custom_call.1} parent=1 // pred_check
      _
    $region43: #{tpu_custom_call.1} parent=1 // pred_check_branch
      %61 = sbr.rel (0) target = $region45
    $region44: #{tpu_custom_call.1} parent=1 // pred_region
      _
    $region45: #{tpu_custom_call.1} parent=1 // pred_fallthru
      _
    // Predicated region
    $region46: #{tpu_custom_call.1} parent=1 // pred_check
      _
    $region47: #{tpu_custom_call.1} parent=1 // pred_check_branch
      %63 = sbr.rel (0) target = $region49
    $region48: #{tpu_custom_call.1} parent=1 // pred_region
      _
    $region49: #{tpu_custom_call.1} parent=1 // pred_fallthru
      _
    // Predicated region
    $region50: #{tpu_custom_call.1} parent=1 // pred_check
      _
    $region51: #{tpu_custom_call.1} parent=1 // pred_check_branch
      %65 = sbr.rel (0) target = $region53
    $region52: #{tpu_custom_call.1} parent=1 // pred_region
      _
    $region53: #{tpu_custom_call.1} parent=1 // pred_fallthru
      _
    // Predicated region
    $region54: #{tpu_custom_call.1} parent=1 // pred_check
      _
    $region55: #{tpu_custom_call.1} parent=1 // pred_check_branch
      %67 = sbr.rel (0) target = $region57
    $region56: #{tpu_custom_call.1} parent=1 // pred_region
      _
    $region57: #{tpu_custom_call.1} parent=1 // pred_fallthru
      _
    // Predicated region
    $region58: #{tpu_custom_call.1} parent=1 // pred_check
      _
    $region59: #{tpu_custom_call.1} parent=1 // pred_check_branch
      %69 = sbr.rel (0) target = $region61
    $region60: #{tpu_custom_call.1} parent=1 // pred_region
      %70 = dma.done [#allocation3], 64
    $region61: #{tpu_custom_call.1} parent=1 // pred_fallthru
      _
    // Predicated region
    $region62: #{tpu_custom_call.1} parent=1 // pred_check
      _
    $region63: #{tpu_custom_call.1} parent=1 // pred_check_branch
      %72 = sbr.rel (0) target = $region65
    $region64: #{tpu_custom_call.1} parent=1 // pred_region
      %73 = dma.done [#allocation6], 128
    $region65: #{tpu_custom_call.1} parent=1 // pred_fallthru
      _
    %v75 = vld [vmem:[#allocation5] sm:$0xf]
    %v76 = vld [vmem:[#allocation5 + $0x4] sm:$0x1]
    %v77 = vld [vmem:[%s3] sm:$0xf]
    %v78 = vld [vmem:[%s3 + $0x4] sm:$0xf]
    %v79 = vld [vmem:[%s3 + $0x8] sm:$0xf]
    %v80 = vld [vmem:[%s3 + $0xc] sm:$0xf]
    %v81 = vld [vmem:[%s4] sm:$0xf]
    %v82 = vld [vmem:[%s4 + $0x4] sm:$0xf]
    %v83 = vld [vmem:[%s4 + $0x8] sm:$0xf]
    %v84 = vld [vmem:[%s4 + $0xc] sm:$0xf]
    %v85 = vld [vmem:[%s5] sm:$0x1]
    %v86 = vld [vmem:[%s6] sm:$0xf]
    %v87 = vld [vmem:[%s6 + $0x4] sm:$0xf]
    %v88 = vld [vmem:[%s6 + $0x8] sm:$0xf]
    %v89 = vld [vmem:[%s6 + $0xc] sm:$0xf]
    %v90 = vld [vmem:[%s7] sm:$0xf]
    %v91 = vld [vmem:[%s7 + $0x4] sm:$0xf]
    %v92 = vld [vmem:[%s7 + $0x8] sm:$0xf]
    %v93 = vld [vmem:[%s7 + $0xc] sm:$0xf]
    %v94 = vld [vmem:[%s8] sm:$0x1]
    %v95 = vld [vmem:[%s9] sm:$0xf]
    %v96 = vld [vmem:[%s9 + $0x4] sm:$0xf]
    %v97 = vld [vmem:[%s9 + $0x8] sm:$0xf]
    %v98 = vld [vmem:[%s9 + $0xc] sm:$0xf]
    %v99 = vld [vmem:[%s10] sm:$0xf]
    %v100 = vld [vmem:[%s10 + $0x4] sm:$0xf]
    %v101 = vld [vmem:[%s10 + $0x8] sm:$0xf]
    %v102 = vld [vmem:[%s10 + $0xc] sm:$0xf]
    %v103 = vld [vmem:[%s11] sm:$0x1]
    %v104 = vld [vmem:[%s12] sm:$0xf]
    %v105 = vld [vmem:[%s12 + $0x4] sm:$0xf]
    %v106 = vld [vmem:[%s12 + $0x8] sm:$0xf]
    %v107 = vld [vmem:[%s12 + $0xc] sm:$0xf]
    %v108 = vld [vmem:[%s13] sm:$0x1]
    %v109 = vld [vmem:[%s1] sm:$0x1]
    %v110 = vld [vmem:[#allocation2] sm:$0x1]
    %v111 = vpack.c.bf16 %v109, %v109
    %v116 = vunpack.c.l.b16 %v81
    %v117 = vunpack.c.l.b16 %v82
    %v118 = vunpack.c.l.b16 %v83
    %v119 = vunpack.c.l.b16 %v84
    %v120 = vpack.c.b16 %v117, %v116
    %v121 = vpack.c.b16 %v119, %v118
    %vm124 = vcmask 261120
    %v126 = vsel %vm124, %v111, 0
    %128 = vmatprep.subr.bf16.mxu0 0
    %129 = vmatpush1.bf16.msra.mxu0 %v120
    %130 = vmatprep.subr.bf16.mxu0 0
    %131 = vmatpush1.bf16.msra.mxu0 %v121
    %132 = vmatprep.subr.bf16.mxu0 0
    %133 = vmatpush1.bf16.msra.mxu0 0
    %134 = vmatprep.subr.bf16.mxu0 0
    %135 = vmatpush1.bf16.msra.mxu0 0
    %136 = vmatprep.subr.bf16.mxu0 0
    %137 = vmatpush1.bf16.msra.mxu0 0
    %138 = vmatprep.subr.bf16.mxu0 0
    %139 = vmatpush1.bf16.msra.mxu0 0
    %140 = vmatprep.subr.bf16.mxu0 0
    %141 = vmatpush1.bf16.msra.mxu0 0
    %142 = vmatprep.subr.bf16.mxu0 0
    %143 = vmatpush1.bf16.msra.mxu0 0
    %144 = vmatprep.subr.bf16.mxu0 0
    %145 = vmatpush1.bf16.msra.mxu0 0
    %146 = vmatprep.subr.bf16.mxu0 0
    %147 = vmatpush1.bf16.msra.mxu0 0
    %148 = vmatprep.subr.bf16.mxu0 0
    %149 = vmatpush1.bf16.msra.mxu0 0
    %150 = vmatprep.subr.bf16.mxu0 0
    %151 = vmatpush1.bf16.msra.mxu0 0
    %152 = vmatprep.subr.bf16.mxu0 0
    %153 = vmatpush1.bf16.msra.mxu0 0
    %154 = vmatprep.subr.bf16.mxu0 0
    %155 = vmatpush1.bf16.msra.mxu0 0
    %156 = vmatprep.subr.bf16.mxu0 0
    %157 = vmatpush1.bf16.msra.mxu0 0
    %158 = vmatprep.subr.bf16.mxu0 0
    %159 = vmatpush1.bf16.msra.mxu0 0
    %160 = vmatprep.mubr.bf16.mxu0 0
    %161 = vmatmul.mubr.bf16.gmra.mrb[0].mxu0 %v126
    %v162 = vpop.f32.mrb[0].mxu0
    %v163 = vadd.f32 0.0, %v162
    %v164 = vpop.f32.mrb[0].mxu0
    %v165 = vpop.f32.mrb[0].mxu0
    %v166 = vpop.f32.mrb[0].mxu0
    %167 = vdwg.mxu0
    %v172 = vunpack.c.l.b16 %v77
    %v173 = vunpack.c.l.b16 %v78
    %v174 = vunpack.c.l.b16 %v79
    %v175 = vunpack.c.l.b16 %v80
    %v176 = vpack.c.b16 %v173, %v172
    %v177 = vpack.c.b16 %v175, %v174
    %v181 = vsel %vm124, %v110, 0
    %183 = vmatprep.subr.bf16.mxu0 0
    %184 = vmatpush1.bf16.msra.mxu0 %v176
    %185 = vmatprep.subr.bf16.mxu0 0
    %186 = vmatpush1.bf16.msra.mxu0 %v177
    %187 = vmatprep.subr.bf16.mxu0 0
    %188 = vmatpush1.bf16.msra.mxu0 0
    %189 = vmatprep.subr.bf16.mxu0 0
    %190 = vmatpush1.bf16.msra.mxu0 0
    %191 = vmatprep.subr.bf16.mxu0 0
    %192 = vmatpush1.bf16.msra.mxu0 0
    %193 = vmatprep.subr.bf16.mxu0 0
    %194 = vmatpush1.bf16.msra.mxu0 0
    %195 = vmatprep.subr.bf16.mxu0 0
    %196 = vmatpush1.bf16.msra.mxu0 0
    %197 = vmatprep.subr.bf16.mxu0 0
    %198 = vmatpush1.bf16.msra.mxu0 0
    %199 = vmatprep.subr.bf16.mxu0 0
    %200 = vmatpush1.bf16.msra.mxu0 0
    %201 = vmatprep.subr.bf16.mxu0 0
    %202 = vmatpush1.bf16.msra.mxu0 0
    %203 = vmatprep.subr.bf16.mxu0 0
    %204 = vmatpush1.bf16.msra.mxu0 0
    %205 = vmatprep.subr.bf16.mxu0 0
    %206 = vmatpush1.bf16.msra.mxu0 0
    %207 = vmatprep.subr.bf16.mxu0 0
    %208 = vmatpush1.bf16.msra.mxu0 0
    %209 = vmatprep.subr.bf16.mxu0 0
    %210 = vmatpush1.bf16.msra.mxu0 0
    %211 = vmatprep.subr.bf16.mxu0 0
    %212 = vmatpush1.bf16.msra.mxu0 0
    %213 = vmatprep.subr.bf16.mxu0 0
    %214 = vmatpush1.bf16.msra.mxu0 0
    %215 = vmatprep.mubr.bf16.mxu0 0
    %216 = vmatmul.mubr.bf16.gmra.mrb[0].mxu0 %v181
    %v217 = vpop.f32.mrb[0].mxu0
    %v218 = vadd.f32 %v163, %v217
    %v219 = vpop.f32.mrb[0].mxu0
    %v220 = vpop.f32.mrb[0].mxu0
    %v221 = vpop.f32.mrb[0].mxu0
    %222 = vdwg.mxu0
    %v223 = vadd.f32 %v218, %v85
    %vm224 = vcmask 73728
    %v225 = vsel %vm224, %v223, -inf
    %226 = vmax.xlane.f32.xlu0 %v225
    %v227 = vpop.xlane.xlu0 %226
    %v228 = vsub.f32 %v223, %v227
    %v229 = vmul.f32 %v228, 1.442695
    %v230 = vpow.pop %v229
    %v231 = vsel %vm224, %v230, 0.0
    %232 = vadd.xlane.f32.xlu0 %v231
    %v233 = vpop.xlane.xlu0 %232
    %v234 = vrcp.pop %v233
    %v235 = vmul.f32 %v230, %v234
    %v236 = vpack.c.bf16 %v230, %v230
    %v239 = vunpack.c.l.b16 %v75
    %v240 = vunpack.c.l.b16 %v76
    %v241 = vpack.c.b16 %v240, %v239
    %vm242 = vcmask 80896
    %v244 = vsel %vm242, %v236, 0
    %vm246 = vcmask 1044480
    %v248 = vsel %vm246, %v241, 0
    %250 = vmatprep.subr.bf16.mxu0 0
    %251 = vmatpush1.bf16.msra.mxu0 %v248
    %252 = vmatprep.subr.bf16.mxu0 0
    %253 = vmatpush1.bf16.msra.mxu0 0
    %254 = vmatprep.subr.bf16.mxu0 0
    %255 = vmatpush1.bf16.msra.mxu0 0
    %256 = vmatprep.subr.bf16.mxu0 0
    %257 = vmatpush1.bf16.msra.mxu0 0
    %258 = vmatprep.subr.bf16.mxu0 0
    %259 = vmatpush1.bf16.msra.mxu0 0
    %260 = vmatprep.subr.bf16.mxu0 0
    %261 = vmatpush1.bf16.msra.mxu0 0
    %262 = vmatprep.subr.bf16.mxu0 0
    %263 = vmatpush1.bf16.msra.mxu0 0
    %264 = vmatprep.subr.bf16.mxu0 0
    %265 = vmatpush1.bf16.msra.mxu0 0
    %266 = vmatprep.subr.bf16.mxu0 0
    %267 = vmatpush1.bf16.msra.mxu0 0
    %268 = vmatprep.subr.bf16.mxu0 0
    %269 = vmatpush1.bf16.msra.mxu0 0
    %270 = vmatprep.subr.bf16.mxu0 0
    %271 = vmatpush1.bf16.msra.mxu0 0
    %272 = vmatprep.subr.bf16.mxu0 0
    %273 = vmatpush1.bf16.msra.mxu0 0
    %274 = vmatprep.subr.bf16.mxu0 0
    %275 = vmatpush1.bf16.msra.mxu0 0
    %276 = vmatprep.subr.bf16.mxu0 0
    %277 = vmatpush1.bf16.msra.mxu0 0
    %278 = vmatprep.subr.bf16.mxu0 0
    %279 = vmatpush1.bf16.msra.mxu0 0
    %280 = vmatprep.subr.bf16.mxu0 0
    %281 = vmatpush1.bf16.msra.mxu0 0
    %282 = vmatprep.mubr.bf16.mxu0 0
    %283 = vmatmul.mubr.bf16.gmra.mrb[0].mxu0 %v244
    %v284 = vpop.f32.mrb[0].mxu0
    %v285 = vadd.f32 0.0, %v284
    %v286 = vpop.f32.mrb[0].mxu0
    %v287 = vpop.f32.mrb[0].mxu0
    %v288 = vpop.f32.mrb[0].mxu0
    %289 = vdwg.mxu0
    %v290 = vmul.f32 %v285, %v234
    %v291 = vpack.c.bf16 %v290, %v290
    %v296 = vunpack.c.l.b16 %v90
    %v297 = vunpack.c.l.b16 %v91
    %v298 = vunpack.c.l.b16 %v92
    %v299 = vunpack.c.l.b16 %v93
    %v300 = vpack.c.b16 %v297, %v296
    %v301 = vpack.c.b16 %v299, %v298
    %v305 = vsel %vm124, %v291, 0
    %307 = vmatprep.subr.bf16.mxu0 0
    %308 = vmatpush1.bf16.msra.mxu0 %v300
    %309 = vmatprep.subr.bf16.mxu0 0
    %310 = vmatpush1.bf16.msra.mxu0 %v301
    %311 = vmatprep.subr.bf16.mxu0 0
    %312 = vmatpush1.bf16.msra.mxu0 0
    %313 = vmatprep.subr.bf16.mxu0 0
    %314 = vmatpush1.bf16.msra.mxu0 0
    %315 = vmatprep.subr.bf16.mxu0 0
    %316 = vmatpush1.bf16.msra.mxu0 0
    %317 = vmatprep.subr.bf16.mxu0 0
    %318 = vmatpush1.bf16.msra.mxu0 0
    %319 = vmatprep.subr.bf16.mxu0 0
    %320 = vmatpush1.bf16.msra.mxu0 0
    %321 = vmatprep.subr.bf16.mxu0 0
    %322 = vmatpush1.bf16.msra.mxu0 0
    %323 = vmatprep.subr.bf16.mxu0 0
    %324 = vmatpush1.bf16.msra.mxu0 0
    %325 = vmatprep.subr.bf16.mxu0 0
    %326 = vmatpush1.bf16.msra.mxu0 0
    %327 = vmatprep.subr.bf16.mxu0 0
    %328 = vmatpush1.bf16.msra.mxu0 0
    %329 = vmatprep.subr.bf16.mxu0 0
    %330 = vmatpush1.bf16.msra.mxu0 0
    %331 = vmatprep.subr.bf16.mxu0 0
    %332 = vmatpush1.bf16.msra.mxu0 0
    %333 = vmatprep.subr.bf16.mxu0 0
    %334 = vmatpush1.bf16.msra.mxu0 0
    %335 = vmatprep.subr.bf16.mxu0 0
    %336 = vmatpush1.bf16.msra.mxu0 0
    %337 = vmatprep.subr.bf16.mxu0 0
    %338 = vmatpush1.bf16.msra.mxu0 0
    %339 = vmatprep.mubr.bf16.mxu0 0
    %340 = vmatmul.mubr.bf16.gmra.mrb[0].mxu0 %v305
    %v341 = vpop.f32.mrb[0].mxu0
    %v342 = vadd.f32 0.0, %v341
    %v343 = vpop.f32.mrb[0].mxu0
    %v344 = vpop.f32.mrb[0].mxu0
    %v345 = vpop.f32.mrb[0].mxu0
    %346 = vdwg.mxu0
    %v351 = vunpack.c.l.b16 %v86
    %v352 = vunpack.c.l.b16 %v87
    %v353 = vunpack.c.l.b16 %v88
    %v354 = vunpack.c.l.b16 %v89
    %v355 = vpack.c.b16 %v352, %v351
    %v356 = vpack.c.b16 %v354, %v353
    %359 = vmatprep.subr.bf16.mxu0 0
    %360 = vmatpush1.bf16.msra.mxu0 %v355
    %361 = vmatprep.subr.bf16.mxu0 0
    %362 = vmatpush1.bf16.msra.mxu0 %v356
    %363 = vmatprep.subr.bf16.mxu0 0
    %364 = vmatpush1.bf16.msra.mxu0 0
    %365 = vmatprep.subr.bf16.mxu0 0
    %366 = vmatpush1.bf16.msra.mxu0 0
    %367 = vmatprep.subr.bf16.mxu0 0
    %368 = vmatpush1.bf16.msra.mxu0 0
    %369 = vmatprep.subr.bf16.mxu0 0
    %370 = vmatpush1.bf16.msra.mxu0 0
    %371 = vmatprep.subr.bf16.mxu0 0
    %372 = vmatpush1.bf16.msra.mxu0 0
    %373 = vmatprep.subr.bf16.mxu0 0
    %374 = vmatpush1.bf16.msra.mxu0 0
    %375 = vmatprep.subr.bf16.mxu0 0
    %376 = vmatpush1.bf16.msra.mxu0 0
    %377 = vmatprep.subr.bf16.mxu0 0
    %378 = vmatpush1.bf16.msra.mxu0 0
    %379 = vmatprep.subr.bf16.mxu0 0
    %380 = vmatpush1.bf16.msra.mxu0 0
    %381 = vmatprep.subr.bf16.mxu0 0
    %382 = vmatpush1.bf16.msra.mxu0 0
    %383 = vmatprep.subr.bf16.mxu0 0
    %384 = vmatpush1.bf16.msra.mxu0 0
    %385 = vmatprep.subr.bf16.mxu0 0
    %386 = vmatpush1.bf16.msra.mxu0 0
    %387 = vmatprep.subr.bf16.mxu0 0
    %388 = vmatpush1.bf16.msra.mxu0 0
    %389 = vmatprep.subr.bf16.mxu0 0
    %390 = vmatpush1.bf16.msra.mxu0 0
    %391 = vmatprep.mubr.bf16.mxu0 0
    %392 = vmatmul.mubr.bf16.gmra.mrb[0].mxu0 %v181
    %v393 = vpop.f32.mrb[0].mxu0
    %v394 = vadd.f32 %v342, %v393
    %v395 = vpop.f32.mrb[0].mxu0
    %v396 = vpop.f32.mrb[0].mxu0
    %v397 = vpop.f32.mrb[0].mxu0
    %398 = vdwg.mxu0
    %v399 = vadd.f32 %v394, %v94
    %v400 = vmax.f32 %v399, 0.0
    %v401 = vpack.c.bf16 %v400, %v400
    %v406 = vunpack.c.l.b16 %v99
    %v407 = vunpack.c.l.b16 %v100
    %v408 = vunpack.c.l.b16 %v101
    %v409 = vunpack.c.l.b16 %v102
    %v410 = vpack.c.b16 %v407, %v406
    %v411 = vpack.c.b16 %v409, %v408
    %414 = vmatprep.subr.bf16.mxu0 0
    %415 = vmatpush1.bf16.msra.mxu0 %v410
    %416 = vmatprep.subr.bf16.mxu0 0
    %417 = vmatpush1.bf16.msra.mxu0 %v411
    %418 = vmatprep.subr.bf16.mxu0 0
    %419 = vmatpush1.bf16.msra.mxu0 0
    %420 = vmatprep.subr.bf16.mxu0 0
    %421 = vmatpush1.bf16.msra.mxu0 0
    %422 = vmatprep.subr.bf16.mxu0 0
    %423 = vmatpush1.bf16.msra.mxu0 0
    %424 = vmatprep.subr.bf16.mxu0 0
    %425 = vmatpush1.bf16.msra.mxu0 0
    %426 = vmatprep.subr.bf16.mxu0 0
    %427 = vmatpush1.bf16.msra.mxu0 0
    %428 = vmatprep.subr.bf16.mxu0 0
    %429 = vmatpush1.bf16.msra.mxu0 0
    %430 = vmatprep.subr.bf16.mxu0 0
    %431 = vmatpush1.bf16.msra.mxu0 0
    %432 = vmatprep.subr.bf16.mxu0 0
    %433 = vmatpush1.bf16.msra.mxu0 0
    %434 = vmatprep.subr.bf16.mxu0 0
    %435 = vmatpush1.bf16.msra.mxu0 0
    %436 = vmatprep.subr.bf16.mxu0 0
    %437 = vmatpush1.bf16.msra.mxu0 0
    %438 = vmatprep.subr.bf16.mxu0 0
    %439 = vmatpush1.bf16.msra.mxu0 0
    %440 = vmatprep.subr.bf16.mxu0 0
    %441 = vmatpush1.bf16.msra.mxu0 0
    %442 = vmatprep.subr.bf16.mxu0 0
    %443 = vmatpush1.bf16.msra.mxu0 0
    %444 = vmatprep.subr.bf16.mxu0 0
    %445 = vmatpush1.bf16.msra.mxu0 0
    %446 = vmatprep.mubr.bf16.mxu0 0
    %447 = vmatmul.mubr.bf16.gmra.mrb[0].mxu0 %v126
    %v448 = vpop.f32.mrb[0].mxu0
    %v449 = vadd.f32 0.0, %v448
    %v450 = vpop.f32.mrb[0].mxu0
    %v451 = vpop.f32.mrb[0].mxu0
    %v452 = vpop.f32.mrb[0].mxu0
    %453 = vdwg.mxu0
    %v458 = vunpack.c.l.b16 %v95
    %v459 = vunpack.c.l.b16 %v96
    %v460 = vunpack.c.l.b16 %v97
    %v461 = vunpack.c.l.b16 %v98
    %v462 = vpack.c.b16 %v459, %v458
    %v463 = vpack.c.b16 %v461, %v460
    %v467 = vsel %vm124, %v401, 0
    %469 = vmatprep.subr.bf16.mxu0 0
    %470 = vmatpush1.bf16.msra.mxu0 %v462
    %471 = vmatprep.subr.bf16.mxu0 0
    %472 = vmatpush1.bf16.msra.mxu0 %v463
    %473 = vmatprep.subr.bf16.mxu0 0
    %474 = vmatpush1.bf16.msra.mxu0 0
    %475 = vmatprep.subr.bf16.mxu0 0
    %476 = vmatpush1.bf16.msra.mxu0 0
    %477 = vmatprep.subr.bf16.mxu0 0
    %478 = vmatpush1.bf16.msra.mxu0 0
    %479 = vmatprep.subr.bf16.mxu0 0
    %480 = vmatpush1.bf16.msra.mxu0 0
    %481 = vmatprep.subr.bf16.mxu0 0
    %482 = vmatpush1.bf16.msra.mxu0 0
    %483 = vmatprep.subr.bf16.mxu0 0
    %484 = vmatpush1.bf16.msra.mxu0 0
    %485 = vmatprep.subr.bf16.mxu0 0
    %486 = vmatpush1.bf16.msra.mxu0 0
    %487 = vmatprep.subr.bf16.mxu0 0
    %488 = vmatpush1.bf16.msra.mxu0 0
    %489 = vmatprep.subr.bf16.mxu0 0
    %490 = vmatpush1.bf16.msra.mxu0 0
    %491 = vmatprep.subr.bf16.mxu0 0
    %492 = vmatpush1.bf16.msra.mxu0 0
    %493 = vmatprep.subr.bf16.mxu0 0
    %494 = vmatpush1.bf16.msra.mxu0 0
    %495 = vmatprep.subr.bf16.mxu0 0
    %496 = vmatpush1.bf16.msra.mxu0 0
    %497 = vmatprep.subr.bf16.mxu0 0
    %498 = vmatpush1.bf16.msra.mxu0 0
    %499 = vmatprep.subr.bf16.mxu0 0
    %500 = vmatpush1.bf16.msra.mxu0 0
    %501 = vmatprep.mubr.bf16.mxu0 0
    %502 = vmatmul.mubr.bf16.gmra.mrb[0].mxu0 %v467
    %v503 = vpop.f32.mrb[0].mxu0
    %v504 = vadd.f32 %v449, %v503
    %v505 = vpop.f32.mrb[0].mxu0
    %v506 = vpop.f32.mrb[0].mxu0
    %v507 = vpop.f32.mrb[0].mxu0
    %508 = vdwg.mxu0
    %v509 = vadd.f32 %v504, %v103
    %v510 = vxor.u32 %v509, 2147483648
    %v511 = vmul.f32 %v510, 1.442695
    %v512 = vpow.pop %v511
    %v513 = vadd.f32 %v512, 1.0
    %v514 = vrcp.pop %v513
    %v515 = vmul.f32 1.0, %v514
    %517 = vrot.lane.b32.xlu0 %v509, 32
    %v518 = vpop.permute.xlu0 %517
    %v520 = vmul.f32 %v515, %v518
    %522 = vrot.lane.b32.xlu0 %v520, 64
    %v523 = vpop.permute.xlu0 %522
    %v525 = vadd.f32 %v509, %v523
    %v526 = vtanh.pop %v525
    %v527 = vsub.f32 1.0, %v515
    %529 = vrot.lane.b32.xlu0 %v526, 96
    %v530 = vpop.permute.xlu0 %529
    %v532 = vmul.f32 %v527, %v530
    %v534 = vlaneseq
    %v535 = vshrl.u32 %v534, 7
    %v536 = vsub.s32 0, %v535
    %v537 = vrot.slane %v109, %v536
    %538 = vrot.lane.b32.xlu0 %v537, 32
    %v539 = vpop.permute.xlu0 %538
    %v541 = vmul.f32 %v515, %v539
    %v542 = vadd.f32 %v532, %v541
    %v543 = vpack.c.bf16 %v542, %v542
    %545 = vrot.lane.b32.xlu0 %v543, 96
    %v546 = vpop.permute.xlu0 %545
    %v551 = vunpack.c.l.b16 %v104
    %v552 = vunpack.c.l.b16 %v105
    %v553 = vunpack.c.l.b16 %v106
    %v554 = vunpack.c.l.b16 %v107
    %v555 = vpack.c.b16 %v552, %v551
    %v556 = vpack.c.b16 %v554, %v553
    %v560 = vsel %vm124, %v546, 0
    %562 = vmatprep.subr.bf16.mxu0 0
    %563 = vmatpush1.bf16.msra.mxu0 %v555
    %564 = vmatprep.subr.bf16.mxu0 0
    %565 = vmatpush1.bf16.msra.mxu0 %v556
    %566 = vmatprep.subr.bf16.mxu0 0
    %567 = vmatpush1.bf16.msra.mxu0 0
    %568 = vmatprep.subr.bf16.mxu0 0
    %569 = vmatpush1.bf16.msra.mxu0 0
    %570 = vmatprep.subr.bf16.mxu0 0
    %571 = vmatpush1.bf16.msra.mxu0 0
    %572 = vmatprep.subr.bf16.mxu0 0
    %573 = vmatpush1.bf16.msra.mxu0 0
    %574 = vmatprep.subr.bf16.mxu0 0
    %575 = vmatpush1.bf16.msra.mxu0 0
    %576 = vmatprep.subr.bf16.mxu0 0
    %577 = vmatpush1.bf16.msra.mxu0 0
    %578 = vmatprep.subr.bf16.mxu0 0
    %579 = vmatpush1.bf16.msra.mxu0 0
    %580 = vmatprep.subr.bf16.mxu0 0
    %581 = vmatpush1.bf16.msra.mxu0 0
    %582 = vmatprep.subr.bf16.mxu0 0
    %583 = vmatpush1.bf16.msra.mxu0 0
    %584 = vmatprep.subr.bf16.mxu0 0
    %585 = vmatpush1.bf16.msra.mxu0 0
    %586 = vmatprep.subr.bf16.mxu0 0
    %587 = vmatpush1.bf16.msra.mxu0 0
    %588 = vmatprep.subr.bf16.mxu0 0
    %589 = vmatpush1.bf16.msra.mxu0 0
    %590 = vmatprep.subr.bf16.mxu0 0
    %591 = vmatpush1.bf16.msra.mxu0 0
    %592 = vmatprep.subr.bf16.mxu0 0
    %593 = vmatpush1.bf16.msra.mxu0 0
    %594 = vmatprep.mubr.bf16.mxu0 0
    %595 = vmatmul.mubr.bf16.gmra.mrb[0].mxu0 %v560
    %v596 = vpop.f32.mrb[0].mxu0
    %v597 = vadd.f32 %v108, %v596
    %v598 = vpop.f32.mrb[0].mxu0
    %v599 = vpop.f32.mrb[0].mxu0
    %v600 = vpop.f32.mrb[0].mxu0
    %601 = vdwg.mxu0
    %vm602 = vcmask 122880
    %v603 = vsel %vm602, %v597, -inf
    %604 = vmax.xlane.f32.xlu0 %v603
    %v605 = vpop.xlane.xlu0 %604
    %v606 = vsub.f32 %v597, %v605
    %v607 = vmul.f32 %v606, 1.442695
    %v608 = vpow.pop %v607
    %v609 = vsel %vm602, %v608, 0.0
    %610 = vadd.xlane.f32.xlu0 %v609
    %v611 = vpop.xlane.xlu0 %610
    %v612 = vlog2.pop %v611
    %v613 = vmul.f32 %v612, 0.6931472
    %v614 = vadd.f32 %v613, %v605
    %v615 = vsub.f32 %v597, %v614
    %617 = vrot.lane.b32.xlu0 %v542, 112
    %v618 = vpop.permute.xlu0 %617
    %621 = vrot.lane.b32.xlu0 %v235, 48
    %v622 = vpop.permute.xlu0 %621
    %vm624 = vcmask 130048
    %v625 = vsel %vm624, %v615, %v618
    %vm626 = vcmask 392192
    %v627 = vsel %vm626, %v625, %v622
    %vm628 = vcmask 474112
    %v629 = vsel %vm628, %v627, 0.0
    %630 = vst [vmem:[#allocation7] sm:$0x1] %v629
    %v631 = vld [vmem:[#allocation2] sm:$0x1]
    %632 = vmatprep.subr.bf16.mxu0 0
    %633 = vmatpush1.bf16.msra.mxu0 %v120
    %634 = vmatprep.subr.bf16.mxu0 0
    %635 = vmatpush1.bf16.msra.mxu0 %v121
    %636 = vmatprep.subr.bf16.mxu0 0
    %637 = vmatpush1.bf16.msra.mxu0 0
    %638 = vmatprep.subr.bf16.mxu0 0
    %639 = vmatpush1.bf16.msra.mxu0 0
    %640 = vmatprep.subr.bf16.mxu0 0
    %641 = vmatpush1.bf16.msra.mxu0 0
    %642 = vmatprep.subr.bf16.mxu0 0
    %643 = vmatpush1.bf16.msra.mxu0 0
    %644 = vmatprep.subr.bf16.mxu0 0
    %645 = vmatpush1.bf16.msra.mxu0 0
    %646 = vmatprep.subr.bf16.mxu0 0
    %647 = vmatpush1.bf16.msra.mxu0 0
    %648 = vmatprep.subr.bf16.mxu0 0
    %649 = vmatpush1.bf16.msra.mxu0 0
    %650 = vmatprep.subr.bf16.mxu0 0
    %651 = vmatpush1.bf16.msra.mxu0 0
    %652 = vmatprep.subr.bf16.mxu0 0
    %653 = vmatpush1.bf16.msra.mxu0 0
    %654 = vmatprep.subr.bf16.mxu0 0
    %655 = vmatpush1.bf16.msra.mxu0 0
    %656 = vmatprep.subr.bf16.mxu0 0
    %657 = vmatpush1.bf16.msra.mxu0 0
    %658 = vmatprep.subr.bf16.mxu0 0
    %659 = vmatpush1.bf16.msra.mxu0 0
    %660 = vmatprep.subr.bf16.mxu0 0
    %661 = vmatpush1.bf16.msra.mxu0 0
    %662 = vmatprep.subr.bf16.mxu0 0
    %663 = vmatpush1.bf16.msra.mxu0 0
    %664 = vmatprep.mubr.bf16.mxu0 0
    %665 = vmatmul.mubr.bf16.gmra.mrb[0].mxu0 %v560
    %v666 = vpop.f32.mrb[0].mxu0
    %v667 = vadd.f32 0.0, %v666
    %v668 = vpop.f32.mrb[0].mxu0
    %v669 = vpop.f32.mrb[0].mxu0
    %v670 = vpop.f32.mrb[0].mxu0
    %671 = vdwg.mxu0
    %v673 = vunpack.c.l.b16 %v631
    %v674 = vpack.c.b16 %v673, %v673
    %v676 = vshrl.u32 %v674, 16
    %v679 = vsel %vm124, %v676, 0
    %681 = vmatprep.subr.bf16.mxu0 0
    %682 = vmatpush1.bf16.msra.mxu0 %v176
    %683 = vmatprep.subr.bf16.mxu0 0
    %684 = vmatpush1.bf16.msra.mxu0 %v177
    %685 = vmatprep.subr.bf16.mxu0 0
    %686 = vmatpush1.bf16.msra.mxu0 0
    %687 = vmatprep.subr.bf16.mxu0 0
    %688 = vmatpush1.bf16.msra.mxu0 0
    %689 = vmatprep.subr.bf16.mxu0 0
    %690 = vmatpush1.bf16.msra.mxu0 0
    %691 = vmatprep.subr.bf16.mxu0 0
    %692 = vmatpush1.bf16.msra.mxu0 0
    %693 = vmatprep.subr.bf16.mxu0 0
    %694 = vmatpush1.bf16.msra.mxu0 0
    %695 = vmatprep.subr.bf16.mxu0 0
    %696 = vmatpush1.bf16.msra.mxu0 0
    %697 = vmatprep.subr.bf16.mxu0 0
    %698 = vmatpush1.bf16.msra.mxu0 0
    %699 = vmatprep.subr.bf16.mxu0 0
    %700 = vmatpush1.bf16.msra.mxu0 0
    %701 = vmatprep.subr.bf16.mxu0 0
    %702 = vmatpush1.bf16.msra.mxu0 0
    %703 = vmatprep.subr.bf16.mxu0 0
    %704 = vmatpush1.bf16.msra.mxu0 0
    %705 = vmatprep.subr.bf16.mxu0 0
    %706 = vmatpush1.bf16.msra.mxu0 0
    %707 = vmatprep.subr.bf16.mxu0 0
    %708 = vmatpush1.bf16.msra.mxu0 0
    %709 = vmatprep.subr.bf16.mxu0 0
    %710 = vmatpush1.bf16.msra.mxu0 0
    %711 = vmatprep.subr.bf16.mxu0 0
    %712 = vmatpush1.bf16.msra.mxu0 0
    %713 = vmatprep.mubr.bf16.mxu0 0
    %714 = vmatmul.mubr.bf16.gmra.mrb[0].mxu0 %v679
    %v715 = vpop.f32.mrb[0].mxu0
    %v716 = vadd.f32 %v667, %v715
    %v717 = vpop.f32.mrb[0].mxu0
    %v718 = vpop.f32.mrb[0].mxu0
    %v719 = vpop.f32.mrb[0].mxu0
    %720 = vdwg.mxu0
    %v721 = vadd.f32 %v716, %v85
    %v722 = vsel %vm224, %v721, -inf
    %723 = vmax.xlane.f32.xlu0 %v722
    %v724 = vpop.xlane.xlu0 %723
    %v725 = vsub.f32 %v721, %v724
    %v726 = vmul.f32 %v725, 1.442695
    %v727 = vpow.pop %v726
    %v728 = vsel %vm224, %v727, 0.0
    %729 = vadd.xlane.f32.xlu0 %v728
    %v730 = vpop.xlane.xlu0 %729
    %v731 = vrcp.pop %v730
    %v732 = vmul.f32 %v727, %v731
    %v733 = vpack.c.bf16 %v727, %v727
    %v735 = vsel %vm242, %v733, 0
    %737 = vmatprep.subr.bf16.mxu0 0
    %738 = vmatpush1.bf16.msra.mxu0 %v248
    %739 = vmatprep.subr.bf16.mxu0 0
    %740 = vmatpush1.bf16.msra.mxu0 0
    %741 = vmatprep.subr.bf16.mxu0 0
    %742 = vmatpush1.bf16.msra.mxu0 0
    %743 = vmatprep.subr.bf16.mxu0 0
    %744 = vmatpush1.bf16.msra.mxu0 0
    %745 = vmatprep.subr.bf16.mxu0 0
    %746 = vmatpush1.bf16.msra.mxu0 0
    %747 = vmatprep.subr.bf16.mxu0 0
    %748 = vmatpush1.bf16.msra.mxu0 0
    %749 = vmatprep.subr.bf16.mxu0 0
    %750 = vmatpush1.bf16.msra.mxu0 0
    %751 = vmatprep.subr.bf16.mxu0 0
    %752 = vmatpush1.bf16.msra.mxu0 0
    %753 = vmatprep.subr.bf16.mxu0 0
    %754 = vmatpush1.bf16.msra.mxu0 0
    %755 = vmatprep.subr.bf16.mxu0 0
    %756 = vmatpush1.bf16.msra.mxu0 0
    %757 = vmatprep.subr.bf16.mxu0 0
    %758 = vmatpush1.bf16.msra.mxu0 0
    %759 = vmatprep.subr.bf16.mxu0 0
    %760 = vmatpush1.bf16.msra.mxu0 0
    %761 = vmatprep.subr.bf16.mxu0 0
    %762 = vmatpush1.bf16.msra.mxu0 0
    %763 = vmatprep.subr.bf16.mxu0 0
    %764 = vmatpush1.bf16.msra.mxu0 0
    %765 = vmatprep.subr.bf16.mxu0 0
    %766 = vmatpush1.bf16.msra.mxu0 0
    %767 = vmatprep.subr.bf16.mxu0 0
    %768 = vmatpush1.bf16.msra.mxu0 0
    %769 = vmatprep.mubr.bf16.mxu0 0
    %770 = vmatmul.mubr.bf16.gmra.mrb[0].mxu0 %v735
    %v771 = vpop.f32.mrb[0].mxu0
    %v772 = vadd.f32 0.0, %v771
    %v773 = vpop.f32.mrb[0].mxu0
    %v774 = vpop.f32.mrb[0].mxu0
    %v775 = vpop.f32.mrb[0].mxu0
    %776 = vdwg.mxu0
    %v777 = vmul.f32 %v772, %v731
    %v778 = vpack.c.bf16 %v777, %v777
    %v780 = vsel %vm124, %v778, 0
    %782 = vmatprep.subr.bf16.mxu0 0
    %783 = vmatpush1.bf16.msra.mxu0 %v300
    %784 = vmatprep.subr.bf16.mxu0 0
    %785 = vmatpush1.bf16.msra.mxu0 %v301
    %786 = vmatprep.subr.bf16.mxu0 0
    %787 = vmatpush1.bf16.msra.mxu0 0
    %788 = vmatprep.subr.bf16.mxu0 0
    %789 = vmatpush1.bf16.msra.mxu0 0
    %790 = vmatprep.subr.bf16.mxu0 0
    %791 = vmatpush1.bf16.msra.mxu0 0
    %792 = vmatprep.subr.bf16.mxu0 0
    %793 = vmatpush1.bf16.msra.mxu0 0
    %794 = vmatprep.subr.bf16.mxu0 0
    %795 = vmatpush1.bf16.msra.mxu0 0
    %796 = vmatprep.subr.bf16.mxu0 0
    %797 = vmatpush1.bf16.msra.mxu0 0
    %798 = vmatprep.subr.bf16.mxu0 0
    %799 = vmatpush1.bf16.msra.mxu0 0
    %800 = vmatprep.subr.bf16.mxu0 0
    %801 = vmatpush1.bf16.msra.mxu0 0
    %802 = vmatprep.subr.bf16.mxu0 0
    %803 = vmatpush1.bf16.msra.mxu0 0
    %804 = vmatprep.subr.bf16.mxu0 0
    %805 = vmatpush1.bf16.msra.mxu0 0
    %806 = vmatprep.subr.bf16.mxu0 0
    %807 = vmatpush1.bf16.msra.mxu0 0
    %808 = vmatprep.subr.bf16.mxu0 0
    %809 = vmatpush1.bf16.msra.mxu0 0
    %810 = vmatprep.subr.bf16.mxu0 0
    %811 = vmatpush1.bf16.msra.mxu0 0
    %812 = vmatprep.subr.bf16.mxu0 0
    %813 = vmatpush1.bf16.msra.mxu0 0
    %814 = vmatprep.mubr.bf16.mxu0 0
    %815 = vmatmul.mubr.bf16.gmra.mrb[0].mxu0 %v780
    %v816 = vpop.f32.mrb[0].mxu0
    %v817 = vadd.f32 0.0, %v816
    %v818 = vpop.f32.mrb[0].mxu0
    %v819 = vpop.f32.mrb[0].mxu0
    %v820 = vpop.f32.mrb[0].mxu0
    %821 = vdwg.mxu0
    %822 = vmatprep.subr.bf16.mxu0 0
    %823 = vmatpush1.bf16.msra.mxu0 %v355
    %824 = vmatprep.subr.bf16.mxu0 0
    %825 = vmatpush1.bf16.msra.mxu0 %v356
    %826 = vmatprep.subr.bf16.mxu0 0
    %827 = vmatpush1.bf16.msra.mxu0 0
    %828 = vmatprep.subr.bf16.mxu0 0
    %829 = vmatpush1.bf16.msra.mxu0 0
    %830 = vmatprep.subr.bf16.mxu0 0
    %831 = vmatpush1.bf16.msra.mxu0 0
    %832 = vmatprep.subr.bf16.mxu0 0
    %833 = vmatpush1.bf16.msra.mxu0 0
    %834 = vmatprep.subr.bf16.mxu0 0
    %835 = vmatpush1.bf16.msra.mxu0 0
    %836 = vmatprep.subr.bf16.mxu0 0
    %837 = vmatpush1.bf16.msra.mxu0 0
    %838 = vmatprep.subr.bf16.mxu0 0
    %839 = vmatpush1.bf16.msra.mxu0 0
    %840 = vmatprep.subr.bf16.mxu0 0
    %841 = vmatpush1.bf16.msra.mxu0 0
    %842 = vmatprep.subr.bf16.mxu0 0
    %843 = vmatpush1.bf16.msra.mxu0 0
    %844 = vmatprep.subr.bf16.mxu0 0
    %845 = vmatpush1.bf16.msra.mxu0 0
    %846 = vmatprep.subr.bf16.mxu0 0
    %847 = vmatpush1.bf16.msra.mxu0 0
    %848 = vmatprep.subr.bf16.mxu0 0
    %849 = vmatpush1.bf16.msra.mxu0 0
    %850 = vmatprep.subr.bf16.mxu0 0
    %851 = vmatpush1.bf16.msra.mxu0 0
    %852 = vmatprep.subr.bf16.mxu0 0
    %853 = vmatpush1.bf16.msra.mxu0 0
    %854 = vmatprep.mubr.bf16.mxu0 0
    %855 = vmatmul.mubr.bf16.gmra.mrb[0].mxu0 %v679
    %v856 = vpop.f32.mrb[0].mxu0
    %v857 = vadd.f32 %v817, %v856
    %v858 = vpop.f32.mrb[0].mxu0
    %v859 = vpop.f32.mrb[0].mxu0
    %v860 = vpop.f32.mrb[0].mxu0
    %861 = vdwg.mxu0
    %v862 = vadd.f32 %v857, %v94
    %v863 = vmax.f32 %v862, 0.0
    %v864 = vpack.c.bf16 %v863, %v863
    %865 = vmatprep.subr.bf16.mxu0 0
    %866 = vmatpush1.bf16.msra.mxu0 %v410
    %867 = vmatprep.subr.bf16.mxu0 0
    %868 = vmatpush1.bf16.msra.mxu0 %v411
    %869 = vmatprep.subr.bf16.mxu0 0
    %870 = vmatpush1.bf16.msra.mxu0 0
    %871 = vmatprep.subr.bf16.mxu0 0
    %872 = vmatpush1.bf16.msra.mxu0 0
    %873 = vmatprep.subr.bf16.mxu0 0
    %874 = vmatpush1.bf16.msra.mxu0 0
    %875 = vmatprep.subr.bf16.mxu0 0
    %876 = vmatpush1.bf16.msra.mxu0 0
    %877 = vmatprep.subr.bf16.mxu0 0
    %878 = vmatpush1.bf16.msra.mxu0 0
    %879 = vmatprep.subr.bf16.mxu0 0
    %880 = vmatpush1.bf16.msra.mxu0 0
    %881 = vmatprep.subr.bf16.mxu0 0
    %882 = vmatpush1.bf16.msra.mxu0 0
    %883 = vmatprep.subr.bf16.mxu0 0
    %884 = vmatpush1.bf16.msra.mxu0 0
    %885 = vmatprep.subr.bf16.mxu0 0
    %886 = vmatpush1.bf16.msra.mxu0 0
    %887 = vmatprep.subr.bf16.mxu0 0
    %888 = vmatpush1.bf16.msra.mxu0 0
    %889 = vmatprep.subr.bf16.mxu0 0
    %890 = vmatpush1.bf16.msra.mxu0 0
    %891 = vmatprep.subr.bf16.mxu0 0
    %892 = vmatpush1.bf16.msra.mxu0 0
    %893 = vmatprep.subr.bf16.mxu0 0
    %894 = vmatpush1.bf16.msra.mxu0 0
    %895 = vmatprep.subr.bf16.mxu0 0
    %896 = vmatpush1.bf16.msra.mxu0 0
    %897 = vmatprep.mubr.bf16.mxu0 0
    %898 = vmatmul.mubr.bf16.gmra.mrb[0].mxu0 %v560
    %v899 = vpop.f32.mrb[0].mxu0
    %v900 = vadd.f32 0.0, %v899
    %v901 = vpop.f32.mrb[0].mxu0
    %v902 = vpop.f32.mrb[0].mxu0
    %v903 = vpop.f32.mrb[0].mxu0
    %904 = vdwg.mxu0
    %v906 = vsel %vm124, %v864, 0
    %908 = vmatprep.subr.bf16.mxu0 0
    %909 = vmatpush1.bf16.msra.mxu0 %v462
    %910 = vmatprep.subr.bf16.mxu0 0
    %911 = vmatpush1.bf16.msra.mxu0 %v463
    %912 = vmatprep.subr.bf16.mxu0 0
    %913 = vmatpush1.bf16.msra.mxu0 0
    %914 = vmatprep.subr.bf16.mxu0 0
    %915 = vmatpush1.bf16.msra.mxu0 0
    %916 = vmatprep.subr.bf16.mxu0 0
    %917 = vmatpush1.bf16.msra.mxu0 0
    %918 = vmatprep.subr.bf16.mxu0 0
    %919 = vmatpush1.bf16.msra.mxu0 0
    %920 = vmatprep.subr.bf16.mxu0 0
    %921 = vmatpush1.bf16.msra.mxu0 0
    %922 = vmatprep.subr.bf16.mxu0 0
    %923 = vmatpush1.bf16.msra.mxu0 0
    %924 = vmatprep.subr.bf16.mxu0 0
    %925 = vmatpush1.bf16.msra.mxu0 0
    %926 = vmatprep.subr.bf16.mxu0 0
    %927 = vmatpush1.bf16.msra.mxu0 0
    %928 = vmatprep.subr.bf16.mxu0 0
    %929 = vmatpush1.bf16.msra.mxu0 0
    %930 = vmatprep.subr.bf16.mxu0 0
    %931 = vmatpush1.bf16.msra.mxu0 0
    %932 = vmatprep.subr.bf16.mxu0 0
    %933 = vmatpush1.bf16.msra.mxu0 0
    %934 = vmatprep.subr.bf16.mxu0 0
    %935 = vmatpush1.bf16.msra.mxu0 0
    %936 = vmatprep.subr.bf16.mxu0 0
    %937 = vmatpush1.bf16.msra.mxu0 0
    %938 = vmatprep.subr.bf16.mxu0 0
    %939 = vmatpush1.bf16.msra.mxu0 0
    %940 = vmatprep.mubr.bf16.mxu0 0
    %941 = vmatmul.mubr.bf16.gmra.mrb[0].mxu0 %v906
    %v942 = vpop.f32.mrb[0].mxu0
    %v943 = vadd.f32 %v900, %v942
    %v944 = vpop.f32.mrb[0].mxu0
    %v945 = vpop.f32.mrb[0].mxu0
    %v946 = vpop.f32.mrb[0].mxu0
    %947 = vdwg.mxu0
    %v948 = vadd.f32 %v943, %v103
    %v949 = vxor.u32 %v948, 2147483648
    %v950 = vmul.f32 %v949, 1.442695
    %v951 = vpow.pop %v950
    %v952 = vadd.f32 %v951, 1.0
    %v953 = vrcp.pop %v952
    %v954 = vmul.f32 1.0, %v953
    %956 = vrot.lane.b32.xlu0 %v948, 32
    %v957 = vpop.permute.xlu0 %956
    %v959 = vmul.f32 %v954, %v957
    %961 = vrot.lane.b32.xlu0 %v959, 64
    %v962 = vpop.permute.xlu0 %961
    %v964 = vadd.f32 %v948, %v962
    %v965 = vtanh.pop %v964
    %v966 = vsub.f32 1.0, %v954
    %968 = vrot.lane.b32.xlu0 %v965, 96
    %v969 = vpop.permute.xlu0 %968
    %v971 = vmul.f32 %v966, %v969
    %v972 = vmul.f32 %v954, %v542
    %v973 = vadd.f32 %v971, %v972
    %v974 = vpack.c.bf16 %v973, %v973
    %976 = vrot.lane.b32.xlu0 %v974, 96
    %v977 = vpop.permute.xlu0 %976
    %v979 = vsel %vm124, %v977, 0
    %981 = vmatprep.subr.bf16.mxu0 0
    %982 = vmatpush1.bf16.msra.mxu0 %v555
    %983 = vmatprep.subr.bf16.mxu0 0
    %984 = vmatpush1.bf16.msra.mxu0 %v556
    %985 = vmatprep.subr.bf16.mxu0 0
    %986 = vmatpush1.bf16.msra.mxu0 0
    %987 = vmatprep.subr.bf16.mxu0 0
    %988 = vmatpush1.bf16.msra.mxu0 0
    %989 = vmatprep.subr.bf16.mxu0 0
    %990 = vmatpush1.bf16.msra.mxu0 0
    %991 = vmatprep.subr.bf16.mxu0 0
    %992 = vmatpush1.bf16.msra.mxu0 0
    %993 = vmatprep.subr.bf16.mxu0 0
    %994 = vmatpush1.bf16.msra.mxu0 0
    %995 = vmatprep.subr.bf16.mxu0 0
    %996 = vmatpush1.bf16.msra.mxu0 0
    %997 = vmatprep.subr.bf16.mxu0 0
    %998 = vmatpush1.bf16.msra.mxu0 0
    %999 = vmatprep.subr.bf16.mxu0 0
    %1000 = vmatpush1.bf16.msra.mxu0 0
    %1001 = vmatprep.subr.bf16.mxu0 0
    %1002 = vmatpush1.bf16.msra.mxu0 0
    %1003 = vmatprep.subr.bf16.mxu0 0
    %1004 = vmatpush1.bf16.msra.mxu0 0
    %1005 = vmatprep.subr.bf16.mxu0 0
    %1006 = vmatpush1.bf16.msra.mxu0 0
    %1007 = vmatprep.subr.bf16.mxu0 0
    %1008 = vmatpush1.bf16.msra.mxu0 0
    %1009 = vmatprep.subr.bf16.mxu0 0
    %1010 = vmatpush1.bf16.msra.mxu0 0
    %1011 = vmatprep.subr.bf16.mxu0 0
    %1012 = vmatpush1.bf16.msra.mxu0 0
    %1013 = vmatprep.mubr.bf16.mxu0 0
    %1014 = vmatmul.mubr.bf16.gmra.mrb[0].mxu0 %v979
    %v1015 = vpop.f32.mrb[0].mxu0
    %v1016 = vadd.f32 %v108, %v1015
    %v1017 = vpop.f32.mrb[0].mxu0
    %v1018 = vpop.f32.mrb[0].mxu0
    %v1019 = vpop.f32.mrb[0].mxu0
    %1020 = vdwg.mxu0
    %v1021 = vsel %vm602, %v1016, -inf
    %1022 = vmax.xlane.f32.xlu0 %v1021
    %v1023 = vpop.xlane.xlu0 %1022
    %v1024 = vsub.f32 %v1016, %v1023
    %v1025 = vmul.f32 %v1024, 1.442695
    %v1026 = vpow.pop %v1025
    %v1027 = vsel %vm602, %v1026, 0.0
    %1028 = vadd.xlane.f32.xlu0 %v1027
    %v1029 = vpop.xlane.xlu0 %1028
    %v1030 = vlog2.pop %v1029
    %v1031 = vmul.f32 %v1030, 0.6931472
    %v1032 = vadd.f32 %v1031, %v1023
    %v1033 = vsub.f32 %v1016, %v1032
    %1035 = vrot.lane.b32.xlu0 %v973, 112
    %v1036 = vpop.permute.xlu0 %1035
    %1039 = vrot.lane.b32.xlu0 %v732, 48
    %v1040 = vpop.permute.xlu0 %1039
    %v1042 = vsel %vm624, %v1033, %v1036
    %v1043 = vsel %vm626, %v1042, %v1040
    %v1044 = vsel %vm628, %v1043, 0.0
    %1045 = vst [vmem:[#allocation7 + $0x1] sm:$0x1] %v1044
    %v1046 = vld [vmem:[#allocation2] sm:$0x2]
    %1047 = vmatprep.subr.bf16.mxu0 0
    %1048 = vmatpush1.bf16.msra.mxu0 %v120
    %1049 = vmatprep.subr.bf16.mxu0 0
    %1050 = vmatpush1.bf16.msra.mxu0 %v121
    %1051 = vmatprep.subr.bf16.mxu0 0
    %1052 = vmatpush1.bf16.msra.mxu0 0
    %1053 = vmatprep.subr.bf16.mxu0 0
    %1054 = vmatpush1.bf16.msra.mxu0 0
    %1055 = vmatprep.subr.bf16.mxu0 0
    %1056 = vmatpush1.bf16.msra.mxu0 0
    %1057 = vmatprep.subr.bf16.mxu0 0
    %1058 = vmatpush1.bf16.msra.mxu0 0
    %1059 = vmatprep.subr.bf16.mxu0 0
    %1060 = vmatpush1.bf16.msra.mxu0 0
    %1061 = vmatprep.subr.bf16.mxu0 0
    %1062 = vmatpush1.bf16.msra.mxu0 0
    %1063 = vmatprep.subr.bf16.mxu0 0
    %1064 = vmatpush1.bf16.msra.mxu0 0
    %1065 = vmatprep.subr.bf16.mxu0 0
    %1066 = vmatpush1.bf16.msra.mxu0 0
    %1067 = vmatprep.subr.bf16.mxu0 0
    %1068 = vmatpush1.bf16.msra.mxu0 0
    %1069 = vmatprep.subr.bf16.mxu0 0
    %1070 = vmatpush1.bf16.msra.mxu0 0
    %1071 = vmatprep.subr.bf16.mxu0 0
    %1072 = vmatpush1.bf16.msra.mxu0 0
    %1073 = vmatprep.subr.bf16.mxu0 0
    %1074 = vmatpush1.bf16.msra.mxu0 0
    %1075 = vmatprep.subr.bf16.mxu0 0
    %1076 = vmatpush1.bf16.msra.mxu0 0
    %1077 = vmatprep.subr.bf16.mxu0 0
    %1078 = vmatpush1.bf16.msra.mxu0 0
    %1079 = vmatprep.mubr.bf16.mxu0 0
    %1080 = vmatmul.mubr.bf16.gmra.mrb[0].mxu0 %v979
    %v1081 = vpop.f32.mrb[0].mxu0
    %v1082 = vadd.f32 0.0, %v1081
    %v1083 = vpop.f32.mrb[0].mxu0
    %v1084 = vpop.f32.mrb[0].mxu0
    %v1085 = vpop.f32.mrb[0].mxu0
    %1086 = vdwg.mxu0
    %v1088 = vunpack.c.l.b16 %v1046
    %v1089 = vpack.c.b16 %v1088, %v1088
    %v1090 = vrot.slane %v1089, 1
    %v1092 = vsel %vm124, %v1090, 0
    %1094 = vmatprep.subr.bf16.mxu0 0
    %1095 = vmatpush1.bf16.msra.mxu0 %v176
    %1096 = vmatprep.subr.bf16.mxu0 0
    %1097 = vmatpush1.bf16.msra.mxu0 %v177
    %1098 = vmatprep.subr.bf16.mxu0 0
    %1099 = vmatpush1.bf16.msra.mxu0 0
    %1100 = vmatprep.subr.bf16.mxu0 0
    %1101 = vmatpush1.bf16.msra.mxu0 0
    %1102 = vmatprep.subr.bf16.mxu0 0
    %1103 = vmatpush1.bf16.msra.mxu0 0
    %1104 = vmatprep.subr.bf16.mxu0 0
    %1105 = vmatpush1.bf16.msra.mxu0 0
    %1106 = vmatprep.subr.bf16.mxu0 0
    %1107 = vmatpush1.bf16.msra.mxu0 0
    %1108 = vmatprep.subr.bf16.mxu0 0
    %1109 = vmatpush1.bf16.msra.mxu0 0
    %1110 = vmatprep.subr.bf16.mxu0 0
    %1111 = vmatpush1.bf16.msra.mxu0 0
    %1112 = vmatprep.subr.bf16.mxu0 0
    %1113 = vmatpush1.bf16.msra.mxu0 0
    %1114 = vmatprep.subr.bf16.mxu0 0
    %1115 = vmatpush1.bf16.msra.mxu0 0
    %1116 = vmatprep.subr.bf16.mxu0 0
    %1117 = vmatpush1.bf16.msra.mxu0 0
    %1118 = vmatprep.subr.bf16.mxu0 0
    %1119 = vmatpush1.bf16.msra.mxu0 0
    %1120 = vmatprep.subr.bf16.mxu0 0
    %1121 = vmatpush1.bf16.msra.mxu0 0
    %1122 = vmatprep.subr.bf16.mxu0 0
    %1123 = vmatpush1.bf16.msra.mxu0 0
    %1124 = vmatprep.subr.bf16.mxu0 0
    %1125 = vmatpush1.bf16.msra.mxu0 0
    %1126 = vmatprep.mubr.bf16.mxu0 0
    %1127 = vmatmul.mubr.bf16.gmra.mrb[0].mxu0 %v1092
    %v1128 = vpop.f32.mrb[0].mxu0
    %v1129 = vadd.f32 %v1082, %v1128
    %v1130 = vpop.f32.mrb[0].mxu0
    %v1131 = vpop.f32.mrb[0].mxu0
    %v1132 = vpop.f32.mrb[0].mxu0
    %1133 = vdwg.mxu0
    %v1134 = vadd.f32 %v1129, %v85
    %v1135 = vsel %vm224, %v1134, -inf
    %1136 = vmax.xlane.f32.xlu0 %v1135
    %v1137 = vpop.xlane.xlu0 %1136
    %v1138 = vsub.f32 %v1134, %v1137
    %v1139 = vmul.f32 %v1138, 1.442695
    %v1140 = vpow.pop %v1139
    %v1141 = vsel %vm224, %v1140, 0.0
    %1142 = vadd.xlane.f32.xlu0 %v1141
    %v1143 = vpop.xlane.xlu0 %1142
    %v1144 = vrcp.pop %v1143
    %v1145 = vmul.f32 %v1140, %v1144
    %v1146 = vpack.c.bf16 %v1140, %v1140
    %v1148 = vsel %vm242, %v1146, 0
    %1150 = vmatprep.subr.bf16.mxu0 0
    %1151 = vmatpush1.bf16.msra.mxu0 %v248
    %1152 = vmatprep.subr.bf16.mxu0 0
    %1153 = vmatpush1.bf16.msra.mxu0 0
    %1154 = vmatprep.subr.bf16.mxu0 0
    %1155 = vmatpush1.bf16.msra.mxu0 0
    %1156 = vmatprep.subr.bf16.mxu0 0
    %1157 = vmatpush1.bf16.msra.mxu0 0
    %1158 = vmatprep.subr.bf16.mxu0 0
    %1159 = vmatpush1.bf16.msra.mxu0 0
    %1160 = vmatprep.subr.bf16.mxu0 0
    %1161 = vmatpush1.bf16.msra.mxu0 0
    %1162 = vmatprep.subr.bf16.mxu0 0
    %1163 = vmatpush1.bf16.msra.mxu0 0
    %1164 = vmatprep.subr.bf16.mxu0 0
    %1165 = vmatpush1.bf16.msra.mxu0 0
    %1166 = vmatprep.subr.bf16.mxu0 0
    %1167 = vmatpush1.bf16.msra.mxu0 0
    %1168 = vmatprep.subr.bf16.mxu0 0
    %1169 = vmatpush1.bf16.msra.mxu0 0
    %1170 = vmatprep.subr.bf16.mxu0 0
    %1171 = vmatpush1.bf16.msra.mxu0 0
    %1172 = vmatprep.subr.bf16.mxu0 0
    %1173 = vmatpush1.bf16.msra.mxu0 0
    %1174 = vmatprep.subr.bf16.mxu0 0
    %1175 = vmatpush1.bf16.msra.mxu0 0
    %1176 = vmatprep.subr.bf16.mxu0 0
    %1177 = vmatpush1.bf16.msra.mxu0 0
    %1178 = vmatprep.subr.bf16.mxu0 0
    %1179 = vmatpush1.bf16.msra.mxu0 0
    %1180 = vmatprep.subr.bf16.mxu0 0
    %1181 = vmatpush1.bf16.msra.mxu0 0
    %1182 = vmatprep.mubr.bf16.mxu0 0
    %1183 = vmatmul.mubr.bf16.gmra.mrb[0].mxu0 %v1148
    %v1184 = vpop.f32.mrb[0].mxu0
    %v1185 = vadd.f32 0.0, %v1184
    %v1186 = vpop.f32.mrb[0].mxu0
    %v1187 = vpop.f32.mrb[0].mxu0
    %v1188 = vpop.f32.mrb[0].mxu0
    %1189 = vdwg.mxu0
    %v1190 = vmul.f32 %v1185, %v1144
    %v1191 = vpack.c.bf16 %v1190, %v1190
    %v1193 = vsel %vm124, %v1191, 0
    %1195 = vmatprep.subr.bf16.mxu0 0
    %1196 = vmatpush1.bf16.msra.mxu0 %v300
    %1197 = vmatprep.subr.bf16.mxu0 0
    %1198 = vmatpush1.bf16.msra.mxu0 %v301
    %1199 = vmatprep.subr.bf16.mxu0 0
    %1200 = vmatpush1.bf16.msra.mxu0 0
    %1201 = vmatprep.subr.bf16.mxu0 0
    %1202 = vmatpush1.bf16.msra.mxu0 0
    %1203 = vmatprep.subr.bf16.mxu0 0
    %1204 = vmatpush1.bf16.msra.mxu0 0
    %1205 = vmatprep.subr.bf16.mxu0 0
    %1206 = vmatpush1.bf16.msra.mxu0 0
    %1207 = vmatprep.subr.bf16.mxu0 0
    %1208 = vmatpush1.bf16.msra.mxu0 0
    %1209 = vmatprep.subr.bf16.mxu0 0
    %1210 = vmatpush1.bf16.msra.mxu0 0
    %1211 = vmatprep.subr.bf16.mxu0 0
    %1212 = vmatpush1.bf16.msra.mxu0 0
    %1213 = vmatprep.subr.bf16.mxu0 0
    %1214 = vmatpush1.bf16.msra.mxu0 0
    %1215 = vmatprep.subr.bf16.mxu0 0
    %1216 = vmatpush1.bf16.msra.mxu0 0
    %1217 = vmatprep.subr.bf16.mxu0 0
    %1218 = vmatpush1.bf16.msra.mxu0 0
    %1219 = vmatprep.subr.bf16.mxu0 0
    %1220 = vmatpush1.bf16.msra.mxu0 0
    %1221 = vmatprep.subr.bf16.mxu0 0
    %1222 = vmatpush1.bf16.msra.mxu0 0
    %1223 = vmatprep.subr.bf16.mxu0 0
    %1224 = vmatpush1.bf16.msra.mxu0 0
    %1225 = vmatprep.subr.bf16.mxu0 0
    %1226 = vmatpush1.bf16.msra.mxu0 0
    %1227 = vmatprep.mubr.bf16.mxu0 0
    %1228 = vmatmul.mubr.bf16.gmra.mrb[0].mxu0 %v1193
    %v1229 = vpop.f32.mrb[0].mxu0
    %v1230 = vadd.f32 0.0, %v1229
    %v1231 = vpop.f32.mrb[0].mxu0
    %v1232 = vpop.f32.mrb[0].mxu0
    %v1233 = vpop.f32.mrb[0].mxu0
    %1234 = vdwg.mxu0
    %1235 = vmatprep.subr.bf16.mxu0 0
    %1236 = vmatpush1.bf16.msra.mxu0 %v355
    %1237 = vmatprep.subr.bf16.mxu0 0
    %1238 = vmatpush1.bf16.msra.mxu0 %v356
    %1239 = vmatprep.subr.bf16.mxu0 0
    %1240 = vmatpush1.bf16.msra.mxu0 0
    %1241 = vmatprep.subr.bf16.mxu0 0
    %1242 = vmatpush1.bf16.msra.mxu0 0
    %1243 = vmatprep.subr.bf16.mxu0 0
    %1244 = vmatpush1.bf16.msra.mxu0 0
    %1245 = vmatprep.subr.bf16.mxu0 0
    %1246 = vmatpush1.bf16.msra.mxu0 0
    %1247 = vmatprep.subr.bf16.mxu0 0
    %1248 = vmatpush1.bf16.msra.mxu0 0
    %1249 = vmatprep.subr.bf16.mxu0 0
    %1250 = vmatpush1.bf16.msra.mxu0 0
    %1251 = vmatprep.subr.bf16.mxu0 0
    %1252 = vmatpush1.bf16.msra.mxu0 0
    %1253 = vmatprep.subr.bf16.mxu0 0
    %1254 = vmatpush1.bf16.msra.mxu0 0
    %1255 = vmatprep.subr.bf16.mxu0 0
    %1256 = vmatpush1.bf16.msra.mxu0 0
    %1257 = vmatprep.subr.bf16.mxu0 0
    %1258 = vmatpush1.bf16.msra.mxu0 0
    %1259 = vmatprep.subr.bf16.mxu0 0
    %1260 = vmatpush1.bf16.msra.mxu0 0
    %1261 = vmatprep.subr.bf16.mxu0 0
    %1262 = vmatpush1.bf16.msra.mxu0 0
    %1263 = vmatprep.subr.bf16.mxu0 0
    %1264 = vmatpush1.bf16.msra.mxu0 0
    %1265 = vmatprep.subr.bf16.mxu0 0
    %1266 = vmatpush1.bf16.msra.mxu0 0
    %1267 = vmatprep.mubr.bf16.mxu0 0
    %1268 = vmatmul.mubr.bf16.gmra.mrb[0].mxu0 %v1092
    %v1269 = vpop.f32.mrb[0].mxu0
    %v1270 = vadd.f32 %v1230, %v1269
    %v1271 = vpop.f32.mrb[0].mxu0
    %v1272 = vpop.f32.mrb[0].mxu0
    %v1273 = vpop.f32.mrb[0].mxu0
    %1274 = vdwg.mxu0
    %v1275 = vadd.f32 %v1270, %v94
    %v1276 = vmax.f32 %v1275, 0.0
    %v1277 = vpack.c.bf16 %v1276, %v1276
    %1278 = vmatprep.subr.bf16.mxu0 0
    %1279 = vmatpush1.bf16.msra.mxu0 %v410
    %1280 = vmatprep.subr.bf16.mxu0 0
    %1281 = vmatpush1.bf16.msra.mxu0 %v411
    %1282 = vmatprep.subr.bf16.mxu0 0
    %1283 = vmatpush1.bf16.msra.mxu0 0
    %1284 = vmatprep.subr.bf16.mxu0 0
    %1285 = vmatpush1.bf16.msra.mxu0 0
    %1286 = vmatprep.subr.bf16.mxu0 0
    %1287 = vmatpush1.bf16.msra.mxu0 0
    %1288 = vmatprep.subr.bf16.mxu0 0
    %1289 = vmatpush1.bf16.msra.mxu0 0
    %1290 = vmatprep.subr.bf16.mxu0 0
    %1291 = vmatpush1.bf16.msra.mxu0 0
    %1292 = vmatprep.subr.bf16.mxu0 0
    %1293 = vmatpush1.bf16.msra.mxu0 0
    %1294 = vmatprep.subr.bf16.mxu0 0
    %1295 = vmatpush1.bf16.msra.mxu0 0
    %1296 = vmatprep.subr.bf16.mxu0 0
    %1297 = vmatpush1.bf16.msra.mxu0 0
    %1298 = vmatprep.subr.bf16.mxu0 0
    %1299 = vmatpush1.bf16.msra.mxu0 0
    %1300 = vmatprep.subr.bf16.mxu0 0
    %1301 = vmatpush1.bf16.msra.mxu0 0
    %1302 = vmatprep.subr.bf16.mxu0 0
    %1303 = vmatpush1.bf16.msra.mxu0 0
    %1304 = vmatprep.subr.bf16.mxu0 0
    %1305 = vmatpush1.bf16.msra.mxu0 0
    %1306 = vmatprep.subr.bf16.mxu0 0
    %1307 = vmatpush1.bf16.msra.mxu0 0
    %1308 = vmatprep.subr.bf16.mxu0 0
    %1309 = vmatpush1.bf16.msra.mxu0 0
    %1310 = vmatprep.mubr.bf16.mxu0 0
    %1311 = vmatmul.mubr.bf16.gmra.mrb[0].mxu0 %v979
    %v1312 = vpop.f32.mrb[0].mxu0
    %v1313 = vadd.f32 0.0, %v1312
    %v1314 = vpop.f32.mrb[0].mxu0
    %v1315 = vpop.f32.mrb[0].mxu0
    %v1316 = vpop.f32.mrb[0].mxu0
    %1317 = vdwg.mxu0
    %v1319 = vsel %vm124, %v1277, 0
    %1321 = vmatprep.subr.bf16.mxu0 0
    %1322 = vmatpush1.bf16.msra.mxu0 %v462
    %1323 = vmatprep.subr.bf16.mxu0 0
    %1324 = vmatpush1.bf16.msra.mxu0 %v463
    %1325 = vmatprep.subr.bf16.mxu0 0
    %1326 = vmatpush1.bf16.msra.mxu0 0
    %1327 = vmatprep.subr.bf16.mxu0 0
    %1328 = vmatpush1.bf16.msra.mxu0 0
    %1329 = vmatprep.subr.bf16.mxu0 0
    %1330 = vmatpush1.bf16.msra.mxu0 0
    %1331 = vmatprep.subr.bf16.mxu0 0
    %1332 = vmatpush1.bf16.msra.mxu0 0
    %1333 = vmatprep.subr.bf16.mxu0 0
    %1334 = vmatpush1.bf16.msra.mxu0 0
    %1335 = vmatprep.subr.bf16.mxu0 0
    %1336 = vmatpush1.bf16.msra.mxu0 0
    %1337 = vmatprep.subr.bf16.mxu0 0
    %1338 = vmatpush1.bf16.msra.mxu0 0
    %1339 = vmatprep.subr.bf16.mxu0 0
    %1340 = vmatpush1.bf16.msra.mxu0 0
    %1341 = vmatprep.subr.bf16.mxu0 0
    %1342 = vmatpush1.bf16.msra.mxu0 0
    %1343 = vmatprep.subr.bf16.mxu0 0
    %1344 = vmatpush1.bf16.msra.mxu0 0
    %1345 = vmatprep.subr.bf16.mxu0 0
    %1346 = vmatpush1.bf16.msra.mxu0 0
    %1347 = vmatprep.subr.bf16.mxu0 0
    %1348 = vmatpush1.bf16.msra.mxu0 0
    %1349 = vmatprep.subr.bf16.mxu0 0
    %1350 = vmatpush1.bf16.msra.mxu0 0
    %1351 = vmatprep.subr.bf16.mxu0 0
    %1352 = vmatpush1.bf16.msra.mxu0 0
    %1353 = vmatprep.mubr.bf16.mxu0 0
    %1354 = vmatmul.mubr.bf16.gmra.mrb[0].mxu0 %v1319
    %v1355 = vpop.f32.mrb[0].mxu0
    %v1356 = vadd.f32 %v1313, %v1355
    %v1357 = vpop.f32.mrb[0].mxu0
    %v1358 = vpop.f32.mrb[0].mxu0
    %v1359 = vpop.f32.mrb[0].mxu0
    %1360 = vdwg.mxu0
    %v1361 = vadd.f32 %v1356, %v103
    %v1362 = vxor.u32 %v1361, 2147483648
    %v1363 = vmul.f32 %v1362, 1.442695
    %v1364 = vpow.pop %v1363
    %v1365 = vadd.f32 %v1364, 1.0
    %v1366 = vrcp.pop %v1365
    %v1367 = vmul.f32 1.0, %v1366
    %1369 = vrot.lane.b32.xlu0 %v1361, 32
    %v1370 = vpop.permute.xlu0 %1369
    %v1372 = vmul.f32 %v1367, %v1370
    %1374 = vrot.lane.b32.xlu0 %v1372, 64
    %v1375 = vpop.permute.xlu0 %1374
    %v1377 = vadd.f32 %v1361, %v1375
    %v1378 = vtanh.pop %v1377
    %v1379 = vsub.f32 1.0, %v1367
    %1381 = vrot.lane.b32.xlu0 %v1378, 96
    %v1382 = vpop.permute.xlu0 %1381
    %v1384 = vmul.f32 %v1379, %v1382
    %v1385 = vmul.f32 %v1367, %v973
    %v1386 = vadd.f32 %v1384, %v1385
    %v1387 = vpack.c.bf16 %v1386, %v1386
    %1389 = vrot.lane.b32.xlu0 %v1387, 96
    %v1390 = vpop.permute.xlu0 %1389
    %v1392 = vsel %vm124, %v1390, 0
    %1394 = vmatprep.subr.bf16.mxu0 0
    %1395 = vmatpush1.bf16.msra.mxu0 %v555
    %1396 = vmatprep.subr.bf16.mxu0 0
    %1397 = vmatpush1.bf16.msra.mxu0 %v556
    %1398 = vmatprep.subr.bf16.mxu0 0
    %1399 = vmatpush1.bf16.msra.mxu0 0
    %1400 = vmatprep.subr.bf16.mxu0 0
    %1401 = vmatpush1.bf16.msra.mxu0 0
    %1402 = vmatprep.subr.bf16.mxu0 0
    %1403 = vmatpush1.bf16.msra.mxu0 0
    %1404 = vmatprep.subr.bf16.mxu0 0
    %1405 = vmatpush1.bf16.msra.mxu0 0
    %1406 = vmatprep.subr.bf16.mxu0 0
    %1407 = vmatpush1.bf16.msra.mxu0 0
    %1408 = vmatprep.subr.bf16.mxu0 0
    %1409 = vmatpush1.bf16.msra.mxu0 0
    %1410 = vmatprep.subr.bf16.mxu0 0
    %1411 = vmatpush1.bf16.msra.mxu0 0
    %1412 = vmatprep.subr.bf16.mxu0 0
    %1413 = vmatpush1.bf16.msra.mxu0 0
    %1414 = vmatprep.subr.bf16.mxu0 0
    %1415 = vmatpush1.bf16.msra.mxu0 0
    %1416 = vmatprep.subr.bf16.mxu0 0
    %1417 = vmatpush1.bf16.msra.mxu0 0
    %1418 = vmatprep.subr.bf16.mxu0 0
    %1419 = vmatpush1.bf16.msra.mxu0 0
    %1420 = vmatprep.subr.bf16.mxu0 0
    %1421 = vmatpush1.bf16.msra.mxu0 0
    %1422 = vmatprep.subr.bf16.mxu0 0
    %1423 = vmatpush1.bf16.msra.mxu0 0
    %1424 = vmatprep.subr.bf16.mxu0 0
    %1425 = vmatpush1.bf16.msra.mxu0 0
    %1426 = vmatprep.mubr.bf16.mxu0 0
    %1427 = vmatmul.mubr.bf16.gmra.mrb[0].mxu0 %v1392
    %v1428 = vpop.f32.mrb[0].mxu0
    %v1429 = vadd.f32 %v108, %v1428
    %v1430 = vpop.f32.mrb[0].mxu0
    %v1431 = vpop.f32.mrb[0].mxu0
    %v1432 = vpop.f32.mrb[0].mxu0
    %1433 = vdwg.mxu0
    %v1434 = vsel %vm602, %v1429, -inf
    %1435 = vmax.xlane.f32.xlu0 %v1434
    %v1436 = vpop.xlane.xlu0 %1435
    %v1437 = vsub.f32 %v1429, %v1436
    %v1438 = vmul.f32 %v1437, 1.442695
    %v1439 = vpow.pop %v1438
    %v1440 = vsel %vm602, %v1439, 0.0
    %1441 = vadd.xlane.f32.xlu0 %v1440
    %v1442 = vpop.xlane.xlu0 %1441
    %v1443 = vlog2.pop %v1442
    %v1444 = vmul.f32 %v1443, 0.6931472
    %v1445 = vadd.f32 %v1444, %v1436
    %v1446 = vsub.f32 %v1429, %v1445
    %1448 = vrot.lane.b32.xlu0 %v1386, 112
    %v1449 = vpop.permute.xlu0 %1448
    %1452 = vrot.lane.b32.xlu0 %v1145, 48
    %v1453 = vpop.permute.xlu0 %1452
    %v1455 = vsel %vm624, %v1446, %v1449
    %v1456 = vsel %vm626, %v1455, %v1453
    %v1457 = vsel %vm628, %v1456, 0.0
    %1458 = vst [vmem:[#allocation7 + $0x2] sm:$0x1] %v1457
    %v1459 = vld [vmem:[#allocation2] sm:$0x2]
    %1460 = vmatprep.subr.bf16.mxu0 0
    %1461 = vmatpush1.bf16.msra.mxu0 %v120
    %1462 = vmatprep.subr.bf16.mxu0 0
    %1463 = vmatpush1.bf16.msra.mxu0 %v121
    %1464 = vmatprep.subr.bf16.mxu0 0
    %1465 = vmatpush1.bf16.msra.mxu0 0
    %1466 = vmatprep.subr.bf16.mxu0 0
    %1467 = vmatpush1.bf16.msra.mxu0 0
    %1468 = vmatprep.subr.bf16.mxu0 0
    %1469 = vmatpush1.bf16.msra.mxu0 0
    %1470 = vmatprep.subr.bf16.mxu0 0
    %1471 = vmatpush1.bf16.msra.mxu0 0
    %1472 = vmatprep.subr.bf16.mxu0 0
    %1473 = vmatpush1.bf16.msra.mxu0 0
    %1474 = vmatprep.subr.bf16.mxu0 0
    %1475 = vmatpush1.bf16.msra.mxu0 0
    %1476 = vmatprep.subr.bf16.mxu0 0
    %1477 = vmatpush1.bf16.msra.mxu0 0
    %1478 = vmatprep.subr.bf16.mxu0 0
    %1479 = vmatpush1.bf16.msra.mxu0 0
    %1480 = vmatprep.subr.bf16.mxu0 0
    %1481 = vmatpush1.bf16.msra.mxu0 0
    %1482 = vmatprep.subr.bf16.mxu0 0
    %1483 = vmatpush1.bf16.msra.mxu0 0
    %1484 = vmatprep.subr.bf16.mxu0 0
    %1485 = vmatpush1.bf16.msra.mxu0 0
    %1486 = vmatprep.subr.bf16.mxu0 0
    %1487 = vmatpush1.bf16.msra.mxu0 0
    %1488 = vmatprep.subr.bf16.mxu0 0
    %1489 = vmatpush1.bf16.msra.mxu0 0
    %1490 = vmatprep.subr.bf16.mxu0 0
    %1491 = vmatpush1.bf16.msra.mxu0 0
    %1492 = vmatprep.mubr.bf16.mxu0 0
    %1493 = vmatmul.mubr.bf16.gmra.mrb[0].mxu0 %v1392
    %v1494 = vpop.f32.mrb[0].mxu0
    %v1495 = vadd.f32 0.0, %v1494
    %v1496 = vpop.f32.mrb[0].mxu0
    %v1497 = vpop.f32.mrb[0].mxu0
    %v1498 = vpop.f32.mrb[0].mxu0
    %1499 = vdwg.mxu0
    %v1501 = vunpack.c.l.b16 %v1459
    %v1502 = vpack.c.b16 %v1501, %v1501
    %v1504 = vshrl.u32 %v1502, 16
    %v1506 = vrot.slane %v1504, 1
    %v1508 = vsel %vm124, %v1506, 0
    %1510 = vmatprep.subr.bf16.mxu0 0
    %1511 = vmatpush1.bf16.msra.mxu0 %v176
    %1512 = vmatprep.subr.bf16.mxu0 0
    %1513 = vmatpush1.bf16.msra.mxu0 %v177
    %1514 = vmatprep.subr.bf16.mxu0 0
    %1515 = vmatpush1.bf16.msra.mxu0 0
    %1516 = vmatprep.subr.bf16.mxu0 0
    %1517 = vmatpush1.bf16.msra.mxu0 0
    %1518 = vmatprep.subr.bf16.mxu0 0
    %1519 = vmatpush1.bf16.msra.mxu0 0
    %1520 = vmatprep.subr.bf16.mxu0 0
    %1521 = vmatpush1.bf16.msra.mxu0 0
    %1522 = vmatprep.subr.bf16.mxu0 0
    %1523 = vmatpush1.bf16.msra.mxu0 0
    %1524 = vmatprep.subr.bf16.mxu0 0
    %1525 = vmatpush1.bf16.msra.mxu0 0
    %1526 = vmatprep.subr.bf16.mxu0 0
    %1527 = vmatpush1.bf16.msra.mxu0 0
    %1528 = vmatprep.subr.bf16.mxu0 0
    %1529 = vmatpush1.bf16.msra.mxu0 0
    %1530 = vmatprep.subr.bf16.mxu0 0
    %1531 = vmatpush1.bf16.msra.mxu0 0
    %1532 = vmatprep.subr.bf16.mxu0 0
    %1533 = vmatpush1.bf16.msra.mxu0 0
    %1534 = vmatprep.subr.bf16.mxu0 0
    %1535 = vmatpush1.bf16.msra.mxu0 0
    %1536 = vmatprep.subr.bf16.mxu0 0
    %1537 = vmatpush1.bf16.msra.mxu0 0
    %1538 = vmatprep.subr.bf16.mxu0 0
    %1539 = vmatpush1.bf16.msra.mxu0 0
    %1540 = vmatprep.subr.bf16.mxu0 0
    %1541 = vmatpush1.bf16.msra.mxu0 0
    %1542 = vmatprep.mubr.bf16.mxu0 0
    %1543 = vmatmul.mubr.bf16.gmra.mrb[0].mxu0 %v1508
    %v1544 = vpop.f32.mrb[0].mxu0
    %v1545 = vadd.f32 %v1495, %v1544
    %v1546 = vpop.f32.mrb[0].mxu0
    %v1547 = vpop.f32.mrb[0].mxu0
    %v1548 = vpop.f32.mrb[0].mxu0
    %1549 = vdwg.mxu0
    %v1550 = vadd.f32 %v1545, %v85
    %v1551 = vsel %vm224, %v1550, -inf
    %1552 = vmax.xlane.f32.xlu0 %v1551
    %v1553 = vpop.xlane.xlu0 %1552
    %v1554 = vsub.f32 %v1550, %v1553
    %v1555 = vmul.f32 %v1554, 1.442695
    %v1556 = vpow.pop %v1555
    %v1557 = vsel %vm224, %v1556, 0.0
    %1558 = vadd.xlane.f32.xlu0 %v1557
    %v1559 = vpop.xlane.xlu0 %1558
    %v1560 = vrcp.pop %v1559
    %v1561 = vmul.f32 %v1556, %v1560
    %v1562 = vpack.c.bf16 %v1556, %v1556
    %v1564 = vsel %vm242, %v1562, 0
    %1566 = vmatprep.subr.bf16.mxu0 0
    %1567 = vmatpush1.bf16.msra.mxu0 %v248
    %1568 = vmatprep.subr.bf16.mxu0 0
    %1569 = vmatpush1.bf16.msra.mxu0 0
    %1570 = vmatprep.subr.bf16.mxu0 0
    %1571 = vmatpush1.bf16.msra.mxu0 0
    %1572 = vmatprep.subr.bf16.mxu0 0
    %1573 = vmatpush1.bf16.msra.mxu0 0
    %1574 = vmatprep.subr.bf16.mxu0 0
    %1575 = vmatpush1.bf16.msra.mxu0 0
    %1576 = vmatprep.subr.bf16.mxu0 0
    %1577 = vmatpush1.bf16.msra.mxu0 0
    %1578 = vmatprep.subr.bf16.mxu0 0
    %1579 = vmatpush1.bf16.msra.mxu0 0
    %1580 = vmatprep.subr.bf16.mxu0 0
    %1581 = vmatpush1.bf16.msra.mxu0 0
    %1582 = vmatprep.subr.bf16.mxu0 0
    %1583 = vmatpush1.bf16.msra.mxu0 0
    %1584 = vmatprep.subr.bf16.mxu0 0
    %1585 = vmatpush1.bf16.msra.mxu0 0
    %1586 = vmatprep.subr.bf16.mxu0 0
    %1587 = vmatpush1.bf16.msra.mxu0 0
    %1588 = vmatprep.subr.bf16.mxu0 0
    %1589 = vmatpush1.bf16.msra.mxu0 0
    %1590 = vmatprep.subr.bf16.mxu0 0
    %1591 = vmatpush1.bf16.msra.mxu0 0
    %1592 = vmatprep.subr.bf16.mxu0 0
    %1593 = vmatpush1.bf16.msra.mxu0 0
    %1594 = vmatprep.subr.bf16.mxu0 0
    %1595 = vmatpush1.bf16.msra.mxu0 0
    %1596 = vmatprep.subr.bf16.mxu0 0
    %1597 = vmatpush1.bf16.msra.mxu0 0
    %1598 = vmatprep.mubr.bf16.mxu0 0
    %1599 = vmatmul.mubr.bf16.gmra.mrb[0].mxu0 %v1564
    %v1600 = vpop.f32.mrb[0].mxu0
    %v1601 = vadd.f32 0.0, %v1600
    %v1602 = vpop.f32.mrb[0].mxu0
    %v1603 = vpop.f32.mrb[0].mxu0
    %v1604 = vpop.f32.mrb[0].mxu0
    %1605 = vdwg.mxu0
    %v1606 = vmul.f32 %v1601, %v1560
    %v1607 = vpack.c.bf16 %v1606, %v1606
    %v1609 = vsel %vm124, %v1607, 0
    %1611 = vmatprep.subr.bf16.mxu0 0
    %1612 = vmatpush1.bf16.msra.mxu0 %v300
    %1613 = vmatprep.subr.bf16.mxu0 0
    %1614 = vmatpush1.bf16.msra.mxu0 %v301
    %1615 = vmatprep.subr.bf16.mxu0 0
    %1616 = vmatpush1.bf16.msra.mxu0 0
    %1617 = vmatprep.subr.bf16.mxu0 0
    %1618 = vmatpush1.bf16.msra.mxu0 0
    %1619 = vmatprep.subr.bf16.mxu0 0
    %1620 = vmatpush1.bf16.msra.mxu0 0
    %1621 = vmatprep.subr.bf16.mxu0 0
    %1622 = vmatpush1.bf16.msra.mxu0 0
    %1623 = vmatprep.subr.bf16.mxu0 0
    %1624 = vmatpush1.bf16.msra.mxu0 0
    %1625 = vmatprep.subr.bf16.mxu0 0
    %1626 = vmatpush1.bf16.msra.mxu0 0
    %1627 = vmatprep.subr.bf16.mxu0 0
    %1628 = vmatpush1.bf16.msra.mxu0 0
    %1629 = vmatprep.subr.bf16.mxu0 0
    %1630 = vmatpush1.bf16.msra.mxu0 0
    %1631 = vmatprep.subr.bf16.mxu0 0
    %1632 = vmatpush1.bf16.msra.mxu0 0
    %1633 = vmatprep.subr.bf16.mxu0 0
    %1634 = vmatpush1.bf16.msra.mxu0 0
    %1635 = vmatprep.subr.bf16.mxu0 0
    %1636 = vmatpush1.bf16.msra.mxu0 0
    %1637 = vmatprep.subr.bf16.mxu0 0
    %1638 = vmatpush1.bf16.msra.mxu0 0
    %1639 = vmatprep.subr.bf16.mxu0 0
    %1640 = vmatpush1.bf16.msra.mxu0 0
    %1641 = vmatprep.subr.bf16.mxu0 0
    %1642 = vmatpush1.bf16.msra.mxu0 0
    %1643 = vmatprep.mubr.bf16.mxu0 0
    %1644 = vmatmul.mubr.bf16.gmra.mrb[0].mxu0 %v1609
    %v1645 = vpop.f32.mrb[0].mxu0
    %v1646 = vadd.f32 0.0, %v1645
    %v1647 = vpop.f32.mrb[0].mxu0
    %v1648 = vpop.f32.mrb[0].mxu0
    %v1649 = vpop.f32.mrb[0].mxu0
    %1650 = vdwg.mxu0
    %1651 = vmatprep.subr.bf16.mxu0 0
    %1652 = vmatpush1.bf16.msra.mxu0 %v355
    %1653 = vmatprep.subr.bf16.mxu0 0
    %1654 = vmatpush1.bf16.msra.mxu0 %v356
    %1655 = vmatprep.subr.bf16.mxu0 0
    %1656 = vmatpush1.bf16.msra.mxu0 0
    %1657 = vmatprep.subr.bf16.mxu0 0
    %1658 = vmatpush1.bf16.msra.mxu0 0
    %1659 = vmatprep.subr.bf16.mxu0 0
    %1660 = vmatpush1.bf16.msra.mxu0 0
    %1661 = vmatprep.subr.bf16.mxu0 0
    %1662 = vmatpush1.bf16.msra.mxu0 0
    %1663 = vmatprep.subr.bf16.mxu0 0
    %1664 = vmatpush1.bf16.msra.mxu0 0
    %1665 = vmatprep.subr.bf16.mxu0 0
    %1666 = vmatpush1.bf16.msra.mxu0 0
    %1667 = vmatprep.subr.bf16.mxu0 0
    %1668 = vmatpush1.bf16.msra.mxu0 0
    %1669 = vmatprep.subr.bf16.mxu0 0
    %1670 = vmatpush1.bf16.msra.mxu0 0
    %1671 = vmatprep.subr.bf16.mxu0 0
    %1672 = vmatpush1.bf16.msra.mxu0 0
    %1673 = vmatprep.subr.bf16.mxu0 0
    %1674 = vmatpush1.bf16.msra.mxu0 0
    %1675 = vmatprep.subr.bf16.mxu0 0
    %1676 = vmatpush1.bf16.msra.mxu0 0
    %1677 = vmatprep.subr.bf16.mxu0 0
    %1678 = vmatpush1.bf16.msra.mxu0 0
    %1679 = vmatprep.subr.bf16.mxu0 0
    %1680 = vmatpush1.bf16.msra.mxu0 0
    %1681 = vmatprep.subr.bf16.mxu0 0
    %1682 = vmatpush1.bf16.msra.mxu0 0
    %1683 = vmatprep.mubr.bf16.mxu0 0
    %1684 = vmatmul.mubr.bf16.gmra.mrb[0].mxu0 %v1508
    %v1685 = vpop.f32.mrb[0].mxu0
    %v1686 = vadd.f32 %v1646, %v1685
    %v1687 = vpop.f32.mrb[0].mxu0
    %v1688 = vpop.f32.mrb[0].mxu0
    %v1689 = vpop.f32.mrb[0].mxu0
    %1690 = vdwg.mxu0
    %v1691 = vadd.f32 %v1686, %v94
    %v1692 = vmax.f32 %v1691, 0.0
    %v1693 = vpack.c.bf16 %v1692, %v1692
    %1694 = vmatprep.subr.bf16.mxu0 0
    %1695 = vmatpush1.bf16.msra.mxu0 %v410
    %1696 = vmatprep.subr.bf16.mxu0 0
    %1697 = vmatpush1.bf16.msra.mxu0 %v411
    %1698 = vmatprep.subr.bf16.mxu0 0
    %1699 = vmatpush1.bf16.msra.mxu0 0
    %1700 = vmatprep.subr.bf16.mxu0 0
    %1701 = vmatpush1.bf16.msra.mxu0 0
    %1702 = vmatprep.subr.bf16.mxu0 0
    %1703 = vmatpush1.bf16.msra.mxu0 0
    %1704 = vmatprep.subr.bf16.mxu0 0
    %1705 = vmatpush1.bf16.msra.mxu0 0
    %1706 = vmatprep.subr.bf16.mxu0 0
    %1707 = vmatpush1.bf16.msra.mxu0 0
    %1708 = vmatprep.subr.bf16.mxu0 0
    %1709 = vmatpush1.bf16.msra.mxu0 0
    %1710 = vmatprep.subr.bf16.mxu0 0
    %1711 = vmatpush1.bf16.msra.mxu0 0
    %1712 = vmatprep.subr.bf16.mxu0 0
    %1713 = vmatpush1.bf16.msra.mxu0 0
    %1714 = vmatprep.subr.bf16.mxu0 0
    %1715 = vmatpush1.bf16.msra.mxu0 0
    %1716 = vmatprep.subr.bf16.mxu0 0
    %1717 = vmatpush1.bf16.msra.mxu0 0
    %1718 = vmatprep.subr.bf16.mxu0 0
    %1719 = vmatpush1.bf16.msra.mxu0 0
    %1720 = vmatprep.subr.bf16.mxu0 0
    %1721 = vmatpush1.bf16.msra.mxu0 0
    %1722 = vmatprep.subr.bf16.mxu0 0
    %1723 = vmatpush1.bf16.msra.mxu0 0
    %1724 = vmatprep.subr.bf16.mxu0 0
    %1725 = vmatpush1.bf16.msra.mxu0 0
    %1726 = vmatprep.mubr.bf16.mxu0 0
    %1727 = vmatmul.mubr.bf16.gmra.mrb[0].mxu0 %v1392
    %v1728 = vpop.f32.mrb[0].mxu0
    %v1729 = vadd.f32 0.0, %v1728
    %v1730 = vpop.f32.mrb[0].mxu0
    %v1731 = vpop.f32.mrb[0].mxu0
    %v1732 = vpop.f32.mrb[0].mxu0
    %1733 = vdwg.mxu0
    %v1735 = vsel %vm124, %v1693, 0
    %1737 = vmatprep.subr.bf16.mxu0 0
    %1738 = vmatpush1.bf16.msra.mxu0 %v462
    %1739 = vmatprep.subr.bf16.mxu0 0
    %1740 = vmatpush1.bf16.msra.mxu0 %v463
    %1741 = vmatprep.subr.bf16.mxu0 0
    %1742 = vmatpush1.bf16.msra.mxu0 0
    %1743 = vmatprep.subr.bf16.mxu0 0
    %1744 = vmatpush1.bf16.msra.mxu0 0
    %1745 = vmatprep.subr.bf16.mxu0 0
    %1746 = vmatpush1.bf16.msra.mxu0 0
    %1747 = vmatprep.subr.bf16.mxu0 0
    %1748 = vmatpush1.bf16.msra.mxu0 0
    %1749 = vmatprep.subr.bf16.mxu0 0
    %1750 = vmatpush1.bf16.msra.mxu0 0
    %1751 = vmatprep.subr.bf16.mxu0 0
    %1752 = vmatpush1.bf16.msra.mxu0 0
    %1753 = vmatprep.subr.bf16.mxu0 0
    %1754 = vmatpush1.bf16.msra.mxu0 0
    %1755 = vmatprep.subr.bf16.mxu0 0
    %1756 = vmatpush1.bf16.msra.mxu0 0
    %1757 = vmatprep.subr.bf16.mxu0 0
    %1758 = vmatpush1.bf16.msra.mxu0 0
    %1759 = vmatprep.subr.bf16.mxu0 0
    %1760 = vmatpush1.bf16.msra.mxu0 0
    %1761 = vmatprep.subr.bf16.mxu0 0
    %1762 = vmatpush1.bf16.msra.mxu0 0
    %1763 = vmatprep.subr.bf16.mxu0 0
    %1764 = vmatpush1.bf16.msra.mxu0 0
    %1765 = vmatprep.subr.bf16.mxu0 0
    %1766 = vmatpush1.bf16.msra.mxu0 0
    %1767 = vmatprep.subr.bf16.mxu0 0
    %1768 = vmatpush1.bf16.msra.mxu0 0
    %1769 = vmatprep.mubr.bf16.mxu0 0
    %1770 = vmatmul.mubr.bf16.gmra.mrb[0].mxu0 %v1735
    %v1771 = vpop.f32.mrb[0].mxu0
    %v1772 = vadd.f32 %v1729, %v1771
    %v1773 = vpop.f32.mrb[0].mxu0
    %v1774 = vpop.f32.mrb[0].mxu0
    %v1775 = vpop.f32.mrb[0].mxu0
    %1776 = vdwg.mxu0
    %v1777 = vadd.f32 %v1772, %v103
    %v1778 = vxor.u32 %v1777, 2147483648
    %v1779 = vmul.f32 %v1778, 1.442695
    %v1780 = vpow.pop %v1779
    %v1781 = vadd.f32 %v1780, 1.0
    %v1782 = vrcp.pop %v1781
    %v1783 = vmul.f32 1.0, %v1782
    %1785 = vrot.lane.b32.xlu0 %v1777, 32
    %v1786 = vpop.permute.xlu0 %1785
    %v1788 = vmul.f32 %v1783, %v1786
    %1790 = vrot.lane.b32.xlu0 %v1788, 64
    %v1791 = vpop.permute.xlu0 %1790
    %v1793 = vadd.f32 %v1777, %v1791
    %v1794 = vtanh.pop %v1793
    %v1795 = vsub.f32 1.0, %v1783
    %1797 = vrot.lane.b32.xlu0 %v1794, 96
    %v1798 = vpop.permute.xlu0 %1797
    %v1800 = vmul.f32 %v1795, %v1798
    %v1801 = vmul.f32 %v1783, %v1386
    %v1802 = vadd.f32 %v1800, %v1801
    %v1803 = vpack.c.bf16 %v1802, %v1802
    %1805 = vrot.lane.b32.xlu0 %v1803, 96
    %v1806 = vpop.permute.xlu0 %1805
    %v1808 = vsel %vm124, %v1806, 0
    %1810 = vmatprep.subr.bf16.mxu0 0
    %1811 = vmatpush1.bf16.msra.mxu0 %v555
    %1812 = vmatprep.subr.bf16.mxu0 0
    %1813 = vmatpush1.bf16.msra.mxu0 %v556
    %1814 = vmatprep.subr.bf16.mxu0 0
    %1815 = vmatpush1.bf16.msra.mxu0 0
    %1816 = vmatprep.subr.bf16.mxu0 0
    %1817 = vmatpush1.bf16.msra.mxu0 0
    %1818 = vmatprep.subr.bf16.mxu0 0
    %1819 = vmatpush1.bf16.msra.mxu0 0
    %1820 = vmatprep.subr.bf16.mxu0 0
    %1821 = vmatpush1.bf16.msra.mxu0 0
    %1822 = vmatprep.subr.bf16.mxu0 0
    %1823 = vmatpush1.bf16.msra.mxu0 0
    %1824 = vmatprep.subr.bf16.mxu0 0
    %1825 = vmatpush1.bf16.msra.mxu0 0
    %1826 = vmatprep.subr.bf16.mxu0 0
    %1827 = vmatpush1.bf16.msra.mxu0 0
    %1828 = vmatprep.subr.bf16.mxu0 0
    %1829 = vmatpush1.bf16.msra.mxu0 0
    %1830 = vmatprep.subr.bf16.mxu0 0
    %1831 = vmatpush1.bf16.msra.mxu0 0
    %1832 = vmatprep.subr.bf16.mxu0 0
    %1833 = vmatpush1.bf16.msra.mxu0 0
    %1834 = vmatprep.subr.bf16.mxu0 0
    %1835 = vmatpush1.bf16.msra.mxu0 0
    %1836 = vmatprep.subr.bf16.mxu0 0
    %1837 = vmatpush1.bf16.msra.mxu0 0
    %1838 = vmatprep.subr.bf16.mxu0 0
    %1839 = vmatpush1.bf16.msra.mxu0 0
    %1840 = vmatprep.subr.bf16.mxu0 0
    %1841 = vmatpush1.bf16.msra.mxu0 0
    %1842 = vmatprep.mubr.bf16.mxu0 0
    %1843 = vmatmul.mubr.bf16.gmra.mrb[0].mxu0 %v1808
    %v1844 = vpop.f32.mrb[0].mxu0
    %v1845 = vadd.f32 %v108, %v1844
    %v1846 = vpop.f32.mrb[0].mxu0
    %v1847 = vpop.f32.mrb[0].mxu0
    %v1848 = vpop.f32.mrb[0].mxu0
    %1849 = vdwg.mxu0
    %v1850 = vsel %vm602, %v1845, -inf
    %1851 = vmax.xlane.f32.xlu0 %v1850
    %v1852 = vpop.xlane.xlu0 %1851
    %v1853 = vsub.f32 %v1845, %v1852
    %v1854 = vmul.f32 %v1853, 1.442695
    %v1855 = vpow.pop %v1854
    %v1856 = vsel %vm602, %v1855, 0.0
    %1857 = vadd.xlane.f32.xlu0 %v1856
    %v1858 = vpop.xlane.xlu0 %1857
    %v1859 = vlog2.pop %v1858
    %v1860 = vmul.f32 %v1859, 0.6931472
    %v1861 = vadd.f32 %v1860, %v1852
    %v1862 = vsub.f32 %v1845, %v1861
    %1864 = vrot.lane.b32.xlu0 %v1802, 112
    %v1865 = vpop.permute.xlu0 %1864
    %1868 = vrot.lane.b32.xlu0 %v1561, 48
    %v1869 = vpop.permute.xlu0 %1868
    %v1871 = vsel %vm624, %v1862, %v1865
    %v1872 = vsel %vm626, %v1871, %v1869
    %v1873 = vsel %vm628, %v1872, 0.0
    %1874 = vst [vmem:[#allocation7 + $0x3] sm:$0x1] %v1873
    %v1875 = vld [vmem:[#allocation2] sm:$0x4]
    %1876 = vmatprep.subr.bf16.mxu0 0
    %1877 = vmatpush1.bf16.msra.mxu0 %v120
    %1878 = vmatprep.subr.bf16.mxu0 0
    %1879 = vmatpush1.bf16.msra.mxu0 %v121
    %1880 = vmatprep.subr.bf16.mxu0 0
    %1881 = vmatpush1.bf16.msra.mxu0 0
    %1882 = vmatprep.subr.bf16.mxu0 0
    %1883 = vmatpush1.bf16.msra.mxu0 0
    %1884 = vmatprep.subr.bf16.mxu0 0
    %1885 = vmatpush1.bf16.msra.mxu0 0
    %1886 = vmatprep.subr.bf16.mxu0 0
    %1887 = vmatpush1.bf16.msra.mxu0 0
    %1888 = vmatprep.subr.bf16.mxu0 0
    %1889 = vmatpush1.bf16.msra.mxu0 0
    %1890 = vmatprep.subr.bf16.mxu0 0
    %1891 = vmatpush1.bf16.msra.mxu0 0
    %1892 = vmatprep.subr.bf16.mxu0 0
    %1893 = vmatpush1.bf16.msra.mxu0 0
    %1894 = vmatprep.subr.bf16.mxu0 0
    %1895 = vmatpush1.bf16.msra.mxu0 0
    %1896 = vmatprep.subr.bf16.mxu0 0
    %1897 = vmatpush1.bf16.msra.mxu0 0
    %1898 = vmatprep.subr.bf16.mxu0 0
    %1899 = vmatpush1.bf16.msra.mxu0 0
    %1900 = vmatprep.subr.bf16.mxu0 0
    %1901 = vmatpush1.bf16.msra.mxu0 0
    %1902 = vmatprep.subr.bf16.mxu0 0
    %1903 = vmatpush1.bf16.msra.mxu0 0
    %1904 = vmatprep.subr.bf16.mxu0 0
    %1905 = vmatpush1.bf16.msra.mxu0 0
    %1906 = vmatprep.subr.bf16.mxu0 0
    %1907 = vmatpush1.bf16.msra.mxu0 0
    %1908 = vmatprep.mubr.bf16.mxu0 0
    %1909 = vmatmul.mubr.bf16.gmra.mrb[0].mxu0 %v1808
    %v1910 = vpop.f32.mrb[0].mxu0
    %v1911 = vadd.f32 0.0, %v1910
    %v1912 = vpop.f32.mrb[0].mxu0
    %v1913 = vpop.f32.mrb[0].mxu0
    %v1914 = vpop.f32.mrb[0].mxu0
    %1915 = vdwg.mxu0
    %v1917 = vunpack.c.l.b16 %v1875
    %v1918 = vpack.c.b16 %v1917, %v1917
    %v1919 = vrot.slane %v1918, 2
    %v1921 = vsel %vm124, %v1919, 0
    %1923 = vmatprep.subr.bf16.mxu0 0
    %1924 = vmatpush1.bf16.msra.mxu0 %v176
    %1925 = vmatprep.subr.bf16.mxu0 0
    %1926 = vmatpush1.bf16.msra.mxu0 %v177
    %1927 = vmatprep.subr.bf16.mxu0 0
    %1928 = vmatpush1.bf16.msra.mxu0 0
    %1929 = vmatprep.subr.bf16.mxu0 0
    %1930 = vmatpush1.bf16.msra.mxu0 0
    %1931 = vmatprep.subr.bf16.mxu0 0
    %1932 = vmatpush1.bf16.msra.mxu0 0
    %1933 = vmatprep.subr.bf16.mxu0 0
    %1934 = vmatpush1.bf16.msra.mxu0 0
    %1935 = vmatprep.subr.bf16.mxu0 0
    %1936 = vmatpush1.bf16.msra.mxu0 0
    %1937 = vmatprep.subr.bf16.mxu0 0
    %1938 = vmatpush1.bf16.msra.mxu0 0
    %1939 = vmatprep.subr.bf16.mxu0 0
    %1940 = vmatpush1.bf16.msra.mxu0 0
    %1941 = vmatprep.subr.bf16.mxu0 0
    %1942 = vmatpush1.bf16.msra.mxu0 0
    %1943 = vmatprep.subr.bf16.mxu0 0
    %1944 = vmatpush1.bf16.msra.mxu0 0
    %1945 = vmatprep.subr.bf16.mxu0 0
    %1946 = vmatpush1.bf16.msra.mxu0 0
    %1947 = vmatprep.subr.bf16.mxu0 0
    %1948 = vmatpush1.bf16.msra.mxu0 0
    %1949 = vmatprep.subr.bf16.mxu0 0
    %1950 = vmatpush1.bf16.msra.mxu0 0
    %1951 = vmatprep.subr.bf16.mxu0 0
    %1952 = vmatpush1.bf16.msra.mxu0 0
    %1953 = vmatprep.subr.bf16.mxu0 0
    %1954 = vmatpush1.bf16.msra.mxu0 0
    %1955 = vmatprep.mubr.bf16.mxu0 0
    %1956 = vmatmul.mubr.bf16.gmra.mrb[0].mxu0 %v1921
    %v1957 = vpop.f32.mrb[0].mxu0
    %v1958 = vadd.f32 %v1911, %v1957
    %v1959 = vpop.f32.mrb[0].mxu0
    %v1960 = vpop.f32.mrb[0].mxu0
    %v1961 = vpop.f32.mrb[0].mxu0
    %1962 = vdwg.mxu0
    %v1963 = vadd.f32 %v1958, %v85
    %v1964 = vsel %vm224, %v1963, -inf
    %1965 = vmax.xlane.f32.xlu0 %v1964
    %v1966 = vpop.xlane.xlu0 %1965
    %v1967 = vsub.f32 %v1963, %v1966
    %v1968 = vmul.f32 %v1967, 1.442695
    %v1969 = vpow.pop %v1968
    %v1970 = vsel %vm224, %v1969, 0.0
    %1971 = vadd.xlane.f32.xlu0 %v1970
    %v1972 = vpop.xlane.xlu0 %1971
    %v1973 = vrcp.pop %v1972
    %v1974 = vmul.f32 %v1969, %v1973
    %v1975 = vpack.c.bf16 %v1969, %v1969
    %v1977 = vsel %vm242, %v1975, 0
    %1979 = vmatprep.subr.bf16.mxu0 0
    %1980 = vmatpush1.bf16.msra.mxu0 %v248
    %1981 = vmatprep.subr.bf16.mxu0 0
    %1982 = vmatpush1.bf16.msra.mxu0 0
    %1983 = vmatprep.subr.bf16.mxu0 0
    %1984 = vmatpush1.bf16.msra.mxu0 0
    %1985 = vmatprep.subr.bf16.mxu0 0
    %1986 = vmatpush1.bf16.msra.mxu0 0
    %1987 = vmatprep.subr.bf16.mxu0 0
    %1988 = vmatpush1.bf16.msra.mxu0 0
    %1989 = vmatprep.subr.bf16.mxu0 0
    %1990 = vmatpush1.bf16.msra.mxu0 0
    %1991 = vmatprep.subr.bf16.mxu0 0
    %1992 = vmatpush1.bf16.msra.mxu0 0
    %1993 = vmatprep.subr.bf16.mxu0 0
    %1994 = vmatpush1.bf16.msra.mxu0 0
    %1995 = vmatprep.subr.bf16.mxu0 0
    %1996 = vmatpush1.bf16.msra.mxu0 0
    %1997 = vmatprep.subr.bf16.mxu0 0
    %1998 = vmatpush1.bf16.msra.mxu0 0
    %1999 = vmatprep.subr.bf16.mxu0 0
    %2000 = vmatpush1.bf16.msra.mxu0 0
    %2001 = vmatprep.subr.bf16.mxu0 0
    %2002 = vmatpush1.bf16.msra.mxu0 0
    %2003 = vmatprep.subr.bf16.mxu0 0
    %2004 = vmatpush1.bf16.msra.mxu0 0
    %2005 = vmatprep.subr.bf16.mxu0 0
    %2006 = vmatpush1.bf16.msra.mxu0 0
    %2007 = vmatprep.subr.bf16.mxu0 0
    %2008 = vmatpush1.bf16.msra.mxu0 0
    %2009 = vmatprep.subr.bf16.mxu0 0
    %2010 = vmatpush1.bf16.msra.mxu0 0
    %2011 = vmatprep.mubr.bf16.mxu0 0
    %2012 = vmatmul.mubr.bf16.gmra.mrb[0].mxu0 %v1977
    %v2013 = vpop.f32.mrb[0].mxu0
    %v2014 = vadd.f32 0.0, %v2013
    %v2015 = vpop.f32.mrb[0].mxu0
    %v2016 = vpop.f32.mrb[0].mxu0
    %v2017 = vpop.f32.mrb[0].mxu0
    %2018 = vdwg.mxu0
    %v2019 = vmul.f32 %v2014, %v1973
    %v2020 = vpack.c.bf16 %v2019, %v2019
    %v2022 = vsel %vm124, %v2020, 0
    %2024 = vmatprep.subr.bf16.mxu0 0
    %2025 = vmatpush1.bf16.msra.mxu0 %v300
    %2026 = vmatprep.subr.bf16.mxu0 0
    %2027 = vmatpush1.bf16.msra.mxu0 %v301
    %2028 = vmatprep.subr.bf16.mxu0 0
    %2029 = vmatpush1.bf16.msra.mxu0 0
    %2030 = vmatprep.subr.bf16.mxu0 0
    %2031 = vmatpush1.bf16.msra.mxu0 0
    %2032 = vmatprep.subr.bf16.mxu0 0
    %2033 = vmatpush1.bf16.msra.mxu0 0
    %2034 = vmatprep.subr.bf16.mxu0 0
    %2035 = vmatpush1.bf16.msra.mxu0 0
    %2036 = vmatprep.subr.bf16.mxu0 0
    %2037 = vmatpush1.bf16.msra.mxu0 0
    %2038 = vmatprep.subr.bf16.mxu0 0
    %2039 = vmatpush1.bf16.msra.mxu0 0
    %2040 = vmatprep.subr.bf16.mxu0 0
    %2041 = vmatpush1.bf16.msra.mxu0 0
    %2042 = vmatprep.subr.bf16.mxu0 0
    %2043 = vmatpush1.bf16.msra.mxu0 0
    %2044 = vmatprep.subr.bf16.mxu0 0
    %2045 = vmatpush1.bf16.msra.mxu0 0
    %2046 = vmatprep.subr.bf16.mxu0 0
    %2047 = vmatpush1.bf16.msra.mxu0 0
    %2048 = vmatprep.subr.bf16.mxu0 0
    %2049 = vmatpush1.bf16.msra.mxu0 0
    %2050 = vmatprep.subr.bf16.mxu0 0
    %2051 = vmatpush1.bf16.msra.mxu0 0
    %2052 = vmatprep.subr.bf16.mxu0 0
    %2053 = vmatpush1.bf16.msra.mxu0 0
    %2054 = vmatprep.subr.bf16.mxu0 0
    %2055 = vmatpush1.bf16.msra.mxu0 0
    %2056 = vmatprep.mubr.bf16.mxu0 0
    %2057 = vmatmul.mubr.bf16.gmra.mrb[0].mxu0 %v2022
    %v2058 = vpop.f32.mrb[0].mxu0
    %v2059 = vadd.f32 0.0, %v2058
    %v2060 = vpop.f32.mrb[0].mxu0
    %v2061 = vpop.f32.mrb[0].mxu0
    %v2062 = vpop.f32.mrb[0].mxu0
    %2063 = vdwg.mxu0
    %2064 = vmatprep.subr.bf16.mxu0 0
    %2065 = vmatpush1.bf16.msra.mxu0 %v355
    %2066 = vmatprep.subr.bf16.mxu0 0
    %2067 = vmatpush1.bf16.msra.mxu0 %v356
    %2068 = vmatprep.subr.bf16.mxu0 0
    %2069 = vmatpush1.bf16.msra.mxu0 0
    %2070 = vmatprep.subr.bf16.mxu0 0
    %2071 = vmatpush1.bf16.msra.mxu0 0
    %2072 = vmatprep.subr.bf16.mxu0 0
    %2073 = vmatpush1.bf16.msra.mxu0 0
    %2074 = vmatprep.subr.bf16.mxu0 0
    %2075 = vmatpush1.bf16.msra.mxu0 0
    %2076 = vmatprep.subr.bf16.mxu0 0
    %2077 = vmatpush1.bf16.msra.mxu0 0
    %2078 = vmatprep.subr.bf16.mxu0 0
    %2079 = vmatpush1.bf16.msra.mxu0 0
    %2080 = vmatprep.subr.bf16.mxu0 0
    %2081 = vmatpush1.bf16.msra.mxu0 0
    %2082 = vmatprep.subr.bf16.mxu0 0
    %2083 = vmatpush1.bf16.msra.mxu0 0
    %2084 = vmatprep.subr.bf16.mxu0 0
    %2085 = vmatpush1.bf16.msra.mxu0 0
    %2086 = vmatprep.subr.bf16.mxu0 0
    %2087 = vmatpush1.bf16.msra.mxu0 0
    %2088 = vmatprep.subr.bf16.mxu0 0
    %2089 = vmatpush1.bf16.msra.mxu0 0
    %2090 = vmatprep.subr.bf16.mxu0 0
    %2091 = vmatpush1.bf16.msra.mxu0 0
    %2092 = vmatprep.subr.bf16.mxu0 0
    %2093 = vmatpush1.bf16.msra.mxu0 0
    %2094 = vmatprep.subr.bf16.mxu0 0
    %2095 = vmatpush1.bf16.msra.mxu0 0
    %2096 = vmatprep.mubr.bf16.mxu0 0
    %2097 = vmatmul.mubr.bf16.gmra.mrb[0].mxu0 %v1921
    %v2098 = vpop.f32.mrb[0].mxu0
    %v2099 = vadd.f32 %v2059, %v2098
    %v2100 = vpop.f32.mrb[0].mxu0
    %v2101 = vpop.f32.mrb[0].mxu0
    %v2102 = vpop.f32.mrb[0].mxu0
    %2103 = vdwg.mxu0
    %v2104 = vadd.f32 %v2099, %v94
    %v2105 = vmax.f32 %v2104, 0.0
    %v2106 = vpack.c.bf16 %v2105, %v2105
    %2107 = vmatprep.subr.bf16.mxu0 0
    %2108 = vmatpush1.bf16.msra.mxu0 %v410
    %2109 = vmatprep.subr.bf16.mxu0 0
    %2110 = vmatpush1.bf16.msra.mxu0 %v411
    %2111 = vmatprep.subr.bf16.mxu0 0
    %2112 = vmatpush1.bf16.msra.mxu0 0
    %2113 = vmatprep.subr.bf16.mxu0 0
    %2114 = vmatpush1.bf16.msra.mxu0 0
    %2115 = vmatprep.subr.bf16.mxu0 0
    %2116 = vmatpush1.bf16.msra.mxu0 0
    %2117 = vmatprep.subr.bf16.mxu0 0
    %2118 = vmatpush1.bf16.msra.mxu0 0
    %2119 = vmatprep.subr.bf16.mxu0 0
    %2120 = vmatpush1.bf16.msra.mxu0 0
    %2121 = vmatprep.subr.bf16.mxu0 0
    %2122 = vmatpush1.bf16.msra.mxu0 0
    %2123 = vmatprep.subr.bf16.mxu0 0
    %2124 = vmatpush1.bf16.msra.mxu0 0
    %2125 = vmatprep.subr.bf16.mxu0 0
    %2126 = vmatpush1.bf16.msra.mxu0 0
    %2127 = vmatprep.subr.bf16.mxu0 0
    %2128 = vmatpush1.bf16.msra.mxu0 0
    %2129 = vmatprep.subr.bf16.mxu0 0
    %2130 = vmatpush1.bf16.msra.mxu0 0
    %2131 = vmatprep.subr.bf16.mxu0 0
    %2132 = vmatpush1.bf16.msra.mxu0 0
    %2133 = vmatprep.subr.bf16.mxu0 0
    %2134 = vmatpush1.bf16.msra.mxu0 0
    %2135 = vmatprep.subr.bf16.mxu0 0
    %2136 = vmatpush1.bf16.msra.mxu0 0
    %2137 = vmatprep.subr.bf16.mxu0 0
    %2138 = vmatpush1.bf16.msra.mxu0 0
    %2139 = vmatprep.mubr.bf16.mxu0 0
    %2140 = vmatmul.mubr.bf16.gmra.mrb[0].mxu0 %v1808
    %v2141 = vpop.f32.mrb[0].mxu0
    %v2142 = vadd.f32 0.0, %v2141
    %v2143 = vpop.f32.mrb[0].mxu0
    %v2144 = vpop.f32.mrb[0].mxu0
    %v2145 = vpop.f32.mrb[0].mxu0
    %2146 = vdwg.mxu0
    %v2148 = vsel %vm124, %v2106, 0
    %2150 = vmatprep.subr.bf16.mxu0 0
    %2151 = vmatpush1.bf16.msra.mxu0 %v462
    %2152 = vmatprep.subr.bf16.mxu0 0
    %2153 = vmatpush1.bf16.msra.mxu0 %v463
    %2154 = vmatprep.subr.bf16.mxu0 0
    %2155 = vmatpush1.bf16.msra.mxu0 0
    %2156 = vmatprep.subr.bf16.mxu0 0
    %2157 = vmatpush1.bf16.msra.mxu0 0
    %2158 = vmatprep.subr.bf16.mxu0 0
    %2159 = vmatpush1.bf16.msra.mxu0 0
    %2160 = vmatprep.subr.bf16.mxu0 0
    %2161 = vmatpush1.bf16.msra.mxu0 0
    %2162 = vmatprep.subr.bf16.mxu0 0
    %2163 = vmatpush1.bf16.msra.mxu0 0
    %2164 = vmatprep.subr.bf16.mxu0 0
    %2165 = vmatpush1.bf16.msra.mxu0 0
    %2166 = vmatprep.subr.bf16.mxu0 0
    %2167 = vmatpush1.bf16.msra.mxu0 0
    %2168 = vmatprep.subr.bf16.mxu0 0
    %2169 = vmatpush1.bf16.msra.mxu0 0
    %2170 = vmatprep.subr.bf16.mxu0 0
    %2171 = vmatpush1.bf16.msra.mxu0 0
    %2172 = vmatprep.subr.bf16.mxu0 0
    %2173 = vmatpush1.bf16.msra.mxu0 0
    %2174 = vmatprep.subr.bf16.mxu0 0
    %2175 = vmatpush1.bf16.msra.mxu0 0
    %2176 = vmatprep.subr.bf16.mxu0 0
    %2177 = vmatpush1.bf16.msra.mxu0 0
    %2178 = vmatprep.subr.bf16.mxu0 0
    %2179 = vmatpush1.bf16.msra.mxu0 0
    %2180 = vmatprep.subr.bf16.mxu0 0
    %2181 = vmatpush1.bf16.msra.mxu0 0
    %2182 = vmatprep.mubr.bf16.mxu0 0
    %2183 = vmatmul.mubr.bf16.gmra.mrb[0].mxu0 %v2148
    %v2184 = vpop.f32.mrb[0].mxu0
    %v2185 = vadd.f32 %v2142, %v2184
    %v2186 = vpop.f32.mrb[0].mxu0
    %v2187 = vpop.f32.mrb[0].mxu0
    %v2188 = vpop.f32.mrb[0].mxu0
    %2189 = vdwg.mxu0
    %v2190 = vadd.f32 %v2185, %v103
    %v2191 = vxor.u32 %v2190, 2147483648
    %v2192 = vmul.f32 %v2191, 1.442695
    %v2193 = vpow.pop %v2192
    %v2194 = vadd.f32 %v2193, 1.0
    %v2195 = vrcp.pop %v2194
    %v2196 = vmul.f32 1.0, %v2195
    %2198 = vrot.lane.b32.xlu0 %v2190, 32
    %v2199 = vpop.permute.xlu0 %2198
    %v2201 = vmul.f32 %v2196, %v2199
    %2203 = vrot.lane.b32.xlu0 %v2201, 64
    %v2204 = vpop.permute.xlu0 %2203
    %v2206 = vadd.f32 %v2190, %v2204
    %v2207 = vtanh.pop %v2206
    %v2208 = vsub.f32 1.0, %v2196
    %2210 = vrot.lane.b32.xlu0 %v2207, 96
    %v2211 = vpop.permute.xlu0 %2210
    %v2213 = vmul.f32 %v2208, %v2211
    %v2214 = vmul.f32 %v2196, %v1802
    %v2215 = vadd.f32 %v2213, %v2214
    %v2216 = vpack.c.bf16 %v2215, %v2215
    %2218 = vrot.lane.b32.xlu0 %v2216, 96
    %v2219 = vpop.permute.xlu0 %2218
    %v2221 = vsel %vm124, %v2219, 0
    %2223 = vmatprep.subr.bf16.mxu0 0
    %2224 = vmatpush1.bf16.msra.mxu0 %v555
    %2225 = vmatprep.subr.bf16.mxu0 0
    %2226 = vmatpush1.bf16.msra.mxu0 %v556
    %2227 = vmatprep.subr.bf16.mxu0 0
    %2228 = vmatpush1.bf16.msra.mxu0 0
    %2229 = vmatprep.subr.bf16.mxu0 0
    %2230 = vmatpush1.bf16.msra.mxu0 0
    %2231 = vmatprep.subr.bf16.mxu0 0
    %2232 = vmatpush1.bf16.msra.mxu0 0
    %2233 = vmatprep.subr.bf16.mxu0 0
    %2234 = vmatpush1.bf16.msra.mxu0 0
    %2235 = vmatprep.subr.bf16.mxu0 0
    %2236 = vmatpush1.bf16.msra.mxu0 0
    %2237 = vmatprep.subr.bf16.mxu0 0
    %2238 = vmatpush1.bf16.msra.mxu0 0
    %2239 = vmatprep.subr.bf16.mxu0 0
    %2240 = vmatpush1.bf16.msra.mxu0 0
    %2241 = vmatprep.subr.bf16.mxu0 0
    %2242 = vmatpush1.bf16.msra.mxu0 0
    %2243 = vmatprep.subr.bf16.mxu0 0
    %2244 = vmatpush1.bf16.msra.mxu0 0
    %2245 = vmatprep.subr.bf16.mxu0 0
    %2246 = vmatpush1.bf16.msra.mxu0 0
    %2247 = vmatprep.subr.bf16.mxu0 0
    %2248 = vmatpush1.bf16.msra.mxu0 0
    %2249 = vmatprep.subr.bf16.mxu0 0
    %2250 = vmatpush1.bf16.msra.mxu0 0
    %2251 = vmatprep.subr.bf16.mxu0 0
    %2252 = vmatpush1.bf16.msra.mxu0 0
    %2253 = vmatprep.subr.bf16.mxu0 0
    %2254 = vmatpush1.bf16.msra.mxu0 0
    %2255 = vmatprep.mubr.bf16.mxu0 0
    %2256 = vmatmul.mubr.bf16.gmra.mrb[0].mxu0 %v2221
    %v2257 = vpop.f32.mrb[0].mxu0
    %v2258 = vadd.f32 %v108, %v2257
    %v2259 = vpop.f32.mrb[0].mxu0
    %v2260 = vpop.f32.mrb[0].mxu0
    %v2261 = vpop.f32.mrb[0].mxu0
    %2262 = vdwg.mxu0
    %v2263 = vsel %vm602, %v2258, -inf
    %2264 = vmax.xlane.f32.xlu0 %v2263
    %v2265 = vpop.xlane.xlu0 %2264
    %v2266 = vsub.f32 %v2258, %v2265
    %v2267 = vmul.f32 %v2266, 1.442695
    %v2268 = vpow.pop %v2267
    %v2269 = vsel %vm602, %v2268, 0.0
    %2270 = vadd.xlane.f32.xlu0 %v2269
    %v2271 = vpop.xlane.xlu0 %2270
    %v2272 = vlog2.pop %v2271
    %v2273 = vmul.f32 %v2272, 0.6931472
    %v2274 = vadd.f32 %v2273, %v2265
    %v2275 = vsub.f32 %v2258, %v2274
    %2277 = vrot.lane.b32.xlu0 %v2215, 112
    %v2278 = vpop.permute.xlu0 %2277
    %2281 = vrot.lane.b32.xlu0 %v1974, 48
    %v2282 = vpop.permute.xlu0 %2281
    %v2284 = vsel %vm624, %v2275, %v2278
    %v2285 = vsel %vm626, %v2284, %v2282
    %v2286 = vsel %vm628, %v2285, 0.0
    %2287 = vst [vmem:[#allocation7 + $0x4] sm:$0x1] %v2286
    %v2288 = vld [vmem:[#allocation2] sm:$0x4]
    %2289 = vmatprep.subr.bf16.mxu0 0
    %2290 = vmatpush1.bf16.msra.mxu0 %v120
    %2291 = vmatprep.subr.bf16.mxu0 0
    %2292 = vmatpush1.bf16.msra.mxu0 %v121
    %2293 = vmatprep.subr.bf16.mxu0 0
    %2294 = vmatpush1.bf16.msra.mxu0 0
    %2295 = vmatprep.subr.bf16.mxu0 0
    %2296 = vmatpush1.bf16.msra.mxu0 0
    %2297 = vmatprep.subr.bf16.mxu0 0
    %2298 = vmatpush1.bf16.msra.mxu0 0
    %2299 = vmatprep.subr.bf16.mxu0 0
    %2300 = vmatpush1.bf16.msra.mxu0 0
    %2301 = vmatprep.subr.bf16.mxu0 0
    %2302 = vmatpush1.bf16.msra.mxu0 0
    %2303 = vmatprep.subr.bf16.mxu0 0
    %2304 = vmatpush1.bf16.msra.mxu0 0
    %2305 = vmatprep.subr.bf16.mxu0 0
    %2306 = vmatpush1.bf16.msra.mxu0 0
    %2307 = vmatprep.subr.bf16.mxu0 0
    %2308 = vmatpush1.bf16.msra.mxu0 0
    %2309 = vmatprep.subr.bf16.mxu0 0
    %2310 = vmatpush1.bf16.msra.mxu0 0
    %2311 = vmatprep.subr.bf16.mxu0 0
    %2312 = vmatpush1.bf16.msra.mxu0 0
    %2313 = vmatprep.subr.bf16.mxu0 0
    %2314 = vmatpush1.bf16.msra.mxu0 0
    %2315 = vmatprep.subr.bf16.mxu0 0
    %2316 = vmatpush1.bf16.msra.mxu0 0
    %2317 = vmatprep.subr.bf16.mxu0 0
    %2318 = vmatpush1.bf16.msra.mxu0 0
    %2319 = vmatprep.subr.bf16.mxu0 0
    %2320 = vmatpush1.bf16.msra.mxu0 0
    %2321 = vmatprep.mubr.bf16.mxu0 0
    %2322 = vmatmul.mubr.bf16.gmra.mrb[0].mxu0 %v2221
    %v2323 = vpop.f32.mrb[0].mxu0
    %v2324 = vadd.f32 0.0, %v2323
    %v2325 = vpop.f32.mrb[0].mxu0
    %v2326 = vpop.f32.mrb[0].mxu0
    %v2327 = vpop.f32.mrb[0].mxu0
    %2328 = vdwg.mxu0
    %v2330 = vunpack.c.l.b16 %v2288
    %v2331 = vpack.c.b16 %v2330, %v2330
    %v2333 = vshrl.u32 %v2331, 16
    %v2335 = vrot.slane %v2333, 2
    %v2337 = vsel %vm124, %v2335, 0
    %2339 = vmatprep.subr.bf16.mxu0 0
    %2340 = vmatpush1.bf16.msra.mxu0 %v176
    %2341 = vmatprep.subr.bf16.mxu0 0
    %2342 = vmatpush1.bf16.msra.mxu0 %v177
    %2343 = vmatprep.subr.bf16.mxu0 0
    %2344 = vmatpush1.bf16.msra.mxu0 0
    %2345 = vmatprep.subr.bf16.mxu0 0
    %2346 = vmatpush1.bf16.msra.mxu0 0
    %2347 = vmatprep.subr.bf16.mxu0 0
    %2348 = vmatpush1.bf16.msra.mxu0 0
    %2349 = vmatprep.subr.bf16.mxu0 0
    %2350 = vmatpush1.bf16.msra.mxu0 0
    %2351 = vmatprep.subr.bf16.mxu0 0
    %2352 = vmatpush1.bf16.msra.mxu0 0
    %2353 = vmatprep.subr.bf16.mxu0 0
    %2354 = vmatpush1.bf16.msra.mxu0 0
    %2355 = vmatprep.subr.bf16.mxu0 0
    %2356 = vmatpush1.bf16.msra.mxu0 0
    %2357 = vmatprep.subr.bf16.mxu0 0
    %2358 = vmatpush1.bf16.msra.mxu0 0
    %2359 = vmatprep.subr.bf16.mxu0 0
    %2360 = vmatpush1.bf16.msra.mxu0 0
    %2361 = vmatprep.subr.bf16.mxu0 0
    %2362 = vmatpush1.bf16.msra.mxu0 0
    %2363 = vmatprep.subr.bf16.mxu0 0
    %2364 = vmatpush1.bf16.msra.mxu0 0
    %2365 = vmatprep.subr.bf16.mxu0 0
    %2366 = vmatpush1.bf16.msra.mxu0 0
    %2367 = vmatprep.subr.bf16.mxu0 0
    %2368 = vmatpush1.bf16.msra.mxu0 0
    %2369 = vmatprep.subr.bf16.mxu0 0
    %2370 = vmatpush1.bf16.msra.mxu0 0
    %2371 = vmatprep.mubr.bf16.mxu0 0
    %2372 = vmatmul.mubr.bf16.gmra.mrb[0].mxu0 %v2337
    %v2373 = vpop.f32.mrb[0].mxu0
    %v2374 = vadd.f32 %v2324, %v2373
    %v2375 = vpop.f32.mrb[0].mxu0
    %v2376 = vpop.f32.mrb[0].mxu0
    %v2377 = vpop.f32.mrb[0].mxu0
    %2378 = vdwg.mxu0
    %v2379 = vadd.f32 %v2374, %v85
    %v2380 = vsel %vm224, %v2379, -inf
    %2381 = vmax.xlane.f32.xlu0 %v2380
    %v2382 = vpop.xlane.xlu0 %2381
    %v2383 = vsub.f32 %v2379, %v2382
    %v2384 = vmul.f32 %v2383, 1.442695
    %v2385 = vpow.pop %v2384
    %v2386 = vsel %vm224, %v2385, 0.0
    %2387 = vadd.xlane.f32.xlu0 %v2386
    %v2388 = vpop.xlane.xlu0 %2387
    %v2389 = vrcp.pop %v2388
    %v2390 = vmul.f32 %v2385, %v2389
    %v2391 = vpack.c.bf16 %v2385, %v2385
    %v2393 = vsel %vm242, %v2391, 0
    %2395 = vmatprep.subr.bf16.mxu0 0
    %2396 = vmatpush1.bf16.msra.mxu0 %v248
    %2397 = vmatprep.subr.bf16.mxu0 0
    %2398 = vmatpush1.bf16.msra.mxu0 0
    %2399 = vmatprep.subr.bf16.mxu0 0
    %2400 = vmatpush1.bf16.msra.mxu0 0
    %2401 = vmatprep.subr.bf16.mxu0 0
    %2402 = vmatpush1.bf16.msra.mxu0 0
    %2403 = vmatprep.subr.bf16.mxu0 0
    %2404 = vmatpush1.bf16.msra.mxu0 0
    %2405 = vmatprep.subr.bf16.mxu0 0
    %2406 = vmatpush1.bf16.msra.mxu0 0
    %2407 = vmatprep.subr.bf16.mxu0 0
    %2408 = vmatpush1.bf16.msra.mxu0 0
    %2409 = vmatprep.subr.bf16.mxu0 0
    %2410 = vmatpush1.bf16.msra.mxu0 0
    %2411 = vmatprep.subr.bf16.mxu0 0
    %2412 = vmatpush1.bf16.msra.mxu0 0
    %2413 = vmatprep.subr.bf16.mxu0 0
    %2414 = vmatpush1.bf16.msra.mxu0 0
    %2415 = vmatprep.subr.bf16.mxu0 0
    %2416 = vmatpush1.bf16.msra.mxu0 0
    %2417 = vmatprep.subr.bf16.mxu0 0
    %2418 = vmatpush1.bf16.msra.mxu0 0
    %2419 = vmatprep.subr.bf16.mxu0 0
    %2420 = vmatpush1.bf16.msra.mxu0 0
    %2421 = vmatprep.subr.bf16.mxu0 0
    %2422 = vmatpush1.bf16.msra.mxu0 0
    %2423 = vmatprep.subr.bf16.mxu0 0
    %2424 = vmatpush1.bf16.msra.mxu0 0
    %2425 = vmatprep.subr.bf16.mxu0 0
    %2426 = vmatpush1.bf16.msra.mxu0 0
    %2427 = vmatprep.mubr.bf16.mxu0 0
    %2428 = vmatmul.mubr.bf16.gmra.mrb[0].mxu0 %v2393
    %v2429 = vpop.f32.mrb[0].mxu0
    %v2430 = vadd.f32 0.0, %v2429
    %v2431 = vpop.f32.mrb[0].mxu0
    %v2432 = vpop.f32.mrb[0].mxu0
    %v2433 = vpop.f32.mrb[0].mxu0
    %2434 = vdwg.mxu0
    %v2435 = vmul.f32 %v2430, %v2389
    %v2436 = vpack.c.bf16 %v2435, %v2435
    %v2438 = vsel %vm124, %v2436, 0
    %2440 = vmatprep.subr.bf16.mxu0 0
    %2441 = vmatpush1.bf16.msra.mxu0 %v300
    %2442 = vmatprep.subr.bf16.mxu0 0
    %2443 = vmatpush1.bf16.msra.mxu0 %v301
    %2444 = vmatprep.subr.bf16.mxu0 0
    %2445 = vmatpush1.bf16.msra.mxu0 0
    %2446 = vmatprep.subr.bf16.mxu0 0
    %2447 = vmatpush1.bf16.msra.mxu0 0
    %2448 = vmatprep.subr.bf16.mxu0 0
    %2449 = vmatpush1.bf16.msra.mxu0 0
    %2450 = vmatprep.subr.bf16.mxu0 0
    %2451 = vmatpush1.bf16.msra.mxu0 0
    %2452 = vmatprep.subr.bf16.mxu0 0
    %2453 = vmatpush1.bf16.msra.mxu0 0
    %2454 = vmatprep.subr.bf16.mxu0 0
    %2455 = vmatpush1.bf16.msra.mxu0 0
    %2456 = vmatprep.subr.bf16.mxu0 0
    %2457 = vmatpush1.bf16.msra.mxu0 0
    %2458 = vmatprep.subr.bf16.mxu0 0
    %2459 = vmatpush1.bf16.msra.mxu0 0
    %2460 = vmatprep.subr.bf16.mxu0 0
    %2461 = vmatpush1.bf16.msra.mxu0 0
    %2462 = vmatprep.subr.bf16.mxu0 0
    %2463 = vmatpush1.bf16.msra.mxu0 0
    %2464 = vmatprep.subr.bf16.mxu0 0
    %2465 = vmatpush1.bf16.msra.mxu0 0
    %2466 = vmatprep.subr.bf16.mxu0 0
    %2467 = vmatpush1.bf16.msra.mxu0 0
    %2468 = vmatprep.subr.bf16.mxu0 0
    %2469 = vmatpush1.bf16.msra.mxu0 0
    %2470 = vmatprep.subr.bf16.mxu0 0
    %2471 = vmatpush1.bf16.msra.mxu0 0
    %2472 = vmatprep.mubr.bf16.mxu0 0
    %2473 = vmatmul.mubr.bf16.gmra.mrb[0].mxu0 %v2438
    %v2474 = vpop.f32.mrb[0].mxu0
    %v2475 = vadd.f32 0.0, %v2474
    %v2476 = vpop.f32.mrb[0].mxu0
    %v2477 = vpop.f32.mrb[0].mxu0
    %v2478 = vpop.f32.mrb[0].mxu0
    %2479 = vdwg.mxu0
    %2480 = vmatprep.subr.bf16.mxu0 0
    %2481 = vmatpush1.bf16.msra.mxu0 %v355
    %2482 = vmatprep.subr.bf16.mxu0 0
    %2483 = vmatpush1.bf16.msra.mxu0 %v356
    %2484 = vmatprep.subr.bf16.mxu0 0
    %2485 = vmatpush1.bf16.msra.mxu0 0
    %2486 = vmatprep.subr.bf16.mxu0 0
    %2487 = vmatpush1.bf16.msra.mxu0 0
    %2488 = vmatprep.subr.bf16.mxu0 0
    %2489 = vmatpush1.bf16.msra.mxu0 0
    %2490 = vmatprep.subr.bf16.mxu0 0
    %2491 = vmatpush1.bf16.msra.mxu0 0
    %2492 = vmatprep.subr.bf16.mxu0 0
    %2493 = vmatpush1.bf16.msra.mxu0 0
    %2494 = vmatprep.subr.bf16.mxu0 0
    %2495 = vmatpush1.bf16.msra.mxu0 0
    %2496 = vmatprep.subr.bf16.mxu0 0
    %2497 = vmatpush1.bf16.msra.mxu0 0
    %2498 = vmatprep.subr.bf16.mxu0 0
    %2499 = vmatpush1.bf16.msra.mxu0 0
    %2500 = vmatprep.subr.bf16.mxu0 0
    %2501 = vmatpush1.bf16.msra.mxu0 0
    %2502 = vmatprep.subr.bf16.mxu0 0
    %2503 = vmatpush1.bf16.msra.mxu0 0
    %2504 = vmatprep.subr.bf16.mxu0 0
    %2505 = vmatpush1.bf16.msra.mxu0 0
    %2506 = vmatprep.subr.bf16.mxu0 0
    %2507 = vmatpush1.bf16.msra.mxu0 0
    %2508 = vmatprep.subr.bf16.mxu0 0
    %2509 = vmatpush1.bf16.msra.mxu0 0
    %2510 = vmatprep.subr.bf16.mxu0 0
    %2511 = vmatpush1.bf16.msra.mxu0 0
    %2512 = vmatprep.mubr.bf16.mxu0 0
    %2513 = vmatmul.mubr.bf16.gmra.mrb[0].mxu0 %v2337
    %v2514 = vpop.f32.mrb[0].mxu0
    %v2515 = vadd.f32 %v2475, %v2514
    %v2516 = vpop.f32.mrb[0].mxu0
    %v2517 = vpop.f32.mrb[0].mxu0
    %v2518 = vpop.f32.mrb[0].mxu0
    %2519 = vdwg.mxu0
    %v2520 = vadd.f32 %v2515, %v94
    %v2521 = vmax.f32 %v2520, 0.0
    %v2522 = vpack.c.bf16 %v2521, %v2521
    %2523 = vmatprep.subr.bf16.mxu0 0
    %2524 = vmatpush1.bf16.msra.mxu0 %v410
    %2525 = vmatprep.subr.bf16.mxu0 0
    %2526 = vmatpush1.bf16.msra.mxu0 %v411
    %2527 = vmatprep.subr.bf16.mxu0 0
    %2528 = vmatpush1.bf16.msra.mxu0 0
    %2529 = vmatprep.subr.bf16.mxu0 0
    %2530 = vmatpush1.bf16.msra.mxu0 0
    %2531 = vmatprep.subr.bf16.mxu0 0
    %2532 = vmatpush1.bf16.msra.mxu0 0
    %2533 = vmatprep.subr.bf16.mxu0 0
    %2534 = vmatpush1.bf16.msra.mxu0 0
    %2535 = vmatprep.subr.bf16.mxu0 0
    %2536 = vmatpush1.bf16.msra.mxu0 0
    %2537 = vmatprep.subr.bf16.mxu0 0
    %2538 = vmatpush1.bf16.msra.mxu0 0
    %2539 = vmatprep.subr.bf16.mxu0 0
    %2540 = vmatpush1.bf16.msra.mxu0 0
    %2541 = vmatprep.subr.bf16.mxu0 0
    %2542 = vmatpush1.bf16.msra.mxu0 0
    %2543 = vmatprep.subr.bf16.mxu0 0
    %2544 = vmatpush1.bf16.msra.mxu0 0
    %2545 = vmatprep.subr.bf16.mxu0 0
    %2546 = vmatpush1.bf16.msra.mxu0 0
    %2547 = vmatprep.subr.bf16.mxu0 0
    %2548 = vmatpush1.bf16.msra.mxu0 0
    %2549 = vmatprep.subr.bf16.mxu0 0
    %2550 = vmatpush1.bf16.msra.mxu0 0
    %2551 = vmatprep.subr.bf16.mxu0 0
    %2552 = vmatpush1.bf16.msra.mxu0 0
    %2553 = vmatprep.subr.bf16.mxu0 0
    %2554 = vmatpush1.bf16.msra.mxu0 0
    %2555 = vmatprep.mubr.bf16.mxu0 0
    %2556 = vmatmul.mubr.bf16.gmra.mrb[0].mxu0 %v2221
    %v2557 = vpop.f32.mrb[0].mxu0
    %v2558 = vadd.f32 0.0, %v2557
    %v2559 = vpop.f32.mrb[0].mxu0
    %v2560 = vpop.f32.mrb[0].mxu0
    %v2561 = vpop.f32.mrb[0].mxu0
    %2562 = vdwg.mxu0
    %v2564 = vsel %vm124, %v2522, 0
    %2566 = vmatprep.subr.bf16.mxu0 0
    %2567 = vmatpush1.bf16.msra.mxu0 %v462
    %2568 = vmatprep.subr.bf16.mxu0 0
    %2569 = vmatpush1.bf16.msra.mxu0 %v463
    %2570 = vmatprep.subr.bf16.mxu0 0
    %2571 = vmatpush1.bf16.msra.mxu0 0
    %2572 = vmatprep.subr.bf16.mxu0 0
    %2573 = vmatpush1.bf16.msra.mxu0 0
    %2574 = vmatprep.subr.bf16.mxu0 0
    %2575 = vmatpush1.bf16.msra.mxu0 0
    %2576 = vmatprep.subr.bf16.mxu0 0
    %2577 = vmatpush1.bf16.msra.mxu0 0
    %2578 = vmatprep.subr.bf16.mxu0 0
    %2579 = vmatpush1.bf16.msra.mxu0 0
    %2580 = vmatprep.subr.bf16.mxu0 0
    %2581 = vmatpush1.bf16.msra.mxu0 0
    %2582 = vmatprep.subr.bf16.mxu0 0
    %2583 = vmatpush1.bf16.msra.mxu0 0
    %2584 = vmatprep.subr.bf16.mxu0 0
    %2585 = vmatpush1.bf16.msra.mxu0 0
    %2586 = vmatprep.subr.bf16.mxu0 0
    %2587 = vmatpush1.bf16.msra.mxu0 0
    %2588 = vmatprep.subr.bf16.mxu0 0
    %2589 = vmatpush1.bf16.msra.mxu0 0
    %2590 = vmatprep.subr.bf16.mxu0 0
    %2591 = vmatpush1.bf16.msra.mxu0 0
    %2592 = vmatprep.subr.bf16.mxu0 0
    %2593 = vmatpush1.bf16.msra.mxu0 0
    %2594 = vmatprep.subr.bf16.mxu0 0
    %2595 = vmatpush1.bf16.msra.mxu0 0
    %2596 = vmatprep.subr.bf16.mxu0 0
    %2597 = vmatpush1.bf16.msra.mxu0 0
    %2598 = vmatprep.mubr.bf16.mxu0 0
    %2599 = vmatmul.mubr.bf16.gmra.mrb[0].mxu0 %v2564
    %v2600 = vpop.f32.mrb[0].mxu0
    %v2601 = vadd.f32 %v2558, %v2600
    %v2602 = vpop.f32.mrb[0].mxu0
    %v2603 = vpop.f32.mrb[0].mxu0
    %v2604 = vpop.f32.mrb[0].mxu0
    %2605 = vdwg.mxu0
    %v2606 = vadd.f32 %v2601, %v103
    %v2607 = vxor.u32 %v2606, 2147483648
    %v2608 = vmul.f32 %v2607, 1.442695
    %v2609 = vpow.pop %v2608
    %v2610 = vadd.f32 %v2609, 1.0
    %v2611 = vrcp.pop %v2610
    %v2612 = vmul.f32 1.0, %v2611
    %2614 = vrot.lane.b32.xlu0 %v2606, 32
    %v2615 = vpop.permute.xlu0 %2614
    %v2617 = vmul.f32 %v2612, %v2615
    %2619 = vrot.lane.b32.xlu0 %v2617, 64
    %v2620 = vpop.permute.xlu0 %2619
    %v2622 = vadd.f32 %v2606, %v2620
    %v2623 = vtanh.pop %v2622
    %v2624 = vsub.f32 1.0, %v2612
    %2626 = vrot.lane.b32.xlu0 %v2623, 96
    %v2627 = vpop.permute.xlu0 %2626
    %v2629 = vmul.f32 %v2624, %v2627
    %v2630 = vmul.f32 %v2612, %v2215
    %v2631 = vadd.f32 %v2629, %v2630
    %v2632 = vpack.c.bf16 %v2631, %v2631
    %2634 = vrot.lane.b32.xlu0 %v2632, 96
    %v2635 = vpop.permute.xlu0 %2634
    %v2637 = vsel %vm124, %v2635, 0
    %2639 = vmatprep.subr.bf16.mxu0 0
    %2640 = vmatpush1.bf16.msra.mxu0 %v555
    %2641 = vmatprep.subr.bf16.mxu0 0
    %2642 = vmatpush1.bf16.msra.mxu0 %v556
    %2643 = vmatprep.subr.bf16.mxu0 0
    %2644 = vmatpush1.bf16.msra.mxu0 0
    %2645 = vmatprep.subr.bf16.mxu0 0
    %2646 = vmatpush1.bf16.msra.mxu0 0
    %2647 = vmatprep.subr.bf16.mxu0 0
    %2648 = vmatpush1.bf16.msra.mxu0 0
    %2649 = vmatprep.subr.bf16.mxu0 0
    %2650 = vmatpush1.bf16.msra.mxu0 0
    %2651 = vmatprep.subr.bf16.mxu0 0
    %2652 = vmatpush1.bf16.msra.mxu0 0
    %2653 = vmatprep.subr.bf16.mxu0 0
    %2654 = vmatpush1.bf16.msra.mxu0 0
    %2655 = vmatprep.subr.bf16.mxu0 0
    %2656 = vmatpush1.bf16.msra.mxu0 0
    %2657 = vmatprep.subr.bf16.mxu0 0
    %2658 = vmatpush1.bf16.msra.mxu0 0
    %2659 = vmatprep.subr.bf16.mxu0 0
    %2660 = vmatpush1.bf16.msra.mxu0 0
    %2661 = vmatprep.subr.bf16.mxu0 0
    %2662 = vmatpush1.bf16.msra.mxu0 0
    %2663 = vmatprep.subr.bf16.mxu0 0
    %2664 = vmatpush1.bf16.msra.mxu0 0
    %2665 = vmatprep.subr.bf16.mxu0 0
    %2666 = vmatpush1.bf16.msra.mxu0 0
    %2667 = vmatprep.subr.bf16.mxu0 0
    %2668 = vmatpush1.bf16.msra.mxu0 0
    %2669 = vmatprep.subr.bf16.mxu0 0
    %2670 = vmatpush1.bf16.msra.mxu0 0
    %2671 = vmatprep.mubr.bf16.mxu0 0
    %2672 = vmatmul.mubr.bf16.gmra.mrb[0].mxu0 %v2637
    %v2673 = vpop.f32.mrb[0].mxu0
    %v2674 = vadd.f32 %v108, %v2673
    %v2675 = vpop.f32.mrb[0].mxu0
    %v2676 = vpop.f32.mrb[0].mxu0
    %v2677 = vpop.f32.mrb[0].mxu0
    %2678 = vdwg.mxu0
    %v2679 = vsel %vm602, %v2674, -inf
    %2680 = vmax.xlane.f32.xlu0 %v2679
    %v2681 = vpop.xlane.xlu0 %2680
    %v2682 = vsub.f32 %v2674, %v2681
    %v2683 = vmul.f32 %v2682, 1.442695
    %v2684 = vpow.pop %v2683
    %v2685 = vsel %vm602, %v2684, 0.0
    %2686 = vadd.xlane.f32.xlu0 %v2685
    %v2687 = vpop.xlane.xlu0 %2686
    %v2688 = vlog2.pop %v2687
    %v2689 = vmul.f32 %v2688, 0.6931472
    %v2690 = vadd.f32 %v2689, %v2681
    %v2691 = vsub.f32 %v2674, %v2690
    %2693 = vrot.lane.b32.xlu0 %v2631, 112
    %v2694 = vpop.permute.xlu0 %2693
    %2697 = vrot.lane.b32.xlu0 %v2390, 48
    %v2698 = vpop.permute.xlu0 %2697
    %v2700 = vsel %vm624, %v2691, %v2694
    %v2701 = vsel %vm626, %v2700, %v2698
    %v2702 = vsel %vm628, %v2701, 0.0
    %2703 = vst [vmem:[#allocation7 + $0x5] sm:$0x1] %v2702
    %v2704 = vld [vmem:[#allocation2] sm:$0x8]
    %2705 = vmatprep.subr.bf16.mxu0 0
    %2706 = vmatpush1.bf16.msra.mxu0 %v120
    %2707 = vmatprep.subr.bf16.mxu0 0
    %2708 = vmatpush1.bf16.msra.mxu0 %v121
    %2709 = vmatprep.subr.bf16.mxu0 0
    %2710 = vmatpush1.bf16.msra.mxu0 0
    %2711 = vmatprep.subr.bf16.mxu0 0
    %2712 = vmatpush1.bf16.msra.mxu0 0
    %2713 = vmatprep.subr.bf16.mxu0 0
    %2714 = vmatpush1.bf16.msra.mxu0 0
    %2715 = vmatprep.subr.bf16.mxu0 0
    %2716 = vmatpush1.bf16.msra.mxu0 0
    %2717 = vmatprep.subr.bf16.mxu0 0
    %2718 = vmatpush1.bf16.msra.mxu0 0
    %2719 = vmatprep.subr.bf16.mxu0 0
    %2720 = vmatpush1.bf16.msra.mxu0 0
    %2721 = vmatprep.subr.bf16.mxu0 0
    %2722 = vmatpush1.bf16.msra.mxu0 0
    %2723 = vmatprep.subr.bf16.mxu0 0
    %2724 = vmatpush1.bf16.msra.mxu0 0
    %2725 = vmatprep.subr.bf16.mxu0 0
    %2726 = vmatpush1.bf16.msra.mxu0 0
    %2727 = vmatprep.subr.bf16.mxu0 0
    %2728 = vmatpush1.bf16.msra.mxu0 0
    %2729 = vmatprep.subr.bf16.mxu0 0
    %2730 = vmatpush1.bf16.msra.mxu0 0
    %2731 = vmatprep.subr.bf16.mxu0 0
    %2732 = vmatpush1.bf16.msra.mxu0 0
    %2733 = vmatprep.subr.bf16.mxu0 0
    %2734 = vmatpush1.bf16.msra.mxu0 0
    %2735 = vmatprep.subr.bf16.mxu0 0
    %2736 = vmatpush1.bf16.msra.mxu0 0
    %2737 = vmatprep.mubr.bf16.mxu0 0
    %2738 = vmatmul.mubr.bf16.gmra.mrb[0].mxu0 %v2637
    %v2739 = vpop.f32.mrb[0].mxu0
    %v2740 = vadd.f32 0.0, %v2739
    %v2741 = vpop.f32.mrb[0].mxu0
    %v2742 = vpop.f32.mrb[0].mxu0
    %v2743 = vpop.f32.mrb[0].mxu0
    %2744 = vdwg.mxu0
    %v2746 = vunpack.c.l.b16 %v2704
    %v2747 = vpack.c.b16 %v2746, %v2746
    %v2748 = vrot.slane %v2747, 3
    %v2750 = vsel %vm124, %v2748, 0
    %2752 = vmatprep.subr.bf16.mxu0 0
    %2753 = vmatpush1.bf16.msra.mxu0 %v176
    %2754 = vmatprep.subr.bf16.mxu0 0
    %2755 = vmatpush1.bf16.msra.mxu0 %v177
    %2756 = vmatprep.subr.bf16.mxu0 0
    %2757 = vmatpush1.bf16.msra.mxu0 0
    %2758 = vmatprep.subr.bf16.mxu0 0
    %2759 = vmatpush1.bf16.msra.mxu0 0
    %2760 = vmatprep.subr.bf16.mxu0 0
    %2761 = vmatpush1.bf16.msra.mxu0 0
    %2762 = vmatprep.subr.bf16.mxu0 0
    %2763 = vmatpush1.bf16.msra.mxu0 0
    %2764 = vmatprep.subr.bf16.mxu0 0
    %2765 = vmatpush1.bf16.msra.mxu0 0
    %2766 = vmatprep.subr.bf16.mxu0 0
    %2767 = vmatpush1.bf16.msra.mxu0 0
    %2768 = vmatprep.subr.bf16.mxu0 0
    %2769 = vmatpush1.bf16.msra.mxu0 0
    %2770 = vmatprep.subr.bf16.mxu0 0
    %2771 = vmatpush1.bf16.msra.mxu0 0
    %2772 = vmatprep.subr.bf16.mxu0 0
    %2773 = vmatpush1.bf16.msra.mxu0 0
    %2774 = vmatprep.subr.bf16.mxu0 0
    %2775 = vmatpush1.bf16.msra.mxu0 0
    %2776 = vmatprep.subr.bf16.mxu0 0
    %2777 = vmatpush1.bf16.msra.mxu0 0
    %2778 = vmatprep.subr.bf16.mxu0 0
    %2779 = vmatpush1.bf16.msra.mxu0 0
    %2780 = vmatprep.subr.bf16.mxu0 0
    %2781 = vmatpush1.bf16.msra.mxu0 0
    %2782 = vmatprep.subr.bf16.mxu0 0
    %2783 = vmatpush1.bf16.msra.mxu0 0
    %2784 = vmatprep.mubr.bf16.mxu0 0
    %2785 = vmatmul.mubr.bf16.gmra.mrb[0].mxu0 %v2750
    %v2786 = vpop.f32.mrb[0].mxu0
    %v2787 = vadd.f32 %v2740, %v2786
    %v2788 = vpop.f32.mrb[0].mxu0
    %v2789 = vpop.f32.mrb[0].mxu0
    %v2790 = vpop.f32.mrb[0].mxu0
    %2791 = vdwg.mxu0
    %v2792 = vadd.f32 %v2787, %v85
    %v2793 = vsel %vm224, %v2792, -inf
    %2794 = vmax.xlane.f32.xlu0 %v2793
    %v2795 = vpop.xlane.xlu0 %2794
    %v2796 = vsub.f32 %v2792, %v2795
    %v2797 = vmul.f32 %v2796, 1.442695
    %v2798 = vpow.pop %v2797
    %v2799 = vsel %vm224, %v2798, 0.0
    %2800 = vadd.xlane.f32.xlu0 %v2799
    %v2801 = vpop.xlane.xlu0 %2800
    %v2802 = vrcp.pop %v2801
    %v2803 = vmul.f32 %v2798, %v2802
    %v2804 = vpack.c.bf16 %v2798, %v2798
    %v2806 = vsel %vm242, %v2804, 0
    %2808 = vmatprep.subr.bf16.mxu0 0
    %2809 = vmatpush1.bf16.msra.mxu0 %v248
    %2810 = vmatprep.subr.bf16.mxu0 0
    %2811 = vmatpush1.bf16.msra.mxu0 0
    %2812 = vmatprep.subr.bf16.mxu0 0
    %2813 = vmatpush1.bf16.msra.mxu0 0
    %2814 = vmatprep.subr.bf16.mxu0 0
    %2815 = vmatpush1.bf16.msra.mxu0 0
    %2816 = vmatprep.subr.bf16.mxu0 0
    %2817 = vmatpush1.bf16.msra.mxu0 0
    %2818 = vmatprep.subr.bf16.mxu0 0
    %2819 = vmatpush1.bf16.msra.mxu0 0
    %2820 = vmatprep.subr.bf16.mxu0 0
    %2821 = vmatpush1.bf16.msra.mxu0 0
    %2822 = vmatprep.subr.bf16.mxu0 0
    %2823 = vmatpush1.bf16.msra.mxu0 0
    %2824 = vmatprep.subr.bf16.mxu0 0
    %2825 = vmatpush1.bf16.msra.mxu0 0
    %2826 = vmatprep.subr.bf16.mxu0 0
    %2827 = vmatpush1.bf16.msra.mxu0 0
    %2828 = vmatprep.subr.bf16.mxu0 0
    %2829 = vmatpush1.bf16.msra.mxu0 0
    %2830 = vmatprep.subr.bf16.mxu0 0
    %2831 = vmatpush1.bf16.msra.mxu0 0
    %2832 = vmatprep.subr.bf16.mxu0 0
    %2833 = vmatpush1.bf16.msra.mxu0 0
    %2834 = vmatprep.subr.bf16.mxu0 0
    %2835 = vmatpush1.bf16.msra.mxu0 0
    %2836 = vmatprep.subr.bf16.mxu0 0
    %2837 = vmatpush1.bf16.msra.mxu0 0
    %2838 = vmatprep.subr.bf16.mxu0 0
    %2839 = vmatpush1.bf16.msra.mxu0 0
    %2840 = vmatprep.mubr.bf16.mxu0 0
    %2841 = vmatmul.mubr.bf16.gmra.mrb[0].mxu0 %v2806
    %v2842 = vpop.f32.mrb[0].mxu0
    %v2843 = vadd.f32 0.0, %v2842
    %v2844 = vpop.f32.mrb[0].mxu0
    %v2845 = vpop.f32.mrb[0].mxu0
    %v2846 = vpop.f32.mrb[0].mxu0
    %2847 = vdwg.mxu0
    %v2848 = vmul.f32 %v2843, %v2802
    %v2849 = vpack.c.bf16 %v2848, %v2848
    %v2851 = vsel %vm124, %v2849, 0
    %2853 = vmatprep.subr.bf16.mxu0 0
    %2854 = vmatpush1.bf16.msra.mxu0 %v300
    %2855 = vmatprep.subr.bf16.mxu0 0
    %2856 = vmatpush1.bf16.msra.mxu0 %v301
    %2857 = vmatprep.subr.bf16.mxu0 0
    %2858 = vmatpush1.bf16.msra.mxu0 0
    %2859 = vmatprep.subr.bf16.mxu0 0
    %2860 = vmatpush1.bf16.msra.mxu0 0
    %2861 = vmatprep.subr.bf16.mxu0 0
    %2862 = vmatpush1.bf16.msra.mxu0 0
    %2863 = vmatprep.subr.bf16.mxu0 0
    %2864 = vmatpush1.bf16.msra.mxu0 0
    %2865 = vmatprep.subr.bf16.mxu0 0
    %2866 = vmatpush1.bf16.msra.mxu0 0
    %2867 = vmatprep.subr.bf16.mxu0 0
    %2868 = vmatpush1.bf16.msra.mxu0 0
    %2869 = vmatprep.subr.bf16.mxu0 0
    %2870 = vmatpush1.bf16.msra.mxu0 0
    %2871 = vmatprep.subr.bf16.mxu0 0
    %2872 = vmatpush1.bf16.msra.mxu0 0
    %2873 = vmatprep.subr.bf16.mxu0 0
    %2874 = vmatpush1.bf16.msra.mxu0 0
    %2875 = vmatprep.subr.bf16.mxu0 0
    %2876 = vmatpush1.bf16.msra.mxu0 0
    %2877 = vmatprep.subr.bf16.mxu0 0
    %2878 = vmatpush1.bf16.msra.mxu0 0
    %2879 = vmatprep.subr.bf16.mxu0 0
    %2880 = vmatpush1.bf16.msra.mxu0 0
    %2881 = vmatprep.subr.bf16.mxu0 0
    %2882 = vmatpush1.bf16.msra.mxu0 0
    %2883 = vmatprep.subr.bf16.mxu0 0
    %2884 = vmatpush1.bf16.msra.mxu0 0
    %2885 = vmatprep.mubr.bf16.mxu0 0
    %2886 = vmatmul.mubr.bf16.gmra.mrb[0].mxu0 %v2851
    %v2887 = vpop.f32.mrb[0].mxu0
    %v2888 = vadd.f32 0.0, %v2887
    %v2889 = vpop.f32.mrb[0].mxu0
    %v2890 = vpop.f32.mrb[0].mxu0
    %v2891 = vpop.f32.mrb[0].mxu0
    %2892 = vdwg.mxu0
    %2893 = vmatprep.subr.bf16.mxu0 0
    %2894 = vmatpush1.bf16.msra.mxu0 %v355
    %2895 = vmatprep.subr.bf16.mxu0 0
    %2896 = vmatpush1.bf16.msra.mxu0 %v356
    %2897 = vmatprep.subr.bf16.mxu0 0
    %2898 = vmatpush1.bf16.msra.mxu0 0
    %2899 = vmatprep.subr.bf16.mxu0 0
    %2900 = vmatpush1.bf16.msra.mxu0 0
    %2901 = vmatprep.subr.bf16.mxu0 0
    %2902 = vmatpush1.bf16.msra.mxu0 0
    %2903 = vmatprep.subr.bf16.mxu0 0
    %2904 = vmatpush1.bf16.msra.mxu0 0
    %2905 = vmatprep.subr.bf16.mxu0 0
    %2906 = vmatpush1.bf16.msra.mxu0 0
    %2907 = vmatprep.subr.bf16.mxu0 0
    %2908 = vmatpush1.bf16.msra.mxu0 0
    %2909 = vmatprep.subr.bf16.mxu0 0
    %2910 = vmatpush1.bf16.msra.mxu0 0
    %2911 = vmatprep.subr.bf16.mxu0 0
    %2912 = vmatpush1.bf16.msra.mxu0 0
    %2913 = vmatprep.subr.bf16.mxu0 0
    %2914 = vmatpush1.bf16.msra.mxu0 0
    %2915 = vmatprep.subr.bf16.mxu0 0
    %2916 = vmatpush1.bf16.msra.mxu0 0
    %2917 = vmatprep.subr.bf16.mxu0 0
    %2918 = vmatpush1.bf16.msra.mxu0 0
    %2919 = vmatprep.subr.bf16.mxu0 0
    %2920 = vmatpush1.bf16.msra.mxu0 0
    %2921 = vmatprep.subr.bf16.mxu0 0
    %2922 = vmatpush1.bf16.msra.mxu0 0
    %2923 = vmatprep.subr.bf16.mxu0 0
    %2924 = vmatpush1.bf16.msra.mxu0 0
    %2925 = vmatprep.mubr.bf16.mxu0 0
    %2926 = vmatmul.mubr.bf16.gmra.mrb[0].mxu0 %v2750
    %v2927 = vpop.f32.mrb[0].mxu0
    %v2928 = vadd.f32 %v2888, %v2927
    %v2929 = vpop.f32.mrb[0].mxu0
    %v2930 = vpop.f32.mrb[0].mxu0
    %v2931 = vpop.f32.mrb[0].mxu0
    %2932 = vdwg.mxu0
    %v2933 = vadd.f32 %v2928, %v94
    %v2934 = vmax.f32 %v2933, 0.0
    %v2935 = vpack.c.bf16 %v2934, %v2934
    %2936 = vmatprep.subr.bf16.mxu0 0
    %2937 = vmatpush1.bf16.msra.mxu0 %v410
    %2938 = vmatprep.subr.bf16.mxu0 0
    %2939 = vmatpush1.bf16.msra.mxu0 %v411
    %2940 = vmatprep.subr.bf16.mxu0 0
    %2941 = vmatpush1.bf16.msra.mxu0 0
    %2942 = vmatprep.subr.bf16.mxu0 0
    %2943 = vmatpush1.bf16.msra.mxu0 0
    %2944 = vmatprep.subr.bf16.mxu0 0
    %2945 = vmatpush1.bf16.msra.mxu0 0
    %2946 = vmatprep.subr.bf16.mxu0 0
    %2947 = vmatpush1.bf16.msra.mxu0 0
    %2948 = vmatprep.subr.bf16.mxu0 0
    %2949 = vmatpush1.bf16.msra.mxu0 0
    %2950 = vmatprep.subr.bf16.mxu0 0
    %2951 = vmatpush1.bf16.msra.mxu0 0
    %2952 = vmatprep.subr.bf16.mxu0 0
    %2953 = vmatpush1.bf16.msra.mxu0 0
    %2954 = vmatprep.subr.bf16.mxu0 0
    %2955 = vmatpush1.bf16.msra.mxu0 0
    %2956 = vmatprep.subr.bf16.mxu0 0
    %2957 = vmatpush1.bf16.msra.mxu0 0
    %2958 = vmatprep.subr.bf16.mxu0 0
    %2959 = vmatpush1.bf16.msra.mxu0 0
    %2960 = vmatprep.subr.bf16.mxu0 0
    %2961 = vmatpush1.bf16.msra.mxu0 0
    %2962 = vmatprep.subr.bf16.mxu0 0
    %2963 = vmatpush1.bf16.msra.mxu0 0
    %2964 = vmatprep.subr.bf16.mxu0 0
    %2965 = vmatpush1.bf16.msra.mxu0 0
    %2966 = vmatprep.subr.bf16.mxu0 0
    %2967 = vmatpush1.bf16.msra.mxu0 0
    %2968 = vmatprep.mubr.bf16.mxu0 0
    %2969 = vmatmul.mubr.bf16.gmra.mrb[0].mxu0 %v2637
    %v2970 = vpop.f32.mrb[0].mxu0
    %v2971 = vadd.f32 0.0, %v2970
    %v2972 = vpop.f32.mrb[0].mxu0
    %v2973 = vpop.f32.mrb[0].mxu0
    %v2974 = vpop.f32.mrb[0].mxu0
    %2975 = vdwg.mxu0
    %v2977 = vsel %vm124, %v2935, 0
    %2979 = vmatprep.subr.bf16.mxu0 0
    %2980 = vmatpush1.bf16.msra.mxu0 %v462
    %2981 = vmatprep.subr.bf16.mxu0 0
    %2982 = vmatpush1.bf16.msra.mxu0 %v463
    %2983 = vmatprep.subr.bf16.mxu0 0
    %2984 = vmatpush1.bf16.msra.mxu0 0
    %2985 = vmatprep.subr.bf16.mxu0 0
    %2986 = vmatpush1.bf16.msra.mxu0 0
    %2987 = vmatprep.subr.bf16.mxu0 0
    %2988 = vmatpush1.bf16.msra.mxu0 0
    %2989 = vmatprep.subr.bf16.mxu0 0
    %2990 = vmatpush1.bf16.msra.mxu0 0
    %2991 = vmatprep.subr.bf16.mxu0 0
    %2992 = vmatpush1.bf16.msra.mxu0 0
    %2993 = vmatprep.subr.bf16.mxu0 0
    %2994 = vmatpush1.bf16.msra.mxu0 0
    %2995 = vmatprep.subr.bf16.mxu0 0
    %2996 = vmatpush1.bf16.msra.mxu0 0
    %2997 = vmatprep.subr.bf16.mxu0 0
    %2998 = vmatpush1.bf16.msra.mxu0 0
    %2999 = vmatprep.subr.bf16.mxu0 0
    %3000 = vmatpush1.bf16.msra.mxu0 0
    %3001 = vmatprep.subr.bf16.mxu0 0
    %3002 = vmatpush1.bf16.msra.mxu0 0
    %3003 = vmatprep.subr.bf16.mxu0 0
    %3004 = vmatpush1.bf16.msra.mxu0 0
    %3005 = vmatprep.subr.bf16.mxu0 0
    %3006 = vmatpush1.bf16.msra.mxu0 0
    %3007 = vmatprep.subr.bf16.mxu0 0
    %3008 = vmatpush1.bf16.msra.mxu0 0
    %3009 = vmatprep.subr.bf16.mxu0 0
    %3010 = vmatpush1.bf16.msra.mxu0 0
    %3011 = vmatprep.mubr.bf16.mxu0 0
    %3012 = vmatmul.mubr.bf16.gmra.mrb[0].mxu0 %v2977
    %v3013 = vpop.f32.mrb[0].mxu0
    %v3014 = vadd.f32 %v2971, %v3013
    %v3015 = vpop.f32.mrb[0].mxu0
    %v3016 = vpop.f32.mrb[0].mxu0
    %v3017 = vpop.f32.mrb[0].mxu0
    %3018 = vdwg.mxu0
    %v3019 = vadd.f32 %v3014, %v103
    %v3020 = vxor.u32 %v3019, 2147483648
    %v3021 = vmul.f32 %v3020, 1.442695
    %v3022 = vpow.pop %v3021
    %v3023 = vadd.f32 %v3022, 1.0
    %v3024 = vrcp.pop %v3023
    %v3025 = vmul.f32 1.0, %v3024
    %3027 = vrot.lane.b32.xlu0 %v3019, 32
    %v3028 = vpop.permute.xlu0 %3027
    %v3030 = vmul.f32 %v3025, %v3028
    %3032 = vrot.lane.b32.xlu0 %v3030, 64
    %v3033 = vpop.permute.xlu0 %3032
    %v3035 = vadd.f32 %v3019, %v3033
    %v3036 = vtanh.pop %v3035
    %v3037 = vsub.f32 1.0, %v3025
    %3039 = vrot.lane.b32.xlu0 %v3036, 96
    %v3040 = vpop.permute.xlu0 %3039
    %v3042 = vmul.f32 %v3037, %v3040
    %v3043 = vmul.f32 %v3025, %v2631
    %v3044 = vadd.f32 %v3042, %v3043
    %v3045 = vpack.c.bf16 %v3044, %v3044
    %3047 = vrot.lane.b32.xlu0 %v3045, 96
    %v3048 = vpop.permute.xlu0 %3047
    %v3050 = vsel %vm124, %v3048, 0
    %3052 = vmatprep.subr.bf16.mxu0 0
    %3053 = vmatpush1.bf16.msra.mxu0 %v555
    %3054 = vmatprep.subr.bf16.mxu0 0
    %3055 = vmatpush1.bf16.msra.mxu0 %v556
    %3056 = vmatprep.subr.bf16.mxu0 0
    %3057 = vmatpush1.bf16.msra.mxu0 0
    %3058 = vmatprep.subr.bf16.mxu0 0
    %3059 = vmatpush1.bf16.msra.mxu0 0
    %3060 = vmatprep.subr.bf16.mxu0 0
    %3061 = vmatpush1.bf16.msra.mxu0 0
    %3062 = vmatprep.subr.bf16.mxu0 0
    %3063 = vmatpush1.bf16.msra.mxu0 0
    %3064 = vmatprep.subr.bf16.mxu0 0
    %3065 = vmatpush1.bf16.msra.mxu0 0
    %3066 = vmatprep.subr.bf16.mxu0 0
    %3067 = vmatpush1.bf16.msra.mxu0 0
    %3068 = vmatprep.subr.bf16.mxu0 0
    %3069 = vmatpush1.bf16.msra.mxu0 0
    %3070 = vmatprep.subr.bf16.mxu0 0
    %3071 = vmatpush1.bf16.msra.mxu0 0
    %3072 = vmatprep.subr.bf16.mxu0 0
    %3073 = vmatpush1.bf16.msra.mxu0 0
    %3074 = vmatprep.subr.bf16.mxu0 0
    %3075 = vmatpush1.bf16.msra.mxu0 0
    %3076 = vmatprep.subr.bf16.mxu0 0
    %3077 = vmatpush1.bf16.msra.mxu0 0
    %3078 = vmatprep.subr.bf16.mxu0 0
    %3079 = vmatpush1.bf16.msra.mxu0 0
    %3080 = vmatprep.subr.bf16.mxu0 0
    %3081 = vmatpush1.bf16.msra.mxu0 0
    %3082 = vmatprep.subr.bf16.mxu0 0
    %3083 = vmatpush1.bf16.msra.mxu0 0
    %3084 = vmatprep.mubr.bf16.mxu0 0
    %3085 = vmatmul.mubr.bf16.gmra.mrb[0].mxu0 %v3050
    %v3086 = vpop.f32.mrb[0].mxu0
    %v3087 = vadd.f32 %v108, %v3086
    %v3088 = vpop.f32.mrb[0].mxu0
    %v3089 = vpop.f32.mrb[0].mxu0
    %v3090 = vpop.f32.mrb[0].mxu0
    %3091 = vdwg.mxu0
    %v3092 = vsel %vm602, %v3087, -inf
    %3093 = vmax.xlane.f32.xlu0 %v3092
    %v3094 = vpop.xlane.xlu0 %3093
    %v3095 = vsub.f32 %v3087, %v3094
    %v3096 = vmul.f32 %v3095, 1.442695
    %v3097 = vpow.pop %v3096
    %v3098 = vsel %vm602, %v3097, 0.0
    %3099 = vadd.xlane.f32.xlu0 %v3098
    %v3100 = vpop.xlane.xlu0 %3099
    %v3101 = vlog2.pop %v3100
    %v3102 = vmul.f32 %v3101, 0.6931472
    %v3103 = vadd.f32 %v3102, %v3094
    %v3104 = vsub.f32 %v3087, %v3103
    %3106 = vrot.lane.b32.xlu0 %v3044, 112
    %v3107 = vpop.permute.xlu0 %3106
    %3110 = vrot.lane.b32.xlu0 %v2803, 48
    %v3111 = vpop.permute.xlu0 %3110
    %v3113 = vsel %vm624, %v3104, %v3107
    %v3114 = vsel %vm626, %v3113, %v3111
    %v3115 = vsel %vm628, %v3114, 0.0
    %3116 = vst [vmem:[#allocation7 + $0x6] sm:$0x1] %v3115
    %v3117 = vld [vmem:[#allocation2] sm:$0x8]
    %3118 = vmatprep.subr.bf16.mxu0 0
    %3119 = vmatpush1.bf16.msra.mxu0 %v120
    %3120 = vmatprep.subr.bf16.mxu0 0
    %3121 = vmatpush1.bf16.msra.mxu0 %v121
    %3122 = vmatprep.subr.bf16.mxu0 0
    %3123 = vmatpush1.bf16.msra.mxu0 0
    %3124 = vmatprep.subr.bf16.mxu0 0
    %3125 = vmatpush1.bf16.msra.mxu0 0
    %3126 = vmatprep.subr.bf16.mxu0 0
    %3127 = vmatpush1.bf16.msra.mxu0 0
    %3128 = vmatprep.subr.bf16.mxu0 0
    %3129 = vmatpush1.bf16.msra.mxu0 0
    %3130 = vmatprep.subr.bf16.mxu0 0
    %3131 = vmatpush1.bf16.msra.mxu0 0
    %3132 = vmatprep.subr.bf16.mxu0 0
    %3133 = vmatpush1.bf16.msra.mxu0 0
    %3134 = vmatprep.subr.bf16.mxu0 0
    %3135 = vmatpush1.bf16.msra.mxu0 0
    %3136 = vmatprep.subr.bf16.mxu0 0
    %3137 = vmatpush1.bf16.msra.mxu0 0
    %3138 = vmatprep.subr.bf16.mxu0 0
    %3139 = vmatpush1.bf16.msra.mxu0 0
    %3140 = vmatprep.subr.bf16.mxu0 0
    %3141 = vmatpush1.bf16.msra.mxu0 0
    %3142 = vmatprep.subr.bf16.mxu0 0
    %3143 = vmatpush1.bf16.msra.mxu0 0
    %3144 = vmatprep.subr.bf16.mxu0 0
    %3145 = vmatpush1.bf16.msra.mxu0 0
    %3146 = vmatprep.subr.bf16.mxu0 0
    %3147 = vmatpush1.bf16.msra.mxu0 0
    %3148 = vmatprep.subr.bf16.mxu0 0
    %3149 = vmatpush1.bf16.msra.mxu0 0
    %3150 = vmatprep.mubr.bf16.mxu0 0
    %3151 = vmatmul.mubr.bf16.gmra.mrb[0].mxu0 %v3050
    %v3152 = vpop.f32.mrb[0].mxu0
    %v3153 = vadd.f32 0.0, %v3152
    %v3154 = vpop.f32.mrb[0].mxu0
    %v3155 = vpop.f32.mrb[0].mxu0
    %v3156 = vpop.f32.mrb[0].mxu0
    %3157 = vdwg.mxu0
    %v3159 = vunpack.c.l.b16 %v3117
    %v3160 = vpack.c.b16 %v3159, %v3159
    %v3162 = vshrl.u32 %v3160, 16
    %v3164 = vrot.slane %v3162, 3
    %v3166 = vsel %vm124, %v3164, 0
    %3168 = vmatprep.subr.bf16.mxu0 0
    %3169 = vmatpush1.bf16.msra.mxu0 %v176
    %3170 = vmatprep.subr.bf16.mxu0 0
    %3171 = vmatpush1.bf16.msra.mxu0 %v177
    %3172 = vmatprep.subr.bf16.mxu0 0
    %3173 = vmatpush1.bf16.msra.mxu0 0
    %3174 = vmatprep.subr.bf16.mxu0 0
    %3175 = vmatpush1.bf16.msra.mxu0 0
    %3176 = vmatprep.subr.bf16.mxu0 0
    %3177 = vmatpush1.bf16.msra.mxu0 0
    %3178 = vmatprep.subr.bf16.mxu0 0
    %3179 = vmatpush1.bf16.msra.mxu0 0
    %3180 = vmatprep.subr.bf16.mxu0 0
    %3181 = vmatpush1.bf16.msra.mxu0 0
    %3182 = vmatprep.subr.bf16.mxu0 0
    %3183 = vmatpush1.bf16.msra.mxu0 0
    %3184 = vmatprep.subr.bf16.mxu0 0
    %3185 = vmatpush1.bf16.msra.mxu0 0
    %3186 = vmatprep.subr.bf16.mxu0 0
    %3187 = vmatpush1.bf16.msra.mxu0 0
    %3188 = vmatprep.subr.bf16.mxu0 0
    %3189 = vmatpush1.bf16.msra.mxu0 0
    %3190 = vmatprep.subr.bf16.mxu0 0
    %3191 = vmatpush1.bf16.msra.mxu0 0
    %3192 = vmatprep.subr.bf16.mxu0 0
    %3193 = vmatpush1.bf16.msra.mxu0 0
    %3194 = vmatprep.subr.bf16.mxu0 0
    %3195 = vmatpush1.bf16.msra.mxu0 0
    %3196 = vmatprep.subr.bf16.mxu0 0
    %3197 = vmatpush1.bf16.msra.mxu0 0
    %3198 = vmatprep.subr.bf16.mxu0 0
    %3199 = vmatpush1.bf16.msra.mxu0 0
    %3200 = vmatprep.mubr.bf16.mxu0 0
    %3201 = vmatmul.mubr.bf16.gmra.mrb[0].mxu0 %v3166
    %v3202 = vpop.f32.mrb[0].mxu0
    %v3203 = vadd.f32 %v3153, %v3202
    %v3204 = vpop.f32.mrb[0].mxu0
    %v3205 = vpop.f32.mrb[0].mxu0
    %v3206 = vpop.f32.mrb[0].mxu0
    %3207 = vdwg.mxu0
    %v3208 = vadd.f32 %v3203, %v85
    %v3209 = vsel %vm224, %v3208, -inf
    %3210 = vmax.xlane.f32.xlu0 %v3209
    %v3211 = vpop.xlane.xlu0 %3210
    %v3212 = vsub.f32 %v3208, %v3211
    %v3213 = vmul.f32 %v3212, 1.442695
    %v3214 = vpow.pop %v3213
    %v3215 = vsel %vm224, %v3214, 0.0
    %3216 = vadd.xlane.f32.xlu0 %v3215
    %v3217 = vpop.xlane.xlu0 %3216
    %v3218 = vrcp.pop %v3217
    %v3219 = vmul.f32 %v3214, %v3218
    %v3220 = vpack.c.bf16 %v3214, %v3214
    %v3222 = vsel %vm242, %v3220, 0
    %3224 = vmatprep.subr.bf16.mxu0 0
    %3225 = vmatpush1.bf16.msra.mxu0 %v248
    %3226 = vmatprep.subr.bf16.mxu0 0
    %3227 = vmatpush1.bf16.msra.mxu0 0
    %3228 = vmatprep.subr.bf16.mxu0 0
    %3229 = vmatpush1.bf16.msra.mxu0 0
    %3230 = vmatprep.subr.bf16.mxu0 0
    %3231 = vmatpush1.bf16.msra.mxu0 0
    %3232 = vmatprep.subr.bf16.mxu0 0
    %3233 = vmatpush1.bf16.msra.mxu0 0
    %3234 = vmatprep.subr.bf16.mxu0 0
    %3235 = vmatpush1.bf16.msra.mxu0 0
    %3236 = vmatprep.subr.bf16.mxu0 0
    %3237 = vmatpush1.bf16.msra.mxu0 0
    %3238 = vmatprep.subr.bf16.mxu0 0
    %3239 = vmatpush1.bf16.msra.mxu0 0
    %3240 = vmatprep.subr.bf16.mxu0 0
    %3241 = vmatpush1.bf16.msra.mxu0 0
    %3242 = vmatprep.subr.bf16.mxu0 0
    %3243 = vmatpush1.bf16.msra.mxu0 0
    %3244 = vmatprep.subr.bf16.mxu0 0
    %3245 = vmatpush1.bf16.msra.mxu0 0
    %3246 = vmatprep.subr.bf16.mxu0 0
    %3247 = vmatpush1.bf16.msra.mxu0 0
    %3248 = vmatprep.subr.bf16.mxu0 0
    %3249 = vmatpush1.bf16.msra.mxu0 0
    %3250 = vmatprep.subr.bf16.mxu0 0
    %3251 = vmatpush1.bf16.msra.mxu0 0
    %3252 = vmatprep.subr.bf16.mxu0 0
    %3253 = vmatpush1.bf16.msra.mxu0 0
    %3254 = vmatprep.subr.bf16.mxu0 0
    %3255 = vmatpush1.bf16.msra.mxu0 0
    %3256 = vmatprep.mubr.bf16.mxu0 0
    %3257 = vmatmul.mubr.bf16.gmra.mrb[0].mxu0 %v3222
    %v3258 = vpop.f32.mrb[0].mxu0
    %v3259 = vadd.f32 0.0, %v3258
    %v3260 = vpop.f32.mrb[0].mxu0
    %v3261 = vpop.f32.mrb[0].mxu0
    %v3262 = vpop.f32.mrb[0].mxu0
    %3263 = vdwg.mxu0
    %v3264 = vmul.f32 %v3259, %v3218
    %v3265 = vpack.c.bf16 %v3264, %v3264
    %v3267 = vsel %vm124, %v3265, 0
    %3269 = vmatprep.subr.bf16.mxu0 0
    %3270 = vmatpush1.bf16.msra.mxu0 %v300
    %3271 = vmatprep.subr.bf16.mxu0 0
    %3272 = vmatpush1.bf16.msra.mxu0 %v301
    %3273 = vmatprep.subr.bf16.mxu0 0
    %3274 = vmatpush1.bf16.msra.mxu0 0
    %3275 = vmatprep.subr.bf16.mxu0 0
    %3276 = vmatpush1.bf16.msra.mxu0 0
    %3277 = vmatprep.subr.bf16.mxu0 0
    %3278 = vmatpush1.bf16.msra.mxu0 0
    %3279 = vmatprep.subr.bf16.mxu0 0
    %3280 = vmatpush1.bf16.msra.mxu0 0
    %3281 = vmatprep.subr.bf16.mxu0 0
    %3282 = vmatpush1.bf16.msra.mxu0 0
    %3283 = vmatprep.subr.bf16.mxu0 0
    %3284 = vmatpush1.bf16.msra.mxu0 0
    %3285 = vmatprep.subr.bf16.mxu0 0
    %3286 = vmatpush1.bf16.msra.mxu0 0
    %3287 = vmatprep.subr.bf16.mxu0 0
    %3288 = vmatpush1.bf16.msra.mxu0 0
    %3289 = vmatprep.subr.bf16.mxu0 0
    %3290 = vmatpush1.bf16.msra.mxu0 0
    %3291 = vmatprep.subr.bf16.mxu0 0
    %3292 = vmatpush1.bf16.msra.mxu0 0
    %3293 = vmatprep.subr.bf16.mxu0 0
    %3294 = vmatpush1.bf16.msra.mxu0 0
    %3295 = vmatprep.subr.bf16.mxu0 0
    %3296 = vmatpush1.bf16.msra.mxu0 0
    %3297 = vmatprep.subr.bf16.mxu0 0
    %3298 = vmatpush1.bf16.msra.mxu0 0
    %3299 = vmatprep.subr.bf16.mxu0 0
    %3300 = vmatpush1.bf16.msra.mxu0 0
    %3301 = vmatprep.mubr.bf16.mxu0 0
    %3302 = vmatmul.mubr.bf16.gmra.mrb[0].mxu0 %v3267
    %v3303 = vpop.f32.mrb[0].mxu0
    %v3304 = vadd.f32 0.0, %v3303
    %v3305 = vpop.f32.mrb[0].mxu0
    %v3306 = vpop.f32.mrb[0].mxu0
    %v3307 = vpop.f32.mrb[0].mxu0
    %3308 = vdwg.mxu0
    %3309 = vmatprep.subr.bf16.mxu0 0
    %3310 = vmatpush1.bf16.msra.mxu0 %v355
    %3311 = vmatprep.subr.bf16.mxu0 0
    %3312 = vmatpush1.bf16.msra.mxu0 %v356
    %3313 = vmatprep.subr.bf16.mxu0 0
    %3314 = vmatpush1.bf16.msra.mxu0 0
    %3315 = vmatprep.subr.bf16.mxu0 0
    %3316 = vmatpush1.bf16.msra.mxu0 0
    %3317 = vmatprep.subr.bf16.mxu0 0
    %3318 = vmatpush1.bf16.msra.mxu0 0
    %3319 = vmatprep.subr.bf16.mxu0 0
    %3320 = vmatpush1.bf16.msra.mxu0 0
    %3321 = vmatprep.subr.bf16.mxu0 0
    %3322 = vmatpush1.bf16.msra.mxu0 0
    %3323 = vmatprep.subr.bf16.mxu0 0
    %3324 = vmatpush1.bf16.msra.mxu0 0
    %3325 = vmatprep.subr.bf16.mxu0 0
    %3326 = vmatpush1.bf16.msra.mxu0 0
    %3327 = vmatprep.subr.bf16.mxu0 0
    %3328 = vmatpush1.bf16.msra.mxu0 0
    %3329 = vmatprep.subr.bf16.mxu0 0
    %3330 = vmatpush1.bf16.msra.mxu0 0
    %3331 = vmatprep.subr.bf16.mxu0 0
    %3332 = vmatpush1.bf16.msra.mxu0 0
    %3333 = vmatprep.subr.bf16.mxu0 0
    %3334 = vmatpush1.bf16.msra.mxu0 0
    %3335 = vmatprep.subr.bf16.mxu0 0
    %3336 = vmatpush1.bf16.msra.mxu0 0
    %3337 = vmatprep.subr.bf16.mxu0 0
    %3338 = vmatpush1.bf16.msra.mxu0 0
    %3339 = vmatprep.subr.bf16.mxu0 0
    %3340 = vmatpush1.bf16.msra.mxu0 0
    %3341 = vmatprep.mubr.bf16.mxu0 0
    %3342 = vmatmul.mubr.bf16.gmra.mrb[0].mxu0 %v3166
    %v3343 = vpop.f32.mrb[0].mxu0
    %v3344 = vadd.f32 %v3304, %v3343
    %v3345 = vpop.f32.mrb[0].mxu0
    %v3346 = vpop.f32.mrb[0].mxu0
    %v3347 = vpop.f32.mrb[0].mxu0
    %3348 = vdwg.mxu0
    %v3349 = vadd.f32 %v3344, %v94
    %v3350 = vmax.f32 %v3349, 0.0
    %v3351 = vpack.c.bf16 %v3350, %v3350
    %3352 = vmatprep.subr.bf16.mxu0 0
    %3353 = vmatpush1.bf16.msra.mxu0 %v410
    %3354 = vmatprep.subr.bf16.mxu0 0
    %3355 = vmatpush1.bf16.msra.mxu0 %v411
    %3356 = vmatprep.subr.bf16.mxu0 0
    %3357 = vmatpush1.bf16.msra.mxu0 0
    %3358 = vmatprep.subr.bf16.mxu0 0
    %3359 = vmatpush1.bf16.msra.mxu0 0
    %3360 = vmatprep.subr.bf16.mxu0 0
    %3361 = vmatpush1.bf16.msra.mxu0 0
    %3362 = vmatprep.subr.bf16.mxu0 0
    %3363 = vmatpush1.bf16.msra.mxu0 0
    %3364 = vmatprep.subr.bf16.mxu0 0
    %3365 = vmatpush1.bf16.msra.mxu0 0
    %3366 = vmatprep.subr.bf16.mxu0 0
    %3367 = vmatpush1.bf16.msra.mxu0 0
    %3368 = vmatprep.subr.bf16.mxu0 0
    %3369 = vmatpush1.bf16.msra.mxu0 0
    %3370 = vmatprep.subr.bf16.mxu0 0
    %3371 = vmatpush1.bf16.msra.mxu0 0
    %3372 = vmatprep.subr.bf16.mxu0 0
    %3373 = vmatpush1.bf16.msra.mxu0 0
    %3374 = vmatprep.subr.bf16.mxu0 0
    %3375 = vmatpush1.bf16.msra.mxu0 0
    %3376 = vmatprep.subr.bf16.mxu0 0
    %3377 = vmatpush1.bf16.msra.mxu0 0
    %3378 = vmatprep.subr.bf16.mxu0 0
    %3379 = vmatpush1.bf16.msra.mxu0 0
    %3380 = vmatprep.subr.bf16.mxu0 0
    %3381 = vmatpush1.bf16.msra.mxu0 0
    %3382 = vmatprep.subr.bf16.mxu0 0
    %3383 = vmatpush1.bf16.msra.mxu0 0
    %3384 = vmatprep.mubr.bf16.mxu0 0
    %3385 = vmatmul.mubr.bf16.gmra.mrb[0].mxu0 %v3050
    %v3386 = vpop.f32.mrb[0].mxu0
    %v3387 = vadd.f32 0.0, %v3386
    %v3388 = vpop.f32.mrb[0].mxu0
    %v3389 = vpop.f32.mrb[0].mxu0
    %v3390 = vpop.f32.mrb[0].mxu0
    %3391 = vdwg.mxu0
    %v3393 = vsel %vm124, %v3351, 0
    %3395 = vmatprep.subr.bf16.mxu0 0
    %3396 = vmatpush1.bf16.msra.mxu0 %v462
    %3397 = vmatprep.subr.bf16.mxu0 0
    %3398 = vmatpush1.bf16.msra.mxu0 %v463
    %3399 = vmatprep.subr.bf16.mxu0 0
    %3400 = vmatpush1.bf16.msra.mxu0 0
    %3401 = vmatprep.subr.bf16.mxu0 0
    %3402 = vmatpush1.bf16.msra.mxu0 0
    %3403 = vmatprep.subr.bf16.mxu0 0
    %3404 = vmatpush1.bf16.msra.mxu0 0
    %3405 = vmatprep.subr.bf16.mxu0 0
    %3406 = vmatpush1.bf16.msra.mxu0 0
    %3407 = vmatprep.subr.bf16.mxu0 0
    %3408 = vmatpush1.bf16.msra.mxu0 0
    %3409 = vmatprep.subr.bf16.mxu0 0
    %3410 = vmatpush1.bf16.msra.mxu0 0
    %3411 = vmatprep.subr.bf16.mxu0 0
    %3412 = vmatpush1.bf16.msra.mxu0 0
    %3413 = vmatprep.subr.bf16.mxu0 0
    %3414 = vmatpush1.bf16.msra.mxu0 0
    %3415 = vmatprep.subr.bf16.mxu0 0
    %3416 = vmatpush1.bf16.msra.mxu0 0
    %3417 = vmatprep.subr.bf16.mxu0 0
    %3418 = vmatpush1.bf16.msra.mxu0 0
    %3419 = vmatprep.subr.bf16.mxu0 0
    %3420 = vmatpush1.bf16.msra.mxu0 0
    %3421 = vmatprep.subr.bf16.mxu0 0
    %3422 = vmatpush1.bf16.msra.mxu0 0
    %3423 = vmatprep.subr.bf16.mxu0 0
    %3424 = vmatpush1.bf16.msra.mxu0 0
    %3425 = vmatprep.subr.bf16.mxu0 0
    %3426 = vmatpush1.bf16.msra.mxu0 0
    %3427 = vmatprep.mubr.bf16.mxu0 0
    %3428 = vmatmul.mubr.bf16.gmra.mrb[0].mxu0 %v3393
    %v3429 = vpop.f32.mrb[0].mxu0
    %v3430 = vadd.f32 %v3387, %v3429
    %v3431 = vpop.f32.mrb[0].mxu0
    %v3432 = vpop.f32.mrb[0].mxu0
    %v3433 = vpop.f32.mrb[0].mxu0
    %3434 = vdwg.mxu0
    %v3435 = vadd.f32 %v3430, %v103
    %v3436 = vxor.u32 %v3435, 2147483648
    %v3437 = vmul.f32 %v3436, 1.442695
    %v3438 = vpow.pop %v3437
    %v3439 = vadd.f32 %v3438, 1.0
    %v3440 = vrcp.pop %v3439
    %v3441 = vmul.f32 1.0, %v3440
    %3443 = vrot.lane.b32.xlu0 %v3435, 32
    %v3444 = vpop.permute.xlu0 %3443
    %v3446 = vmul.f32 %v3441, %v3444
    %3448 = vrot.lane.b32.xlu0 %v3446, 64
    %v3449 = vpop.permute.xlu0 %3448
    %v3451 = vadd.f32 %v3435, %v3449
    %v3452 = vtanh.pop %v3451
    %v3453 = vsub.f32 1.0, %v3441
    %3455 = vrot.lane.b32.xlu0 %v3452, 96
    %v3456 = vpop.permute.xlu0 %3455
    %v3458 = vmul.f32 %v3453, %v3456
    %v3459 = vmul.f32 %v3441, %v3044
    %v3460 = vadd.f32 %v3458, %v3459
    %v3461 = vpack.c.bf16 %v3460, %v3460
    %3463 = vrot.lane.b32.xlu0 %v3461, 96
    %v3464 = vpop.permute.xlu0 %3463
    %v3466 = vsel %vm124, %v3464, 0
    %3468 = vmatprep.subr.bf16.mxu0 0
    %3469 = vmatpush1.bf16.msra.mxu0 %v555
    %3470 = vmatprep.subr.bf16.mxu0 0
    %3471 = vmatpush1.bf16.msra.mxu0 %v556
    %3472 = vmatprep.subr.bf16.mxu0 0
    %3473 = vmatpush1.bf16.msra.mxu0 0
    %3474 = vmatprep.subr.bf16.mxu0 0
    %3475 = vmatpush1.bf16.msra.mxu0 0
    %3476 = vmatprep.subr.bf16.mxu0 0
    %3477 = vmatpush1.bf16.msra.mxu0 0
    %3478 = vmatprep.subr.bf16.mxu0 0
    %3479 = vmatpush1.bf16.msra.mxu0 0
    %3480 = vmatprep.subr.bf16.mxu0 0
    %3481 = vmatpush1.bf16.msra.mxu0 0
    %3482 = vmatprep.subr.bf16.mxu0 0
    %3483 = vmatpush1.bf16.msra.mxu0 0
    %3484 = vmatprep.subr.bf16.mxu0 0
    %3485 = vmatpush1.bf16.msra.mxu0 0
    %3486 = vmatprep.subr.bf16.mxu0 0
    %3487 = vmatpush1.bf16.msra.mxu0 0
    %3488 = vmatprep.subr.bf16.mxu0 0
    %3489 = vmatpush1.bf16.msra.mxu0 0
    %3490 = vmatprep.subr.bf16.mxu0 0
    %3491 = vmatpush1.bf16.msra.mxu0 0
    %3492 = vmatprep.subr.bf16.mxu0 0
    %3493 = vmatpush1.bf16.msra.mxu0 0
    %3494 = vmatprep.subr.bf16.mxu0 0
    %3495 = vmatpush1.bf16.msra.mxu0 0
    %3496 = vmatprep.subr.bf16.mxu0 0
    %3497 = vmatpush1.bf16.msra.mxu0 0
    %3498 = vmatprep.subr.bf16.mxu0 0
    %3499 = vmatpush1.bf16.msra.mxu0 0
    %3500 = vmatprep.mubr.bf16.mxu0 0
    %3501 = vmatmul.mubr.bf16.gmra.mrb[0].mxu0 %v3466
    %v3502 = vpop.f32.mrb[0].mxu0
    %v3503 = vadd.f32 %v108, %v3502
    %v3504 = vpop.f32.mrb[0].mxu0
    %v3505 = vpop.f32.mrb[0].mxu0
    %v3506 = vpop.f32.mrb[0].mxu0
    %3507 = vdwg.mxu0
    %v3508 = vsel %vm602, %v3503, -inf
    %3509 = vmax.xlane.f32.xlu0 %v3508
    %v3510 = vpop.xlane.xlu0 %3509
    %v3511 = vsub.f32 %v3503, %v3510
    %v3512 = vmul.f32 %v3511, 1.442695
    %v3513 = vpow.pop %v3512
    %v3514 = vsel %vm602, %v3513, 0.0
    %3515 = vadd.xlane.f32.xlu0 %v3514
    %v3516 = vpop.xlane.xlu0 %3515
    %v3517 = vlog2.pop %v3516
    %v3518 = vmul.f32 %v3517, 0.6931472
    %v3519 = vadd.f32 %v3518, %v3510
    %v3520 = vsub.f32 %v3503, %v3519
    %3522 = vrot.lane.b32.xlu0 %v3460, 112
    %v3523 = vpop.permute.xlu0 %3522
    %3526 = vrot.lane.b32.xlu0 %v3219, 48
    %v3527 = vpop.permute.xlu0 %3526
    %v3529 = vsel %vm624, %v3520, %v3523
    %v3530 = vsel %vm626, %v3529, %v3527
    %v3531 = vsel %vm628, %v3530, 0.0
    %3532 = vst [vmem:[#allocation7 + $0x7] sm:$0x1] %v3531
    // Predicated region
    $region66: #{tpu_custom_call.1} parent=1 // pred_check
      _
    $region67: #{tpu_custom_call.1} parent=1 // pred_check_branch
      %3534 = sbr.rel (0) target = $region69
    $region68: #{tpu_custom_call.1} parent=1 // pred_region
      %s3536 = ssub.s32 128, 128
      %3537 = vsyncadd [#allocation4], %s3536
      %s3539 = sshll.u32 [#allocation7], 4
      %s3540 = int_to_ptr.vmem [resolvable:$true] %s3539
      %3542 = dma.vmem_to_hbm [thread:$0]  %s3540, 128, %s14, [#allocation4]
    $region69: #{tpu_custom_call.1} parent=1 // pred_fallthru
      _
    // Predicated region
    $region70: #{tpu_custom_call.1} parent=1 // pred_check
      _
    $region71: #{tpu_custom_call.1} parent=1 // pred_check_branch
      %3544 = sbr.rel (0) target = $region73
    $region72: #{tpu_custom_call.1} parent=1 // pred_region
      %3545 = dma.done [#allocation4], 128
    $region73: #{tpu_custom_call.1} parent=1 // pred_fallthru
      _
    %3546 = vsyncpa [#allocation3], 1
    %3547 = vsyncpa [#allocation6], 1
    %3548 = vsyncpa [#allocation4], 1

</llo_original>
